<compile_context>
chip_gen: v5e
topology: v5e:2x2
jax: 0.10.0
libtpu: 0.0.40
codegen_flags: <defaults>
</compile_context>

<pallas_src>
from functools import partial

import numpy as np
import jax
import jax.numpy as jnp
from jax import lax
from jax.experimental import pallas as pl
from jax.experimental.pallas import tpu as pltpu

LANES = 128


def _round_up(x, m):
    return (x + m - 1) // m * m


def _reflect(idx, size):
    """torch ReflectionPad index mapping (single reflection, pad < size)."""
    if idx < 0:
        idx = -idx
    if idx > size - 1:
        idx = 2 * (size - 1) - idx
    return idx


# ------------------------------- Pallas kernel ------------------------------- #

def _row_select_matrix(tap, h_out, h_in, stride, pad):
    """(h_out, h_in) 0/1 matrix: output row ho selects input row
    reflect(stride*ho + tap - pad).

    Folds stride + H-direction reflect padding into the height tap's row
    selection, so the kernel never materializes a padded activation and never
    needs strided/unaligned slices.  Built from iotas (VPU only); applying it
    with a bf16 matmul is numerically exact (0/1 weights)."""
    r = lax.broadcasted_iota(jnp.int32, (h_out, h_in), 0)
    c = lax.broadcasted_iota(jnp.int32, (h_out, h_in), 1)
    t = stride * r + tap - pad
    t = jnp.where(t < 0, -t, t)                            # reflect low edge
    t = jnp.where(t > h_in - 1, 2 * (h_in - 1) - t, t)     # reflect high edge
    return jnp.where(c == t, 1.0, 0.0).astype(jnp.bfloat16)


def _style_encoder_kernel(*refs, stage_meta):
    """Whole StyleEncoder forward for one sample, entirely in VMEM.

    refs = (x, w_1..w_L, b_1..b_L, w_head, b_head, out)

    Activations live as (H, W*C) values (width folded into lanes).  Each conv
    stage is kh MXU dots:  acc += (S_i @ act) @ Wrow_i   where S_i is the tap's
    row-selection matrix (stride + H reflect-pad) and Wrow_i is the precomputed
    block-banded row operator (width taps + W reflect-pad folded into K).
    Bias + ReLU fused per stage.  AdaptiveAvgPool2d(1) + the 1x1 head collapse
    into one row-sum and one small f32 dot (pool scale baked into w_head).
    """
    n_stages = len(stage_meta)
    x_ref = refs[0]
    w_refs = refs[1:1 + n_stages]
    b_refs = refs[1 + n_stages:1 + 2 * n_stages]
    wh_ref = refs[1 + 2 * n_stages]
    bh_ref = refs[2 + 2 * n_stages]
    o_ref = refs[3 + 2 * n_stages]

    act = x_ref[0]                                         # (H1, W1*C1) bf16
    y = None
    for w_ref, b_ref, (h_in, h_out, ksize, stride, pad) in zip(
            w_refs, b_refs, stage_meta):
        acc = None
        for i in range(ksize):                             # height taps only
            sel = _row_select_matrix(i, h_out, h_in, stride, pad)
            rows = jnp.dot(sel, act, preferred_element_type=jnp.float32)
            rows = rows.astype(jnp.bfloat16)               # exact (0/1 select)
            part = jnp.dot(rows, w_ref[i], preferred_element_type=jnp.float32)
            acc = part if acc is None else acc + part
        y = jnp.maximum(acc + b_ref[...], 0.0)             # f32 (h_out, Wo*Co)
        act = y.astype(jnp.bfloat16)

    # Global average pool + 1x1 conv head: the 1/(H*W) scale and the width fold
    # are baked into wh_ref, so pooling is just a row-sum.
    pooled = jnp.sum(y, axis=0, keepdims=True)             # (1, W_L*C_L) f32
    style = jnp.dot(pooled, wh_ref[...],
                    preferred_element_type=jnp.float32) + bh_ref[...]
    o_ref[0] = style.astype(o_ref.dtype)                   # (1, S_pad)


# --------------------------- module construction ---------------------------- #

def make_layer_specs(num_downsamples, image_channels, num_filters):
    """(Cin, Cout, kernel, stride, pad) per Conv2dBlock, mirroring __init__."""
    specs = [(image_channels, num_filters, 7, 1, 3)]
    c = num_filters
    for _ in range(2):
        specs.append((c, 2 * c, 4, 2, 1))
        c *= 2
    for _ in range(num_downsamples - 2):
        specs.append((c, c, 4, 2, 1))
    return tuple(specs), c  # c == self.output_dim


def init_style_encoder_params(key, specs, output_dim, style_channels):
    params = {"convs": [], "head": None}
    for (ci, co, k, _s, _p) in specs:
        key, kw_, kb_ = jax.random.split(key, 3)
        fan_in = ci * k * k
        w = jax.random.normal(kw_, (co, ci, k, k), jnp.float32) * np.sqrt(2.0 / fan_in)
        bb = jax.random.normal(kb_, (co,), jnp.float32) * 0.01
        params["convs"].append({"w": w, "b": bb})
    key, kw_, kb_ = jax.random.split(key, 3)
    wf = jax.random.normal(kw_, (style_channels, output_dim, 1, 1), jnp.float32)
    wf = wf * np.sqrt(1.0 / output_dim)
    bf = jax.random.normal(kb_, (style_channels,), jnp.float32) * 0.01
    params["head"] = {"w": wf, "b": bf}
    return params


def _build_row_operator(w_oihw, *, win, wo, stride, pad, k_pad):
    """Per-height-tap block-banded (k_pad, wo*Cout) matrices.

    Row index  = w_in * Cin + ci   (flattened input row layout, W*C on lanes)
    Col index  = wo   * Cout + co  (flattened output row layout)
    Folds the width taps AND the W-direction reflect padding into the matmul K
    dimension (reflected taps that hit the same source column accumulate)."""
    w = np.asarray(w_oihw, np.float32)
    co, ci, kh, kw = w.shape
    out = np.zeros((kh, k_pad, wo * co), np.float32)
    for i in range(kh):
        for wo_i in range(wo):
            for j in range(kw):
                wi = _reflect(stride * wo_i + j - pad, win)
                out[i, wi * ci:(wi + 1) * ci, wo_i * co:(wo_i + 1) * co] += w[:, :, i, j].T
    return out


def prepare_kernel_params(params, specs, style_channels, image_size):
    """Build row-operator weights / folded head and per-stage static meta."""
    h_in, w_in = image_size
    ws, bs, meta = [], [], []
    for idx, ((ci, co, k, s, p), layer) in enumerate(zip(specs, params["convs"])):
        assert (h_in + 2 * p - k) % s == 0 and (w_in + 2 * p - k) % s == 0, \
            "spatial size must be compatible with the stride"
        h_out = (h_in + 2 * p - k) // s + 1
        w_out = (w_in + 2 * p - k) // s + 1
        k_in = w_in * ci
        k_pad = _round_up(k_in, LANES) if idx == 0 else k_in   # only layer-1 input
        w_np = _build_row_operator(layer["w"], win=w_in, wo=w_out,
                                   stride=s, pad=p, k_pad=k_pad)
        ws.append(jnp.asarray(w_np, jnp.bfloat16))
        b_np = np.tile(np.asarray(layer["b"], np.float32), w_out)[None, :]
        bs.append(jnp.asarray(b_np, jnp.float32))
        meta.append((h_in, h_out, k, s, p))
        h_in, w_in = h_out, w_out

    # Head: AdaptiveAvgPool2d(1) + Conv2d(C, S, 1).  Fold the 1/(H*W) pooling
    # scale and the width fold into the head matrix; pad S to 128 lanes only
    # for a clean final store.
    c_last = specs[-1][1]
    s_dim = style_channels
    s_pad = _round_up(s_dim, LANES)
    wh = np.asarray(params["head"]["w"], np.float32).reshape(s_dim, c_last)
    n_valid = h_in * w_in
    wh_fold = np.zeros((w_in * c_last, s_pad), np.float32)
    for wv in range(w_in):
        wh_fold[wv * c_last:(wv + 1) * c_last, :s_dim] = wh.T / n_valid
    bh = np.zeros((1, s_pad), np.float32)
    bh[0, :s_dim] = np.asarray(params["head"]["b"], np.float32)

    kparams = {"w": ws, "b": bs,
               "wh": jnp.asarray(wh_fold, jnp.float32),
               "bh": jnp.asarray(bh, jnp.float32)}
    return kparams, tuple(meta)


def style_encoder_forward(kparams, x_nchw, *, meta, style_channels):
    """NCHW f32 image -> (N, style_channels, 1, 1) f32, one pallas_call."""
    n, c, h, w = x_nchw.shape
    x = jnp.transpose(x_nchw, (0, 2, 3, 1)).reshape(n, h, w * c).astype(jnp.bfloat16)
    k1 = kparams["w"][0].shape[1]
    if k1 > w * c:
        x = jnp.pad(x, ((0, 0), (0, 0), (0, k1 - w * c)))   # lane pad, zero K rows

    s_pad = kparams["wh"].shape[1]
    h1 = meta[0][0]

    in_specs = [pl.BlockSpec((1, h1, k1), lambda i: (i, 0, 0))]
    in_specs += [pl.BlockSpec(wt.shape, lambda i: (0, 0, 0)) for wt in kparams["w"]]
    in_specs += [pl.BlockSpec(bt.shape, lambda i: (0, 0)) for bt in kparams["b"]]
    in_specs += [pl.BlockSpec(kparams["wh"].shape, lambda i: (0, 0)),
                 pl.BlockSpec(kparams["bh"].shape, lambda i: (0, 0))]

    out = pl.pallas_call(
        partial(_style_encoder_kernel, stage_meta=meta),
        out_shape=jax.ShapeDtypeStruct((n, 1, s_pad), jnp.float32),
        grid=(n,),
        in_specs=in_specs,
        out_specs=pl.BlockSpec((1, 1, s_pad), lambda i: (i, 0, 0)),
        compiler_params=pltpu.CompilerParams(dimension_semantics=("parallel",)),
    )(x, *kparams["w"], *kparams["b"], kparams["wh"], kparams["bh"])

    return out[:, 0, :style_channels].reshape(n, style_channels, 1, 1)


# -------------------------------- pure-JAX ref ------------------------------- #

def reference_forward(params, x_nchw, *, specs):
    x = jnp.transpose(x_nchw, (0, 2, 3, 1))
    for layer, (_ci, _co, _k, s, p) in zip(params["convs"], specs):
        w, b = layer["w"], layer["b"]
        xp = jnp.pad(x, ((0, 0), (p, p), (p, p), (0, 0)), mode="reflect")
        wh = jnp.transpose(w, (2, 3, 1, 0))  # HWIO
        y = lax.conv_general_dilated(xp, wh, (s, s), "VALID",
                                     dimension_numbers=("NHWC", "HWIO", "NHWC"))
        x = jnp.maximum(y + b, 0.0)
    pooled = jnp.mean(x, axis=(1, 2))                                   # (N, C)
    wf = params["head"]["w"].reshape(params["head"]["w"].shape[0], -1)  # (S, C)
    out = pooled @ wf.T + params["head"]["b"]
    return out.reshape(out.shape[0], -1, 1, 1)


# ------------------------------------ main ----------------------------------- #

if __name__ == "__main__":
    num_downsamples = 4
    image_channels = 3
    num_filters = 8
    style_channels = 16
    N, Hs, Ws = 2, 32, 32

    specs, output_dim = make_layer_specs(num_downsamples, image_channels, num_filters)

    key = jax.random.PRNGKey(0)
    kp, kx = jax.random.split(key)
    params = init_style_encoder_params(kp, specs, output_dim, style_channels)
    x = jax.random.normal(kx, (N, image_channels, Hs, Ws), jnp.float32)

    kparams, meta = prepare_kernel_params(params, specs, style_channels, (Hs, Ws))
    fwd = jax.jit(partial(style_encoder_forward, meta=meta,
                          style_channels=style_channels))
    out = jax.block_until_ready(fwd(kparams, x))

    assert out.shape == (N, style_channels, 1, 1), out.shape
    ref = reference_forward(params, x, specs=specs)
    # bf16 activations/weights with f32 accumulation vs f32 reference.
    np.testing.assert_allclose(np.asarray(out), np.asarray(ref), rtol=5e-2, atol=5e-2)

    print("KERNEL_OK")
</pallas_src>

<mosaic_0001>
module attributes {stable_mosaic.version = 11 : i64} {
  func.func @_style_encoder_kernel(%arg0: i32, %arg1: memref<1x32x128xbf16, #tpu.memory_space<vmem>>, %arg2: memref<7x128x256xbf16, #tpu.memory_space<vmem>>, %arg3: memref<4x256x256xbf16, #tpu.memory_space<vmem>>, %arg4: memref<4x256x256xbf16, #tpu.memory_space<vmem>>, %arg5: memref<4x256x128xbf16, #tpu.memory_space<vmem>>, %arg6: memref<4x128x64xbf16, #tpu.memory_space<vmem>>, %arg7: memref<1x256xf32, #tpu.memory_space<vmem>>, %arg8: memref<1x256xf32, #tpu.memory_space<vmem>>, %arg9: memref<1x256xf32, #tpu.memory_space<vmem>>, %arg10: memref<1x128xf32, #tpu.memory_space<vmem>>, %arg11: memref<1x64xf32, #tpu.memory_space<vmem>>, %arg12: memref<64x128xf32, #tpu.memory_space<vmem>>, %arg13: memref<1x128xf32, #tpu.memory_space<vmem>>, %arg14: memref<1x1x128xf32, #tpu.memory_space<vmem>>) attributes {dimension_semantics = [#tpu.dimension_semantics<parallel>], iteration_bounds = array<i64: 2>, scalar_prefetch = 0 : i64, scratch_operands = 0 : i64, tpu.core_type = #tpu.core_type<tc>, window_params = [{transform_indices = @transform_0, window_bounds = array<i64: 1, 32, 128>}, {pipeline_mode = #tpu.pipeline_mode<synchronous>, transform_indices = @transform_1, window_bounds = array<i64: 7, 128, 256>}, {pipeline_mode = #tpu.pipeline_mode<synchronous>, transform_indices = @transform_2, window_bounds = array<i64: 4, 256, 256>}, {pipeline_mode = #tpu.pipeline_mode<synchronous>, transform_indices = @transform_3, window_bounds = array<i64: 4, 256, 256>}, {pipeline_mode = #tpu.pipeline_mode<synchronous>, transform_indices = @transform_4, window_bounds = array<i64: 4, 256, 128>}, {pipeline_mode = #tpu.pipeline_mode<synchronous>, transform_indices = @transform_5, window_bounds = array<i64: 4, 128, 64>}, {pipeline_mode = #tpu.pipeline_mode<synchronous>, transform_indices = @transform_6, window_bounds = array<i64: 1, 256>}, {pipeline_mode = #tpu.pipeline_mode<synchronous>, transform_indices = @transform_7, window_bounds = array<i64: 1, 256>}, {pipeline_mode = #tpu.pipeline_mode<synchronous>, transform_indices = @transform_8, window_bounds = array<i64: 1, 256>}, {pipeline_mode = #tpu.pipeline_mode<synchronous>, transform_indices = @transform_9, window_bounds = array<i64: 1, 128>}, {pipeline_mode = #tpu.pipeline_mode<synchronous>, transform_indices = @transform_10, window_bounds = array<i64: 1, 64>}, {pipeline_mode = #tpu.pipeline_mode<synchronous>, transform_indices = @transform_11, window_bounds = array<i64: 64, 128>}, {pipeline_mode = #tpu.pipeline_mode<synchronous>, transform_indices = @transform_12, window_bounds = array<i64: 1, 128>}, {transform_indices = @transform_13, window_bounds = array<i64: 1, 1, 128>}]} {
    %c0 = arith.constant 0 : index
    %c0_0 = arith.constant 0 : index
    %c0_1 = arith.constant 0 : index
    %0 = vector.load %arg1[%c0, %c0_0, %c0_1] : memref<1x32x128xbf16, #tpu.memory_space<vmem>>, vector<1x32x128xbf16>
    %1 = vector.shape_cast %0 : vector<1x32x128xbf16> to vector<32x128xbf16>
    %2 = tpu.iota {dimensions = array<i32: 0>} : vector<32x32xi32>
    %3 = tpu.iota {dimensions = array<i32: 1>} : vector<32x32xi32>
    %c1_i32 = arith.constant 1 : i32
    %4 = vector.broadcast %c1_i32 : i32 to vector<32x32xi32>
    %5 = arith.muli %4, %2 : vector<32x32xi32>
    %c0_i32 = arith.constant 0 : i32
    %6 = vector.broadcast %c0_i32 : i32 to vector<32x32xi32>
    %7 = arith.addi %5, %6 : vector<32x32xi32>
    %c3_i32 = arith.constant 3 : i32
    %8 = vector.broadcast %c3_i32 : i32 to vector<32x32xi32>
    %9 = arith.subi %7, %8 : vector<32x32xi32>
    %c0_i32_2 = arith.constant 0 : i32
    %10 = vector.broadcast %c0_i32_2 : i32 to vector<32x32xi32>
    %11 = arith.cmpi slt, %9, %10 : vector<32x32xi32>
    %c0_i32_3 = arith.constant 0 : i32
    %12 = vector.broadcast %c0_i32_3 : i32 to vector<32x32xi32>
    %13 = arith.subi %12, %9 : vector<32x32xi32>
    %14 = arith.select %11, %13, %9 : vector<32x32xi1>, vector<32x32xi32>
    %c31_i32 = arith.constant 31 : i32
    %15 = vector.broadcast %c31_i32 : i32 to vector<32x32xi32>
    %16 = arith.cmpi sgt, %14, %15 : vector<32x32xi32>
    %c62_i32 = arith.constant 62 : i32
    %17 = vector.broadcast %c62_i32 : i32 to vector<32x32xi32>
    %18 = arith.subi %17, %14 : vector<32x32xi32>
    %19 = arith.select %16, %18, %14 : vector<32x32xi1>, vector<32x32xi32>
    %20 = arith.cmpi eq, %3, %19 : vector<32x32xi32>
    %cst = arith.constant 1.000000e+00 : f32
    %cst_4 = arith.constant 0.000000e+00 : f32
    %21 = vector.broadcast %cst : f32 to vector<32x32xf32>
    %22 = vector.broadcast %cst_4 : f32 to vector<32x32xf32>
    %23 = arith.select %20, %21, %22 : vector<32x32xi1>, vector<32x32xf32>
    %24 = arith.truncf %23 : vector<32x32xf32> to vector<32x32xbf16>
    %cst_5 = arith.constant dense<0.000000e+00> : vector<32x128xf32>
    %25 = tpu.matmul %24, %1, %cst_5 {dimension_numbers = #tpu.dot_dimension_numbers<[1], [0], [0], [1], [0, 0, 1, 1], [], []>} : vector<32x32xbf16>, vector<32x128xbf16>, vector<32x128xf32> -> vector<32x128xf32>
    %26 = arith.truncf %25 : vector<32x128xf32> to vector<32x128xbf16>
    %c0_6 = arith.constant 0 : index
    %c0_7 = arith.constant 0 : index
    %c0_8 = arith.constant 0 : index
    %27 = vector.load %arg2[%c0_6, %c0_7, %c0_8] : memref<7x128x256xbf16, #tpu.memory_space<vmem>>, vector<1x128x256xbf16>
    %28 = vector.shape_cast %27 : vector<1x128x256xbf16> to vector<128x256xbf16>
    %cst_9 = arith.constant dense<0.000000e+00> : vector<32x256xf32>
    %29 = tpu.matmul %26, %28, %cst_9 {dimension_numbers = #tpu.dot_dimension_numbers<[1], [0], [0], [1], [0, 0, 1, 1], [], []>} : vector<32x128xbf16>, vector<128x256xbf16>, vector<32x256xf32> -> vector<32x256xf32>
    %30 = tpu.iota {dimensions = array<i32: 0>} : vector<32x32xi32>
    %31 = tpu.iota {dimensions = array<i32: 1>} : vector<32x32xi32>
    %c1_i32_10 = arith.constant 1 : i32
    %32 = vector.broadcast %c1_i32_10 : i32 to vector<32x32xi32>
    %33 = arith.muli %32, %30 : vector<32x32xi32>
    %c1_i32_11 = arith.constant 1 : i32
    %34 = vector.broadcast %c1_i32_11 : i32 to vector<32x32xi32>
    %35 = arith.addi %33, %34 : vector<32x32xi32>
    %c3_i32_12 = arith.constant 3 : i32
    %36 = vector.broadcast %c3_i32_12 : i32 to vector<32x32xi32>
    %37 = arith.subi %35, %36 : vector<32x32xi32>
    %c0_i32_13 = arith.constant 0 : i32
    %38 = vector.broadcast %c0_i32_13 : i32 to vector<32x32xi32>
    %39 = arith.cmpi slt, %37, %38 : vector<32x32xi32>
    %c0_i32_14 = arith.constant 0 : i32
    %40 = vector.broadcast %c0_i32_14 : i32 to vector<32x32xi32>
    %41 = arith.subi %40, %37 : vector<32x32xi32>
    %42 = arith.select %39, %41, %37 : vector<32x32xi1>, vector<32x32xi32>
    %c31_i32_15 = arith.constant 31 : i32
    %43 = vector.broadcast %c31_i32_15 : i32 to vector<32x32xi32>
    %44 = arith.cmpi sgt, %42, %43 : vector<32x32xi32>
    %c62_i32_16 = arith.constant 62 : i32
    %45 = vector.broadcast %c62_i32_16 : i32 to vector<32x32xi32>
    %46 = arith.subi %45, %42 : vector<32x32xi32>
    %47 = arith.select %44, %46, %42 : vector<32x32xi1>, vector<32x32xi32>
    %48 = arith.cmpi eq, %31, %47 : vector<32x32xi32>
    %cst_17 = arith.constant 1.000000e+00 : f32
    %cst_18 = arith.constant 0.000000e+00 : f32
    %49 = vector.broadcast %cst_17 : f32 to vector<32x32xf32>
    %50 = vector.broadcast %cst_18 : f32 to vector<32x32xf32>
    %51 = arith.select %48, %49, %50 : vector<32x32xi1>, vector<32x32xf32>
    %52 = arith.truncf %51 : vector<32x32xf32> to vector<32x32xbf16>
    %cst_19 = arith.constant dense<0.000000e+00> : vector<32x128xf32>
    %53 = tpu.matmul %52, %1, %cst_19 {dimension_numbers = #tpu.dot_dimension_numbers<[1], [0], [0], [1], [0, 0, 1, 1], [], []>} : vector<32x32xbf16>, vector<32x128xbf16>, vector<32x128xf32> -> vector<32x128xf32>
    %54 = arith.truncf %53 : vector<32x128xf32> to vector<32x128xbf16>
    %c1 = arith.constant 1 : index
    %c0_20 = arith.constant 0 : index
    %c0_21 = arith.constant 0 : index
    %55 = vector.load %arg2[%c1, %c0_20, %c0_21] : memref<7x128x256xbf16, #tpu.memory_space<vmem>>, vector<1x128x256xbf16>
    %56 = vector.shape_cast %55 : vector<1x128x256xbf16> to vector<128x256xbf16>
    %cst_22 = arith.constant dense<0.000000e+00> : vector<32x256xf32>
    %57 = tpu.matmul %54, %56, %cst_22 {dimension_numbers = #tpu.dot_dimension_numbers<[1], [0], [0], [1], [0, 0, 1, 1], [], []>} : vector<32x128xbf16>, vector<128x256xbf16>, vector<32x256xf32> -> vector<32x256xf32>
    %58 = arith.addf %29, %57 : vector<32x256xf32>
    %59 = tpu.iota {dimensions = array<i32: 0>} : vector<32x32xi32>
    %60 = tpu.iota {dimensions = array<i32: 1>} : vector<32x32xi32>
    %c1_i32_23 = arith.constant 1 : i32
    %61 = vector.broadcast %c1_i32_23 : i32 to vector<32x32xi32>
    %62 = arith.muli %61, %59 : vector<32x32xi32>
    %c2_i32 = arith.constant 2 : i32
    %63 = vector.broadcast %c2_i32 : i32 to vector<32x32xi32>
    %64 = arith.addi %62, %63 : vector<32x32xi32>
    %c3_i32_24 = arith.constant 3 : i32
    %65 = vector.broadcast %c3_i32_24 : i32 to vector<32x32xi32>
    %66 = arith.subi %64, %65 : vector<32x32xi32>
    %c0_i32_25 = arith.constant 0 : i32
    %67 = vector.broadcast %c0_i32_25 : i32 to vector<32x32xi32>
    %68 = arith.cmpi slt, %66, %67 : vector<32x32xi32>
    %c0_i32_26 = arith.constant 0 : i32
    %69 = vector.broadcast %c0_i32_26 : i32 to vector<32x32xi32>
    %70 = arith.subi %69, %66 : vector<32x32xi32>
    %71 = arith.select %68, %70, %66 : vector<32x32xi1>, vector<32x32xi32>
    %c31_i32_27 = arith.constant 31 : i32
    %72 = vector.broadcast %c31_i32_27 : i32 to vector<32x32xi32>
    %73 = arith.cmpi sgt, %71, %72 : vector<32x32xi32>
    %c62_i32_28 = arith.constant 62 : i32
    %74 = vector.broadcast %c62_i32_28 : i32 to vector<32x32xi32>
    %75 = arith.subi %74, %71 : vector<32x32xi32>
    %76 = arith.select %73, %75, %71 : vector<32x32xi1>, vector<32x32xi32>
    %77 = arith.cmpi eq, %60, %76 : vector<32x32xi32>
    %cst_29 = arith.constant 1.000000e+00 : f32
    %cst_30 = arith.constant 0.000000e+00 : f32
    %78 = vector.broadcast %cst_29 : f32 to vector<32x32xf32>
    %79 = vector.broadcast %cst_30 : f32 to vector<32x32xf32>
    %80 = arith.select %77, %78, %79 : vector<32x32xi1>, vector<32x32xf32>
    %81 = arith.truncf %80 : vector<32x32xf32> to vector<32x32xbf16>
    %cst_31 = arith.constant dense<0.000000e+00> : vector<32x128xf32>
    %82 = tpu.matmul %81, %1, %cst_31 {dimension_numbers = #tpu.dot_dimension_numbers<[1], [0], [0], [1], [0, 0, 1, 1], [], []>} : vector<32x32xbf16>, vector<32x128xbf16>, vector<32x128xf32> -> vector<32x128xf32>
    %83 = arith.truncf %82 : vector<32x128xf32> to vector<32x128xbf16>
    %c2 = arith.constant 2 : index
    %c0_32 = arith.constant 0 : index
    %c0_33 = arith.constant 0 : index
    %84 = vector.load %arg2[%c2, %c0_32, %c0_33] : memref<7x128x256xbf16, #tpu.memory_space<vmem>>, vector<1x128x256xbf16>
    %85 = vector.shape_cast %84 : vector<1x128x256xbf16> to vector<128x256xbf16>
    %cst_34 = arith.constant dense<0.000000e+00> : vector<32x256xf32>
    %86 = tpu.matmul %83, %85, %cst_34 {dimension_numbers = #tpu.dot_dimension_numbers<[1], [0], [0], [1], [0, 0, 1, 1], [], []>} : vector<32x128xbf16>, vector<128x256xbf16>, vector<32x256xf32> -> vector<32x256xf32>
    %87 = arith.addf %58, %86 : vector<32x256xf32>
    %88 = tpu.iota {dimensions = array<i32: 0>} : vector<32x32xi32>
    %89 = tpu.iota {dimensions = array<i32: 1>} : vector<32x32xi32>
    %c1_i32_35 = arith.constant 1 : i32
    %90 = vector.broadcast %c1_i32_35 : i32 to vector<32x32xi32>
    %91 = arith.muli %90, %88 : vector<32x32xi32>
    %c3_i32_36 = arith.constant 3 : i32
    %92 = vector.broadcast %c3_i32_36 : i32 to vector<32x32xi32>
    %93 = arith.addi %91, %92 : vector<32x32xi32>
    %c3_i32_37 = arith.constant 3 : i32
    %94 = vector.broadcast %c3_i32_37 : i32 to vector<32x32xi32>
    %95 = arith.subi %93, %94 : vector<32x32xi32>
    %c0_i32_38 = arith.constant 0 : i32
    %96 = vector.broadcast %c0_i32_38 : i32 to vector<32x32xi32>
    %97 = arith.cmpi slt, %95, %96 : vector<32x32xi32>
    %c0_i32_39 = arith.constant 0 : i32
    %98 = vector.broadcast %c0_i32_39 : i32 to vector<32x32xi32>
    %99 = arith.subi %98, %95 : vector<32x32xi32>
    %100 = arith.select %97, %99, %95 : vector<32x32xi1>, vector<32x32xi32>
    %c31_i32_40 = arith.constant 31 : i32
    %101 = vector.broadcast %c31_i32_40 : i32 to vector<32x32xi32>
    %102 = arith.cmpi sgt, %100, %101 : vector<32x32xi32>
    %c62_i32_41 = arith.constant 62 : i32
    %103 = vector.broadcast %c62_i32_41 : i32 to vector<32x32xi32>
    %104 = arith.subi %103, %100 : vector<32x32xi32>
    %105 = arith.select %102, %104, %100 : vector<32x32xi1>, vector<32x32xi32>
    %106 = arith.cmpi eq, %89, %105 : vector<32x32xi32>
    %cst_42 = arith.constant 1.000000e+00 : f32
    %cst_43 = arith.constant 0.000000e+00 : f32
    %107 = vector.broadcast %cst_42 : f32 to vector<32x32xf32>
    %108 = vector.broadcast %cst_43 : f32 to vector<32x32xf32>
    %109 = arith.select %106, %107, %108 : vector<32x32xi1>, vector<32x32xf32>
    %110 = arith.truncf %109 : vector<32x32xf32> to vector<32x32xbf16>
    %cst_44 = arith.constant dense<0.000000e+00> : vector<32x128xf32>
    %111 = tpu.matmul %110, %1, %cst_44 {dimension_numbers = #tpu.dot_dimension_numbers<[1], [0], [0], [1], [0, 0, 1, 1], [], []>} : vector<32x32xbf16>, vector<32x128xbf16>, vector<32x128xf32> -> vector<32x128xf32>
    %112 = arith.truncf %111 : vector<32x128xf32> to vector<32x128xbf16>
    %c3 = arith.constant 3 : index
    %c0_45 = arith.constant 0 : index
    %c0_46 = arith.constant 0 : index
    %113 = vector.load %arg2[%c3, %c0_45, %c0_46] : memref<7x128x256xbf16, #tpu.memory_space<vmem>>, vector<1x128x256xbf16>
    %114 = vector.shape_cast %113 : vector<1x128x256xbf16> to vector<128x256xbf16>
    %cst_47 = arith.constant dense<0.000000e+00> : vector<32x256xf32>
    %115 = tpu.matmul %112, %114, %cst_47 {dimension_numbers = #tpu.dot_dimension_numbers<[1], [0], [0], [1], [0, 0, 1, 1], [], []>} : vector<32x128xbf16>, vector<128x256xbf16>, vector<32x256xf32> -> vector<32x256xf32>
    %116 = arith.addf %87, %115 : vector<32x256xf32>
    %117 = tpu.iota {dimensions = array<i32: 0>} : vector<32x32xi32>
    %118 = tpu.iota {dimensions = array<i32: 1>} : vector<32x32xi32>
    %c1_i32_48 = arith.constant 1 : i32
    %119 = vector.broadcast %c1_i32_48 : i32 to vector<32x32xi32>
    %120 = arith.muli %119, %117 : vector<32x32xi32>
    %c4_i32 = arith.constant 4 : i32
    %121 = vector.broadcast %c4_i32 : i32 to vector<32x32xi32>
    %122 = arith.addi %120, %121 : vector<32x32xi32>
    %c3_i32_49 = arith.constant 3 : i32
    %123 = vector.broadcast %c3_i32_49 : i32 to vector<32x32xi32>
    %124 = arith.subi %122, %123 : vector<32x32xi32>
    %c0_i32_50 = arith.constant 0 : i32
    %125 = vector.broadcast %c0_i32_50 : i32 to vector<32x32xi32>
    %126 = arith.cmpi slt, %124, %125 : vector<32x32xi32>
    %c0_i32_51 = arith.constant 0 : i32
    %127 = vector.broadcast %c0_i32_51 : i32 to vector<32x32xi32>
    %128 = arith.subi %127, %124 : vector<32x32xi32>
    %129 = arith.select %126, %128, %124 : vector<32x32xi1>, vector<32x32xi32>
    %c31_i32_52 = arith.constant 31 : i32
    %130 = vector.broadcast %c31_i32_52 : i32 to vector<32x32xi32>
    %131 = arith.cmpi sgt, %129, %130 : vector<32x32xi32>
    %c62_i32_53 = arith.constant 62 : i32
    %132 = vector.broadcast %c62_i32_53 : i32 to vector<32x32xi32>
    %133 = arith.subi %132, %129 : vector<32x32xi32>
    %134 = arith.select %131, %133, %129 : vector<32x32xi1>, vector<32x32xi32>
    %135 = arith.cmpi eq, %118, %134 : vector<32x32xi32>
    %cst_54 = arith.constant 1.000000e+00 : f32
    %cst_55 = arith.constant 0.000000e+00 : f32
    %136 = vector.broadcast %cst_54 : f32 to vector<32x32xf32>
    %137 = vector.broadcast %cst_55 : f32 to vector<32x32xf32>
    %138 = arith.select %135, %136, %137 : vector<32x32xi1>, vector<32x32xf32>
    %139 = arith.truncf %138 : vector<32x32xf32> to vector<32x32xbf16>
    %cst_56 = arith.constant dense<0.000000e+00> : vector<32x128xf32>
    %140 = tpu.matmul %139, %1, %cst_56 {dimension_numbers = #tpu.dot_dimension_numbers<[1], [0], [0], [1], [0, 0, 1, 1], [], []>} : vector<32x32xbf16>, vector<32x128xbf16>, vector<32x128xf32> -> vector<32x128xf32>
    %141 = arith.truncf %140 : vector<32x128xf32> to vector<32x128xbf16>
    %c4 = arith.constant 4 : index
    %c0_57 = arith.constant 0 : index
    %c0_58 = arith.constant 0 : index
    %142 = vector.load %arg2[%c4, %c0_57, %c0_58] : memref<7x128x256xbf16, #tpu.memory_space<vmem>>, vector<1x128x256xbf16>
    %143 = vector.shape_cast %142 : vector<1x128x256xbf16> to vector<128x256xbf16>
    %cst_59 = arith.constant dense<0.000000e+00> : vector<32x256xf32>
    %144 = tpu.matmul %141, %143, %cst_59 {dimension_numbers = #tpu.dot_dimension_numbers<[1], [0], [0], [1], [0, 0, 1, 1], [], []>} : vector<32x128xbf16>, vector<128x256xbf16>, vector<32x256xf32> -> vector<32x256xf32>
    %145 = arith.addf %116, %144 : vector<32x256xf32>
    %146 = tpu.iota {dimensions = array<i32: 0>} : vector<32x32xi32>
    %147 = tpu.iota {dimensions = array<i32: 1>} : vector<32x32xi32>
    %c1_i32_60 = arith.constant 1 : i32
    %148 = vector.broadcast %c1_i32_60 : i32 to vector<32x32xi32>
    %149 = arith.muli %148, %146 : vector<32x32xi32>
    %c5_i32 = arith.constant 5 : i32
    %150 = vector.broadcast %c5_i32 : i32 to vector<32x32xi32>
    %151 = arith.addi %149, %150 : vector<32x32xi32>
    %c3_i32_61 = arith.constant 3 : i32
    %152 = vector.broadcast %c3_i32_61 : i32 to vector<32x32xi32>
    %153 = arith.subi %151, %152 : vector<32x32xi32>
    %c0_i32_62 = arith.constant 0 : i32
    %154 = vector.broadcast %c0_i32_62 : i32 to vector<32x32xi32>
    %155 = arith.cmpi slt, %153, %154 : vector<32x32xi32>
    %c0_i32_63 = arith.constant 0 : i32
    %156 = vector.broadcast %c0_i32_63 : i32 to vector<32x32xi32>
    %157 = arith.subi %156, %153 : vector<32x32xi32>
    %158 = arith.select %155, %157, %153 : vector<32x32xi1>, vector<32x32xi32>
    %c31_i32_64 = arith.constant 31 : i32
    %159 = vector.broadcast %c31_i32_64 : i32 to vector<32x32xi32>
    %160 = arith.cmpi sgt, %158, %159 : vector<32x32xi32>
    %c62_i32_65 = arith.constant 62 : i32
    %161 = vector.broadcast %c62_i32_65 : i32 to vector<32x32xi32>
    %162 = arith.subi %161, %158 : vector<32x32xi32>
    %163 = arith.select %160, %162, %158 : vector<32x32xi1>, vector<32x32xi32>
    %164 = arith.cmpi eq, %147, %163 : vector<32x32xi32>
    %cst_66 = arith.constant 1.000000e+00 : f32
    %cst_67 = arith.constant 0.000000e+00 : f32
    %165 = vector.broadcast %cst_66 : f32 to vector<32x32xf32>
    %166 = vector.broadcast %cst_67 : f32 to vector<32x32xf32>
    %167 = arith.select %164, %165, %166 : vector<32x32xi1>, vector<32x32xf32>
    %168 = arith.truncf %167 : vector<32x32xf32> to vector<32x32xbf16>
    %cst_68 = arith.constant dense<0.000000e+00> : vector<32x128xf32>
    %169 = tpu.matmul %168, %1, %cst_68 {dimension_numbers = #tpu.dot_dimension_numbers<[1], [0], [0], [1], [0, 0, 1, 1], [], []>} : vector<32x32xbf16>, vector<32x128xbf16>, vector<32x128xf32> -> vector<32x128xf32>
    %170 = arith.truncf %169 : vector<32x128xf32> to vector<32x128xbf16>
    %c5 = arith.constant 5 : index
    %c0_69 = arith.constant 0 : index
    %c0_70 = arith.constant 0 : index
    %171 = vector.load %arg2[%c5, %c0_69, %c0_70] : memref<7x128x256xbf16, #tpu.memory_space<vmem>>, vector<1x128x256xbf16>
    %172 = vector.shape_cast %171 : vector<1x128x256xbf16> to vector<128x256xbf16>
    %cst_71 = arith.constant dense<0.000000e+00> : vector<32x256xf32>
    %173 = tpu.matmul %170, %172, %cst_71 {dimension_numbers = #tpu.dot_dimension_numbers<[1], [0], [0], [1], [0, 0, 1, 1], [], []>} : vector<32x128xbf16>, vector<128x256xbf16>, vector<32x256xf32> -> vector<32x256xf32>
    %174 = arith.addf %145, %173 : vector<32x256xf32>
    %175 = tpu.iota {dimensions = array<i32: 0>} : vector<32x32xi32>
    %176 = tpu.iota {dimensions = array<i32: 1>} : vector<32x32xi32>
    %c1_i32_72 = arith.constant 1 : i32
    %177 = vector.broadcast %c1_i32_72 : i32 to vector<32x32xi32>
    %178 = arith.muli %177, %175 : vector<32x32xi32>
    %c6_i32 = arith.constant 6 : i32
    %179 = vector.broadcast %c6_i32 : i32 to vector<32x32xi32>
    %180 = arith.addi %178, %179 : vector<32x32xi32>
    %c3_i32_73 = arith.constant 3 : i32
    %181 = vector.broadcast %c3_i32_73 : i32 to vector<32x32xi32>
    %182 = arith.subi %180, %181 : vector<32x32xi32>
    %c0_i32_74 = arith.constant 0 : i32
    %183 = vector.broadcast %c0_i32_74 : i32 to vector<32x32xi32>
    %184 = arith.cmpi slt, %182, %183 : vector<32x32xi32>
    %c0_i32_75 = arith.constant 0 : i32
    %185 = vector.broadcast %c0_i32_75 : i32 to vector<32x32xi32>
    %186 = arith.subi %185, %182 : vector<32x32xi32>
    %187 = arith.select %184, %186, %182 : vector<32x32xi1>, vector<32x32xi32>
    %c31_i32_76 = arith.constant 31 : i32
    %188 = vector.broadcast %c31_i32_76 : i32 to vector<32x32xi32>
    %189 = arith.cmpi sgt, %187, %188 : vector<32x32xi32>
    %c62_i32_77 = arith.constant 62 : i32
    %190 = vector.broadcast %c62_i32_77 : i32 to vector<32x32xi32>
    %191 = arith.subi %190, %187 : vector<32x32xi32>
    %192 = arith.select %189, %191, %187 : vector<32x32xi1>, vector<32x32xi32>
    %193 = arith.cmpi eq, %176, %192 : vector<32x32xi32>
    %cst_78 = arith.constant 1.000000e+00 : f32
    %cst_79 = arith.constant 0.000000e+00 : f32
    %194 = vector.broadcast %cst_78 : f32 to vector<32x32xf32>
    %195 = vector.broadcast %cst_79 : f32 to vector<32x32xf32>
    %196 = arith.select %193, %194, %195 : vector<32x32xi1>, vector<32x32xf32>
    %197 = arith.truncf %196 : vector<32x32xf32> to vector<32x32xbf16>
    %cst_80 = arith.constant dense<0.000000e+00> : vector<32x128xf32>
    %198 = tpu.matmul %197, %1, %cst_80 {dimension_numbers = #tpu.dot_dimension_numbers<[1], [0], [0], [1], [0, 0, 1, 1], [], []>} : vector<32x32xbf16>, vector<32x128xbf16>, vector<32x128xf32> -> vector<32x128xf32>
    %199 = arith.truncf %198 : vector<32x128xf32> to vector<32x128xbf16>
    %c6 = arith.constant 6 : index
    %c0_81 = arith.constant 0 : index
    %c0_82 = arith.constant 0 : index
    %200 = vector.load %arg2[%c6, %c0_81, %c0_82] : memref<7x128x256xbf16, #tpu.memory_space<vmem>>, vector<1x128x256xbf16>
    %201 = vector.shape_cast %200 : vector<1x128x256xbf16> to vector<128x256xbf16>
    %cst_83 = arith.constant dense<0.000000e+00> : vector<32x256xf32>
    %202 = tpu.matmul %199, %201, %cst_83 {dimension_numbers = #tpu.dot_dimension_numbers<[1], [0], [0], [1], [0, 0, 1, 1], [], []>} : vector<32x128xbf16>, vector<128x256xbf16>, vector<32x256xf32> -> vector<32x256xf32>
    %203 = arith.addf %174, %202 : vector<32x256xf32>
    %c0_84 = arith.constant 0 : index
    %c0_85 = arith.constant 0 : index
    %204 = vector.load %arg7[%c0_84, %c0_85] : memref<1x256xf32, #tpu.memory_space<vmem>>, vector<1x256xf32>
    %205 = vector.broadcast %204 : vector<1x256xf32> to vector<32x256xf32>
    %206 = arith.addf %203, %205 : vector<32x256xf32>
    %cst_86 = arith.constant 0.000000e+00 : f32
    %207 = vector.broadcast %cst_86 : f32 to vector<32x256xf32>
    %208 = arith.maximumf %206, %207 : vector<32x256xf32>
    %209 = arith.truncf %208 : vector<32x256xf32> to vector<32x256xbf16>
    %210 = tpu.iota {dimensions = array<i32: 0>} : vector<16x32xi32>
    %211 = tpu.iota {dimensions = array<i32: 1>} : vector<16x32xi32>
    %c2_i32_87 = arith.constant 2 : i32
    %212 = vector.broadcast %c2_i32_87 : i32 to vector<16x32xi32>
    %213 = arith.muli %212, %210 : vector<16x32xi32>
    %c0_i32_88 = arith.constant 0 : i32
    %214 = vector.broadcast %c0_i32_88 : i32 to vector<16x32xi32>
    %215 = arith.addi %213, %214 : vector<16x32xi32>
    %c1_i32_89 = arith.constant 1 : i32
    %216 = vector.broadcast %c1_i32_89 : i32 to vector<16x32xi32>
    %217 = arith.subi %215, %216 : vector<16x32xi32>
    %c0_i32_90 = arith.constant 0 : i32
    %218 = vector.broadcast %c0_i32_90 : i32 to vector<16x32xi32>
    %219 = arith.cmpi slt, %217, %218 : vector<16x32xi32>
    %c0_i32_91 = arith.constant 0 : i32
    %220 = vector.broadcast %c0_i32_91 : i32 to vector<16x32xi32>
    %221 = arith.subi %220, %217 : vector<16x32xi32>
    %222 = arith.select %219, %221, %217 : vector<16x32xi1>, vector<16x32xi32>
    %c31_i32_92 = arith.constant 31 : i32
    %223 = vector.broadcast %c31_i32_92 : i32 to vector<16x32xi32>
    %224 = arith.cmpi sgt, %222, %223 : vector<16x32xi32>
    %c62_i32_93 = arith.constant 62 : i32
    %225 = vector.broadcast %c62_i32_93 : i32 to vector<16x32xi32>
    %226 = arith.subi %225, %222 : vector<16x32xi32>
    %227 = arith.select %224, %226, %222 : vector<16x32xi1>, vector<16x32xi32>
    %228 = arith.cmpi eq, %211, %227 : vector<16x32xi32>
    %cst_94 = arith.constant 1.000000e+00 : f32
    %cst_95 = arith.constant 0.000000e+00 : f32
    %229 = vector.broadcast %cst_94 : f32 to vector<16x32xf32>
    %230 = vector.broadcast %cst_95 : f32 to vector<16x32xf32>
    %231 = arith.select %228, %229, %230 : vector<16x32xi1>, vector<16x32xf32>
    %232 = arith.truncf %231 : vector<16x32xf32> to vector<16x32xbf16>
    %cst_96 = arith.constant dense<0.000000e+00> : vector<16x256xf32>
    %233 = tpu.matmul %232, %209, %cst_96 {dimension_numbers = #tpu.dot_dimension_numbers<[1], [0], [0], [1], [0, 0, 1, 1], [], []>} : vector<16x32xbf16>, vector<32x256xbf16>, vector<16x256xf32> -> vector<16x256xf32>
    %234 = arith.truncf %233 : vector<16x256xf32> to vector<16x256xbf16>
    %c0_97 = arith.constant 0 : index
    %c0_98 = arith.constant 0 : index
    %c0_99 = arith.constant 0 : index
    %235 = vector.load %arg3[%c0_97, %c0_98, %c0_99] : memref<4x256x256xbf16, #tpu.memory_space<vmem>>, vector<1x256x256xbf16>
    %236 = vector.shape_cast %235 : vector<1x256x256xbf16> to vector<256x256xbf16>
    %cst_100 = arith.constant dense<0.000000e+00> : vector<16x256xf32>
    %237 = tpu.matmul %234, %236, %cst_100 {dimension_numbers = #tpu.dot_dimension_numbers<[1], [0], [0], [1], [0, 0, 1, 1], [], []>} : vector<16x256xbf16>, vector<256x256xbf16>, vector<16x256xf32> -> vector<16x256xf32>
    %238 = tpu.iota {dimensions = array<i32: 0>} : vector<16x32xi32>
    %239 = tpu.iota {dimensions = array<i32: 1>} : vector<16x32xi32>
    %c2_i32_101 = arith.constant 2 : i32
    %240 = vector.broadcast %c2_i32_101 : i32 to vector<16x32xi32>
    %241 = arith.muli %240, %238 : vector<16x32xi32>
    %c1_i32_102 = arith.constant 1 : i32
    %242 = vector.broadcast %c1_i32_102 : i32 to vector<16x32xi32>
    %243 = arith.addi %241, %242 : vector<16x32xi32>
    %c1_i32_103 = arith.constant 1 : i32
    %244 = vector.broadcast %c1_i32_103 : i32 to vector<16x32xi32>
    %245 = arith.subi %243, %244 : vector<16x32xi32>
    %c0_i32_104 = arith.constant 0 : i32
    %246 = vector.broadcast %c0_i32_104 : i32 to vector<16x32xi32>
    %247 = arith.cmpi slt, %245, %246 : vector<16x32xi32>
    %c0_i32_105 = arith.constant 0 : i32
    %248 = vector.broadcast %c0_i32_105 : i32 to vector<16x32xi32>
    %249 = arith.subi %248, %245 : vector<16x32xi32>
    %250 = arith.select %247, %249, %245 : vector<16x32xi1>, vector<16x32xi32>
    %c31_i32_106 = arith.constant 31 : i32
    %251 = vector.broadcast %c31_i32_106 : i32 to vector<16x32xi32>
    %252 = arith.cmpi sgt, %250, %251 : vector<16x32xi32>
    %c62_i32_107 = arith.constant 62 : i32
    %253 = vector.broadcast %c62_i32_107 : i32 to vector<16x32xi32>
    %254 = arith.subi %253, %250 : vector<16x32xi32>
    %255 = arith.select %252, %254, %250 : vector<16x32xi1>, vector<16x32xi32>
    %256 = arith.cmpi eq, %239, %255 : vector<16x32xi32>
    %cst_108 = arith.constant 1.000000e+00 : f32
    %cst_109 = arith.constant 0.000000e+00 : f32
    %257 = vector.broadcast %cst_108 : f32 to vector<16x32xf32>
    %258 = vector.broadcast %cst_109 : f32 to vector<16x32xf32>
    %259 = arith.select %256, %257, %258 : vector<16x32xi1>, vector<16x32xf32>
    %260 = arith.truncf %259 : vector<16x32xf32> to vector<16x32xbf16>
    %cst_110 = arith.constant dense<0.000000e+00> : vector<16x256xf32>
    %261 = tpu.matmul %260, %209, %cst_110 {dimension_numbers = #tpu.dot_dimension_numbers<[1], [0], [0], [1], [0, 0, 1, 1], [], []>} : vector<16x32xbf16>, vector<32x256xbf16>, vector<16x256xf32> -> vector<16x256xf32>
    %262 = arith.truncf %261 : vector<16x256xf32> to vector<16x256xbf16>
    %c1_111 = arith.constant 1 : index
    %c0_112 = arith.constant 0 : index
    %c0_113 = arith.constant 0 : index
    %263 = vector.load %arg3[%c1_111, %c0_112, %c0_113] : memref<4x256x256xbf16, #tpu.memory_space<vmem>>, vector<1x256x256xbf16>
    %264 = vector.shape_cast %263 : vector<1x256x256xbf16> to vector<256x256xbf16>
    %cst_114 = arith.constant dense<0.000000e+00> : vector<16x256xf32>
    %265 = tpu.matmul %262, %264, %cst_114 {dimension_numbers = #tpu.dot_dimension_numbers<[1], [0], [0], [1], [0, 0, 1, 1], [], []>} : vector<16x256xbf16>, vector<256x256xbf16>, vector<16x256xf32> -> vector<16x256xf32>
    %266 = arith.addf %237, %265 : vector<16x256xf32>
    %267 = tpu.iota {dimensions = array<i32: 0>} : vector<16x32xi32>
    %268 = tpu.iota {dimensions = array<i32: 1>} : vector<16x32xi32>
    %c2_i32_115 = arith.constant 2 : i32
    %269 = vector.broadcast %c2_i32_115 : i32 to vector<16x32xi32>
    %270 = arith.muli %269, %267 : vector<16x32xi32>
    %c2_i32_116 = arith.constant 2 : i32
    %271 = vector.broadcast %c2_i32_116 : i32 to vector<16x32xi32>
    %272 = arith.addi %270, %271 : vector<16x32xi32>
    %c1_i32_117 = arith.constant 1 : i32
    %273 = vector.broadcast %c1_i32_117 : i32 to vector<16x32xi32>
    %274 = arith.subi %272, %273 : vector<16x32xi32>
    %c0_i32_118 = arith.constant 0 : i32
    %275 = vector.broadcast %c0_i32_118 : i32 to vector<16x32xi32>
    %276 = arith.cmpi slt, %274, %275 : vector<16x32xi32>
    %c0_i32_119 = arith.constant 0 : i32
    %277 = vector.broadcast %c0_i32_119 : i32 to vector<16x32xi32>
    %278 = arith.subi %277, %274 : vector<16x32xi32>
    %279 = arith.select %276, %278, %274 : vector<16x32xi1>, vector<16x32xi32>
    %c31_i32_120 = arith.constant 31 : i32
    %280 = vector.broadcast %c31_i32_120 : i32 to vector<16x32xi32>
    %281 = arith.cmpi sgt, %279, %280 : vector<16x32xi32>
    %c62_i32_121 = arith.constant 62 : i32
    %282 = vector.broadcast %c62_i32_121 : i32 to vector<16x32xi32>
    %283 = arith.subi %282, %279 : vector<16x32xi32>
    %284 = arith.select %281, %283, %279 : vector<16x32xi1>, vector<16x32xi32>
    %285 = arith.cmpi eq, %268, %284 : vector<16x32xi32>
    %cst_122 = arith.constant 1.000000e+00 : f32
    %cst_123 = arith.constant 0.000000e+00 : f32
    %286 = vector.broadcast %cst_122 : f32 to vector<16x32xf32>
    %287 = vector.broadcast %cst_123 : f32 to vector<16x32xf32>
    %288 = arith.select %285, %286, %287 : vector<16x32xi1>, vector<16x32xf32>
    %289 = arith.truncf %288 : vector<16x32xf32> to vector<16x32xbf16>
    %cst_124 = arith.constant dense<0.000000e+00> : vector<16x256xf32>
    %290 = tpu.matmul %289, %209, %cst_124 {dimension_numbers = #tpu.dot_dimension_numbers<[1], [0], [0], [1], [0, 0, 1, 1], [], []>} : vector<16x32xbf16>, vector<32x256xbf16>, vector<16x256xf32> -> vector<16x256xf32>
    %291 = arith.truncf %290 : vector<16x256xf32> to vector<16x256xbf16>
    %c2_125 = arith.constant 2 : index
    %c0_126 = arith.constant 0 : index
    %c0_127 = arith.constant 0 : index
    %292 = vector.load %arg3[%c2_125, %c0_126, %c0_127] : memref<4x256x256xbf16, #tpu.memory_space<vmem>>, vector<1x256x256xbf16>
    %293 = vector.shape_cast %292 : vector<1x256x256xbf16> to vector<256x256xbf16>
    %cst_128 = arith.constant dense<0.000000e+00> : vector<16x256xf32>
    %294 = tpu.matmul %291, %293, %cst_128 {dimension_numbers = #tpu.dot_dimension_numbers<[1], [0], [0], [1], [0, 0, 1, 1], [], []>} : vector<16x256xbf16>, vector<256x256xbf16>, vector<16x256xf32> -> vector<16x256xf32>
    %295 = arith.addf %266, %294 : vector<16x256xf32>
    %296 = tpu.iota {dimensions = array<i32: 0>} : vector<16x32xi32>
    %297 = tpu.iota {dimensions = array<i32: 1>} : vector<16x32xi32>
    %c2_i32_129 = arith.constant 2 : i32
    %298 = vector.broadcast %c2_i32_129 : i32 to vector<16x32xi32>
    %299 = arith.muli %298, %296 : vector<16x32xi32>
    %c3_i32_130 = arith.constant 3 : i32
    %300 = vector.broadcast %c3_i32_130 : i32 to vector<16x32xi32>
    %301 = arith.addi %299, %300 : vector<16x32xi32>
    %c1_i32_131 = arith.constant 1 : i32
    %302 = vector.broadcast %c1_i32_131 : i32 to vector<16x32xi32>
    %303 = arith.subi %301, %302 : vector<16x32xi32>
    %c0_i32_132 = arith.constant 0 : i32
    %304 = vector.broadcast %c0_i32_132 : i32 to vector<16x32xi32>
    %305 = arith.cmpi slt, %303, %304 : vector<16x32xi32>
    %c0_i32_133 = arith.constant 0 : i32
    %306 = vector.broadcast %c0_i32_133 : i32 to vector<16x32xi32>
    %307 = arith.subi %306, %303 : vector<16x32xi32>
    %308 = arith.select %305, %307, %303 : vector<16x32xi1>, vector<16x32xi32>
    %c31_i32_134 = arith.constant 31 : i32
    %309 = vector.broadcast %c31_i32_134 : i32 to vector<16x32xi32>
    %310 = arith.cmpi sgt, %308, %309 : vector<16x32xi32>
    %c62_i32_135 = arith.constant 62 : i32
    %311 = vector.broadcast %c62_i32_135 : i32 to vector<16x32xi32>
    %312 = arith.subi %311, %308 : vector<16x32xi32>
    %313 = arith.select %310, %312, %308 : vector<16x32xi1>, vector<16x32xi32>
    %314 = arith.cmpi eq, %297, %313 : vector<16x32xi32>
    %cst_136 = arith.constant 1.000000e+00 : f32
    %cst_137 = arith.constant 0.000000e+00 : f32
    %315 = vector.broadcast %cst_136 : f32 to vector<16x32xf32>
    %316 = vector.broadcast %cst_137 : f32 to vector<16x32xf32>
    %317 = arith.select %314, %315, %316 : vector<16x32xi1>, vector<16x32xf32>
    %318 = arith.truncf %317 : vector<16x32xf32> to vector<16x32xbf16>
    %cst_138 = arith.constant dense<0.000000e+00> : vector<16x256xf32>
    %319 = tpu.matmul %318, %209, %cst_138 {dimension_numbers = #tpu.dot_dimension_numbers<[1], [0], [0], [1], [0, 0, 1, 1], [], []>} : vector<16x32xbf16>, vector<32x256xbf16>, vector<16x256xf32> -> vector<16x256xf32>
    %320 = arith.truncf %319 : vector<16x256xf32> to vector<16x256xbf16>
    %c3_139 = arith.constant 3 : index
    %c0_140 = arith.constant 0 : index
    %c0_141 = arith.constant 0 : index
    %321 = vector.load %arg3[%c3_139, %c0_140, %c0_141] : memref<4x256x256xbf16, #tpu.memory_space<vmem>>, vector<1x256x256xbf16>
    %322 = vector.shape_cast %321 : vector<1x256x256xbf16> to vector<256x256xbf16>
    %cst_142 = arith.constant dense<0.000000e+00> : vector<16x256xf32>
    %323 = tpu.matmul %320, %322, %cst_142 {dimension_numbers = #tpu.dot_dimension_numbers<[1], [0], [0], [1], [0, 0, 1, 1], [], []>} : vector<16x256xbf16>, vector<256x256xbf16>, vector<16x256xf32> -> vector<16x256xf32>
    %324 = arith.addf %295, %323 : vector<16x256xf32>
    %c0_143 = arith.constant 0 : index
    %c0_144 = arith.constant 0 : index
    %325 = vector.load %arg8[%c0_143, %c0_144] : memref<1x256xf32, #tpu.memory_space<vmem>>, vector<1x256xf32>
    %326 = vector.broadcast %325 : vector<1x256xf32> to vector<16x256xf32>
    %327 = arith.addf %324, %326 : vector<16x256xf32>
    %cst_145 = arith.constant 0.000000e+00 : f32
    %328 = vector.broadcast %cst_145 : f32 to vector<16x256xf32>
    %329 = arith.maximumf %327, %328 : vector<16x256xf32>
    %330 = arith.truncf %329 : vector<16x256xf32> to vector<16x256xbf16>
    %331 = tpu.iota {dimensions = array<i32: 0>} : vector<8x16xi32>
    %332 = tpu.iota {dimensions = array<i32: 1>} : vector<8x16xi32>
    %c2_i32_146 = arith.constant 2 : i32
    %333 = vector.broadcast %c2_i32_146 : i32 to vector<8x16xi32>
    %334 = arith.muli %333, %331 : vector<8x16xi32>
    %c0_i32_147 = arith.constant 0 : i32
    %335 = vector.broadcast %c0_i32_147 : i32 to vector<8x16xi32>
    %336 = arith.addi %334, %335 : vector<8x16xi32>
    %c1_i32_148 = arith.constant 1 : i32
    %337 = vector.broadcast %c1_i32_148 : i32 to vector<8x16xi32>
    %338 = arith.subi %336, %337 : vector<8x16xi32>
    %c0_i32_149 = arith.constant 0 : i32
    %339 = vector.broadcast %c0_i32_149 : i32 to vector<8x16xi32>
    %340 = arith.cmpi slt, %338, %339 : vector<8x16xi32>
    %c0_i32_150 = arith.constant 0 : i32
    %341 = vector.broadcast %c0_i32_150 : i32 to vector<8x16xi32>
    %342 = arith.subi %341, %338 : vector<8x16xi32>
    %343 = arith.select %340, %342, %338 : vector<8x16xi1>, vector<8x16xi32>
    %c15_i32 = arith.constant 15 : i32
    %344 = vector.broadcast %c15_i32 : i32 to vector<8x16xi32>
    %345 = arith.cmpi sgt, %343, %344 : vector<8x16xi32>
    %c30_i32 = arith.constant 30 : i32
    %346 = vector.broadcast %c30_i32 : i32 to vector<8x16xi32>
    %347 = arith.subi %346, %343 : vector<8x16xi32>
    %348 = arith.select %345, %347, %343 : vector<8x16xi1>, vector<8x16xi32>
    %349 = arith.cmpi eq, %332, %348 : vector<8x16xi32>
    %cst_151 = arith.constant 1.000000e+00 : f32
    %cst_152 = arith.constant 0.000000e+00 : f32
    %350 = vector.broadcast %cst_151 : f32 to vector<8x16xf32>
    %351 = vector.broadcast %cst_152 : f32 to vector<8x16xf32>
    %352 = arith.select %349, %350, %351 : vector<8x16xi1>, vector<8x16xf32>
    %353 = arith.truncf %352 : vector<8x16xf32> to vector<8x16xbf16>
    %cst_153 = arith.constant dense<0.000000e+00> : vector<8x256xf32>
    %354 = tpu.matmul %353, %330, %cst_153 {dimension_numbers = #tpu.dot_dimension_numbers<[1], [0], [0], [1], [0, 0, 1, 1], [], []>} : vector<8x16xbf16>, vector<16x256xbf16>, vector<8x256xf32> -> vector<8x256xf32>
    %355 = arith.truncf %354 : vector<8x256xf32> to vector<8x256xbf16>
    %c0_154 = arith.constant 0 : index
    %c0_155 = arith.constant 0 : index
    %c0_156 = arith.constant 0 : index
    %356 = vector.load %arg4[%c0_154, %c0_155, %c0_156] : memref<4x256x256xbf16, #tpu.memory_space<vmem>>, vector<1x256x256xbf16>
    %357 = vector.shape_cast %356 : vector<1x256x256xbf16> to vector<256x256xbf16>
    %cst_157 = arith.constant dense<0.000000e+00> : vector<8x256xf32>
    %358 = tpu.matmul %355, %357, %cst_157 {dimension_numbers = #tpu.dot_dimension_numbers<[1], [0], [0], [1], [0, 0, 1, 1], [], []>} : vector<8x256xbf16>, vector<256x256xbf16>, vector<8x256xf32> -> vector<8x256xf32>
    %359 = tpu.iota {dimensions = array<i32: 0>} : vector<8x16xi32>
    %360 = tpu.iota {dimensions = array<i32: 1>} : vector<8x16xi32>
    %c2_i32_158 = arith.constant 2 : i32
    %361 = vector.broadcast %c2_i32_158 : i32 to vector<8x16xi32>
    %362 = arith.muli %361, %359 : vector<8x16xi32>
    %c1_i32_159 = arith.constant 1 : i32
    %363 = vector.broadcast %c1_i32_159 : i32 to vector<8x16xi32>
    %364 = arith.addi %362, %363 : vector<8x16xi32>
    %c1_i32_160 = arith.constant 1 : i32
    %365 = vector.broadcast %c1_i32_160 : i32 to vector<8x16xi32>
    %366 = arith.subi %364, %365 : vector<8x16xi32>
    %c0_i32_161 = arith.constant 0 : i32
    %367 = vector.broadcast %c0_i32_161 : i32 to vector<8x16xi32>
    %368 = arith.cmpi slt, %366, %367 : vector<8x16xi32>
    %c0_i32_162 = arith.constant 0 : i32
    %369 = vector.broadcast %c0_i32_162 : i32 to vector<8x16xi32>
    %370 = arith.subi %369, %366 : vector<8x16xi32>
    %371 = arith.select %368, %370, %366 : vector<8x16xi1>, vector<8x16xi32>
    %c15_i32_163 = arith.constant 15 : i32
    %372 = vector.broadcast %c15_i32_163 : i32 to vector<8x16xi32>
    %373 = arith.cmpi sgt, %371, %372 : vector<8x16xi32>
    %c30_i32_164 = arith.constant 30 : i32
    %374 = vector.broadcast %c30_i32_164 : i32 to vector<8x16xi32>
    %375 = arith.subi %374, %371 : vector<8x16xi32>
    %376 = arith.select %373, %375, %371 : vector<8x16xi1>, vector<8x16xi32>
    %377 = arith.cmpi eq, %360, %376 : vector<8x16xi32>
    %cst_165 = arith.constant 1.000000e+00 : f32
    %cst_166 = arith.constant 0.000000e+00 : f32
    %378 = vector.broadcast %cst_165 : f32 to vector<8x16xf32>
    %379 = vector.broadcast %cst_166 : f32 to vector<8x16xf32>
    %380 = arith.select %377, %378, %379 : vector<8x16xi1>, vector<8x16xf32>
    %381 = arith.truncf %380 : vector<8x16xf32> to vector<8x16xbf16>
    %cst_167 = arith.constant dense<0.000000e+00> : vector<8x256xf32>
    %382 = tpu.matmul %381, %330, %cst_167 {dimension_numbers = #tpu.dot_dimension_numbers<[1], [0], [0], [1], [0, 0, 1, 1], [], []>} : vector<8x16xbf16>, vector<16x256xbf16>, vector<8x256xf32> -> vector<8x256xf32>
    %383 = arith.truncf %382 : vector<8x256xf32> to vector<8x256xbf16>
    %c1_168 = arith.constant 1 : index
    %c0_169 = arith.constant 0 : index
    %c0_170 = arith.constant 0 : index
    %384 = vector.load %arg4[%c1_168, %c0_169, %c0_170] : memref<4x256x256xbf16, #tpu.memory_space<vmem>>, vector<1x256x256xbf16>
    %385 = vector.shape_cast %384 : vector<1x256x256xbf16> to vector<256x256xbf16>
    %cst_171 = arith.constant dense<0.000000e+00> : vector<8x256xf32>
    %386 = tpu.matmul %383, %385, %cst_171 {dimension_numbers = #tpu.dot_dimension_numbers<[1], [0], [0], [1], [0, 0, 1, 1], [], []>} : vector<8x256xbf16>, vector<256x256xbf16>, vector<8x256xf32> -> vector<8x256xf32>
    %387 = arith.addf %358, %386 : vector<8x256xf32>
    %388 = tpu.iota {dimensions = array<i32: 0>} : vector<8x16xi32>
    %389 = tpu.iota {dimensions = array<i32: 1>} : vector<8x16xi32>
    %c2_i32_172 = arith.constant 2 : i32
    %390 = vector.broadcast %c2_i32_172 : i32 to vector<8x16xi32>
    %391 = arith.muli %390, %388 : vector<8x16xi32>
    %c2_i32_173 = arith.constant 2 : i32
    %392 = vector.broadcast %c2_i32_173 : i32 to vector<8x16xi32>
    %393 = arith.addi %391, %392 : vector<8x16xi32>
    %c1_i32_174 = arith.constant 1 : i32
    %394 = vector.broadcast %c1_i32_174 : i32 to vector<8x16xi32>
    %395 = arith.subi %393, %394 : vector<8x16xi32>
    %c0_i32_175 = arith.constant 0 : i32
    %396 = vector.broadcast %c0_i32_175 : i32 to vector<8x16xi32>
    %397 = arith.cmpi slt, %395, %396 : vector<8x16xi32>
    %c0_i32_176 = arith.constant 0 : i32
    %398 = vector.broadcast %c0_i32_176 : i32 to vector<8x16xi32>
    %399 = arith.subi %398, %395 : vector<8x16xi32>
    %400 = arith.select %397, %399, %395 : vector<8x16xi1>, vector<8x16xi32>
    %c15_i32_177 = arith.constant 15 : i32
    %401 = vector.broadcast %c15_i32_177 : i32 to vector<8x16xi32>
    %402 = arith.cmpi sgt, %400, %401 : vector<8x16xi32>
    %c30_i32_178 = arith.constant 30 : i32
    %403 = vector.broadcast %c30_i32_178 : i32 to vector<8x16xi32>
    %404 = arith.subi %403, %400 : vector<8x16xi32>
    %405 = arith.select %402, %404, %400 : vector<8x16xi1>, vector<8x16xi32>
    %406 = arith.cmpi eq, %389, %405 : vector<8x16xi32>
    %cst_179 = arith.constant 1.000000e+00 : f32
    %cst_180 = arith.constant 0.000000e+00 : f32
    %407 = vector.broadcast %cst_179 : f32 to vector<8x16xf32>
    %408 = vector.broadcast %cst_180 : f32 to vector<8x16xf32>
    %409 = arith.select %406, %407, %408 : vector<8x16xi1>, vector<8x16xf32>
    %410 = arith.truncf %409 : vector<8x16xf32> to vector<8x16xbf16>
    %cst_181 = arith.constant dense<0.000000e+00> : vector<8x256xf32>
    %411 = tpu.matmul %410, %330, %cst_181 {dimension_numbers = #tpu.dot_dimension_numbers<[1], [0], [0], [1], [0, 0, 1, 1], [], []>} : vector<8x16xbf16>, vector<16x256xbf16>, vector<8x256xf32> -> vector<8x256xf32>
    %412 = arith.truncf %411 : vector<8x256xf32> to vector<8x256xbf16>
    %c2_182 = arith.constant 2 : index
    %c0_183 = arith.constant 0 : index
    %c0_184 = arith.constant 0 : index
    %413 = vector.load %arg4[%c2_182, %c0_183, %c0_184] : memref<4x256x256xbf16, #tpu.memory_space<vmem>>, vector<1x256x256xbf16>
    %414 = vector.shape_cast %413 : vector<1x256x256xbf16> to vector<256x256xbf16>
    %cst_185 = arith.constant dense<0.000000e+00> : vector<8x256xf32>
    %415 = tpu.matmul %412, %414, %cst_185 {dimension_numbers = #tpu.dot_dimension_numbers<[1], [0], [0], [1], [0, 0, 1, 1], [], []>} : vector<8x256xbf16>, vector<256x256xbf16>, vector<8x256xf32> -> vector<8x256xf32>
    %416 = arith.addf %387, %415 : vector<8x256xf32>
    %417 = tpu.iota {dimensions = array<i32: 0>} : vector<8x16xi32>
    %418 = tpu.iota {dimensions = array<i32: 1>} : vector<8x16xi32>
    %c2_i32_186 = arith.constant 2 : i32
    %419 = vector.broadcast %c2_i32_186 : i32 to vector<8x16xi32>
    %420 = arith.muli %419, %417 : vector<8x16xi32>
    %c3_i32_187 = arith.constant 3 : i32
    %421 = vector.broadcast %c3_i32_187 : i32 to vector<8x16xi32>
    %422 = arith.addi %420, %421 : vector<8x16xi32>
    %c1_i32_188 = arith.constant 1 : i32
    %423 = vector.broadcast %c1_i32_188 : i32 to vector<8x16xi32>
    %424 = arith.subi %422, %423 : vector<8x16xi32>
    %c0_i32_189 = arith.constant 0 : i32
    %425 = vector.broadcast %c0_i32_189 : i32 to vector<8x16xi32>
    %426 = arith.cmpi slt, %424, %425 : vector<8x16xi32>
    %c0_i32_190 = arith.constant 0 : i32
    %427 = vector.broadcast %c0_i32_190 : i32 to vector<8x16xi32>
    %428 = arith.subi %427, %424 : vector<8x16xi32>
    %429 = arith.select %426, %428, %424 : vector<8x16xi1>, vector<8x16xi32>
    %c15_i32_191 = arith.constant 15 : i32
    %430 = vector.broadcast %c15_i32_191 : i32 to vector<8x16xi32>
    %431 = arith.cmpi sgt, %429, %430 : vector<8x16xi32>
    %c30_i32_192 = arith.constant 30 : i32
    %432 = vector.broadcast %c30_i32_192 : i32 to vector<8x16xi32>
    %433 = arith.subi %432, %429 : vector<8x16xi32>
    %434 = arith.select %431, %433, %429 : vector<8x16xi1>, vector<8x16xi32>
    %435 = arith.cmpi eq, %418, %434 : vector<8x16xi32>
    %cst_193 = arith.constant 1.000000e+00 : f32
    %cst_194 = arith.constant 0.000000e+00 : f32
    %436 = vector.broadcast %cst_193 : f32 to vector<8x16xf32>
    %437 = vector.broadcast %cst_194 : f32 to vector<8x16xf32>
    %438 = arith.select %435, %436, %437 : vector<8x16xi1>, vector<8x16xf32>
    %439 = arith.truncf %438 : vector<8x16xf32> to vector<8x16xbf16>
    %cst_195 = arith.constant dense<0.000000e+00> : vector<8x256xf32>
    %440 = tpu.matmul %439, %330, %cst_195 {dimension_numbers = #tpu.dot_dimension_numbers<[1], [0], [0], [1], [0, 0, 1, 1], [], []>} : vector<8x16xbf16>, vector<16x256xbf16>, vector<8x256xf32> -> vector<8x256xf32>
    %441 = arith.truncf %440 : vector<8x256xf32> to vector<8x256xbf16>
    %c3_196 = arith.constant 3 : index
    %c0_197 = arith.constant 0 : index
    %c0_198 = arith.constant 0 : index
    %442 = vector.load %arg4[%c3_196, %c0_197, %c0_198] : memref<4x256x256xbf16, #tpu.memory_space<vmem>>, vector<1x256x256xbf16>
    %443 = vector.shape_cast %442 : vector<1x256x256xbf16> to vector<256x256xbf16>
    %cst_199 = arith.constant dense<0.000000e+00> : vector<8x256xf32>
    %444 = tpu.matmul %441, %443, %cst_199 {dimension_numbers = #tpu.dot_dimension_numbers<[1], [0], [0], [1], [0, 0, 1, 1], [], []>} : vector<8x256xbf16>, vector<256x256xbf16>, vector<8x256xf32> -> vector<8x256xf32>
    %445 = arith.addf %416, %444 : vector<8x256xf32>
    %c0_200 = arith.constant 0 : index
    %c0_201 = arith.constant 0 : index
    %446 = vector.load %arg9[%c0_200, %c0_201] : memref<1x256xf32, #tpu.memory_space<vmem>>, vector<1x256xf32>
    %447 = vector.broadcast %446 : vector<1x256xf32> to vector<8x256xf32>
    %448 = arith.addf %445, %447 : vector<8x256xf32>
    %cst_202 = arith.constant 0.000000e+00 : f32
    %449 = vector.broadcast %cst_202 : f32 to vector<8x256xf32>
    %450 = arith.maximumf %448, %449 : vector<8x256xf32>
    %451 = arith.truncf %450 : vector<8x256xf32> to vector<8x256xbf16>
    %452 = tpu.iota {dimensions = array<i32: 0>} : vector<4x8xi32>
    %453 = tpu.iota {dimensions = array<i32: 1>} : vector<4x8xi32>
    %c2_i32_203 = arith.constant 2 : i32
    %454 = vector.broadcast %c2_i32_203 : i32 to vector<4x8xi32>
    %455 = arith.muli %454, %452 : vector<4x8xi32>
    %c0_i32_204 = arith.constant 0 : i32
    %456 = vector.broadcast %c0_i32_204 : i32 to vector<4x8xi32>
    %457 = arith.addi %455, %456 : vector<4x8xi32>
    %c1_i32_205 = arith.constant 1 : i32
    %458 = vector.broadcast %c1_i32_205 : i32 to vector<4x8xi32>
    %459 = arith.subi %457, %458 : vector<4x8xi32>
    %c0_i32_206 = arith.constant 0 : i32
    %460 = vector.broadcast %c0_i32_206 : i32 to vector<4x8xi32>
    %461 = arith.cmpi slt, %459, %460 : vector<4x8xi32>
    %c0_i32_207 = arith.constant 0 : i32
    %462 = vector.broadcast %c0_i32_207 : i32 to vector<4x8xi32>
    %463 = arith.subi %462, %459 : vector<4x8xi32>
    %464 = arith.select %461, %463, %459 : vector<4x8xi1>, vector<4x8xi32>
    %c7_i32 = arith.constant 7 : i32
    %465 = vector.broadcast %c7_i32 : i32 to vector<4x8xi32>
    %466 = arith.cmpi sgt, %464, %465 : vector<4x8xi32>
    %c14_i32 = arith.constant 14 : i32
    %467 = vector.broadcast %c14_i32 : i32 to vector<4x8xi32>
    %468 = arith.subi %467, %464 : vector<4x8xi32>
    %469 = arith.select %466, %468, %464 : vector<4x8xi1>, vector<4x8xi32>
    %470 = arith.cmpi eq, %453, %469 : vector<4x8xi32>
    %cst_208 = arith.constant 1.000000e+00 : f32
    %cst_209 = arith.constant 0.000000e+00 : f32
    %471 = vector.broadcast %cst_208 : f32 to vector<4x8xf32>
    %472 = vector.broadcast %cst_209 : f32 to vector<4x8xf32>
    %473 = arith.select %470, %471, %472 : vector<4x8xi1>, vector<4x8xf32>
    %474 = arith.truncf %473 : vector<4x8xf32> to vector<4x8xbf16>
    %cst_210 = arith.constant dense<0.000000e+00> : vector<4x256xf32>
    %475 = tpu.matmul %474, %451, %cst_210 {dimension_numbers = #tpu.dot_dimension_numbers<[1], [0], [0], [1], [0, 0, 1, 1], [], []>} : vector<4x8xbf16>, vector<8x256xbf16>, vector<4x256xf32> -> vector<4x256xf32>
    %476 = arith.truncf %475 : vector<4x256xf32> to vector<4x256xbf16>
    %c0_211 = arith.constant 0 : index
    %c0_212 = arith.constant 0 : index
    %c0_213 = arith.constant 0 : index
    %477 = vector.load %arg5[%c0_211, %c0_212, %c0_213] : memref<4x256x128xbf16, #tpu.memory_space<vmem>>, vector<1x256x128xbf16>
    %478 = vector.shape_cast %477 : vector<1x256x128xbf16> to vector<256x128xbf16>
    %cst_214 = arith.constant dense<0.000000e+00> : vector<4x128xf32>
    %479 = tpu.matmul %476, %478, %cst_214 {dimension_numbers = #tpu.dot_dimension_numbers<[1], [0], [0], [1], [0, 0, 1, 1], [], []>} : vector<4x256xbf16>, vector<256x128xbf16>, vector<4x128xf32> -> vector<4x128xf32>
    %480 = tpu.iota {dimensions = array<i32: 0>} : vector<4x8xi32>
    %481 = tpu.iota {dimensions = array<i32: 1>} : vector<4x8xi32>
    %c2_i32_215 = arith.constant 2 : i32
    %482 = vector.broadcast %c2_i32_215 : i32 to vector<4x8xi32>
    %483 = arith.muli %482, %480 : vector<4x8xi32>
    %c1_i32_216 = arith.constant 1 : i32
    %484 = vector.broadcast %c1_i32_216 : i32 to vector<4x8xi32>
    %485 = arith.addi %483, %484 : vector<4x8xi32>
    %c1_i32_217 = arith.constant 1 : i32
    %486 = vector.broadcast %c1_i32_217 : i32 to vector<4x8xi32>
    %487 = arith.subi %485, %486 : vector<4x8xi32>
    %c0_i32_218 = arith.constant 0 : i32
    %488 = vector.broadcast %c0_i32_218 : i32 to vector<4x8xi32>
    %489 = arith.cmpi slt, %487, %488 : vector<4x8xi32>
    %c0_i32_219 = arith.constant 0 : i32
    %490 = vector.broadcast %c0_i32_219 : i32 to vector<4x8xi32>
    %491 = arith.subi %490, %487 : vector<4x8xi32>
    %492 = arith.select %489, %491, %487 : vector<4x8xi1>, vector<4x8xi32>
    %c7_i32_220 = arith.constant 7 : i32
    %493 = vector.broadcast %c7_i32_220 : i32 to vector<4x8xi32>
    %494 = arith.cmpi sgt, %492, %493 : vector<4x8xi32>
    %c14_i32_221 = arith.constant 14 : i32
    %495 = vector.broadcast %c14_i32_221 : i32 to vector<4x8xi32>
    %496 = arith.subi %495, %492 : vector<4x8xi32>
    %497 = arith.select %494, %496, %492 : vector<4x8xi1>, vector<4x8xi32>
    %498 = arith.cmpi eq, %481, %497 : vector<4x8xi32>
    %cst_222 = arith.constant 1.000000e+00 : f32
    %cst_223 = arith.constant 0.000000e+00 : f32
    %499 = vector.broadcast %cst_222 : f32 to vector<4x8xf32>
    %500 = vector.broadcast %cst_223 : f32 to vector<4x8xf32>
    %501 = arith.select %498, %499, %500 : vector<4x8xi1>, vector<4x8xf32>
    %502 = arith.truncf %501 : vector<4x8xf32> to vector<4x8xbf16>
    %cst_224 = arith.constant dense<0.000000e+00> : vector<4x256xf32>
    %503 = tpu.matmul %502, %451, %cst_224 {dimension_numbers = #tpu.dot_dimension_numbers<[1], [0], [0], [1], [0, 0, 1, 1], [], []>} : vector<4x8xbf16>, vector<8x256xbf16>, vector<4x256xf32> -> vector<4x256xf32>
    %504 = arith.truncf %503 : vector<4x256xf32> to vector<4x256xbf16>
    %c1_225 = arith.constant 1 : index
    %c0_226 = arith.constant 0 : index
    %c0_227 = arith.constant 0 : index
    %505 = vector.load %arg5[%c1_225, %c0_226, %c0_227] : memref<4x256x128xbf16, #tpu.memory_space<vmem>>, vector<1x256x128xbf16>
    %506 = vector.shape_cast %505 : vector<1x256x128xbf16> to vector<256x128xbf16>
    %cst_228 = arith.constant dense<0.000000e+00> : vector<4x128xf32>
    %507 = tpu.matmul %504, %506, %cst_228 {dimension_numbers = #tpu.dot_dimension_numbers<[1], [0], [0], [1], [0, 0, 1, 1], [], []>} : vector<4x256xbf16>, vector<256x128xbf16>, vector<4x128xf32> -> vector<4x128xf32>
    %508 = arith.addf %479, %507 : vector<4x128xf32>
    %509 = tpu.iota {dimensions = array<i32: 0>} : vector<4x8xi32>
    %510 = tpu.iota {dimensions = array<i32: 1>} : vector<4x8xi32>
    %c2_i32_229 = arith.constant 2 : i32
    %511 = vector.broadcast %c2_i32_229 : i32 to vector<4x8xi32>
    %512 = arith.muli %511, %509 : vector<4x8xi32>
    %c2_i32_230 = arith.constant 2 : i32
    %513 = vector.broadcast %c2_i32_230 : i32 to vector<4x8xi32>
    %514 = arith.addi %512, %513 : vector<4x8xi32>
    %c1_i32_231 = arith.constant 1 : i32
    %515 = vector.broadcast %c1_i32_231 : i32 to vector<4x8xi32>
    %516 = arith.subi %514, %515 : vector<4x8xi32>
    %c0_i32_232 = arith.constant 0 : i32
    %517 = vector.broadcast %c0_i32_232 : i32 to vector<4x8xi32>
    %518 = arith.cmpi slt, %516, %517 : vector<4x8xi32>
    %c0_i32_233 = arith.constant 0 : i32
    %519 = vector.broadcast %c0_i32_233 : i32 to vector<4x8xi32>
    %520 = arith.subi %519, %516 : vector<4x8xi32>
    %521 = arith.select %518, %520, %516 : vector<4x8xi1>, vector<4x8xi32>
    %c7_i32_234 = arith.constant 7 : i32
    %522 = vector.broadcast %c7_i32_234 : i32 to vector<4x8xi32>
    %523 = arith.cmpi sgt, %521, %522 : vector<4x8xi32>
    %c14_i32_235 = arith.constant 14 : i32
    %524 = vector.broadcast %c14_i32_235 : i32 to vector<4x8xi32>
    %525 = arith.subi %524, %521 : vector<4x8xi32>
    %526 = arith.select %523, %525, %521 : vector<4x8xi1>, vector<4x8xi32>
    %527 = arith.cmpi eq, %510, %526 : vector<4x8xi32>
    %cst_236 = arith.constant 1.000000e+00 : f32
    %cst_237 = arith.constant 0.000000e+00 : f32
    %528 = vector.broadcast %cst_236 : f32 to vector<4x8xf32>
    %529 = vector.broadcast %cst_237 : f32 to vector<4x8xf32>
    %530 = arith.select %527, %528, %529 : vector<4x8xi1>, vector<4x8xf32>
    %531 = arith.truncf %530 : vector<4x8xf32> to vector<4x8xbf16>
    %cst_238 = arith.constant dense<0.000000e+00> : vector<4x256xf32>
    %532 = tpu.matmul %531, %451, %cst_238 {dimension_numbers = #tpu.dot_dimension_numbers<[1], [0], [0], [1], [0, 0, 1, 1], [], []>} : vector<4x8xbf16>, vector<8x256xbf16>, vector<4x256xf32> -> vector<4x256xf32>
    %533 = arith.truncf %532 : vector<4x256xf32> to vector<4x256xbf16>
    %c2_239 = arith.constant 2 : index
    %c0_240 = arith.constant 0 : index
    %c0_241 = arith.constant 0 : index
    %534 = vector.load %arg5[%c2_239, %c0_240, %c0_241] : memref<4x256x128xbf16, #tpu.memory_space<vmem>>, vector<1x256x128xbf16>
    %535 = vector.shape_cast %534 : vector<1x256x128xbf16> to vector<256x128xbf16>
    %cst_242 = arith.constant dense<0.000000e+00> : vector<4x128xf32>
    %536 = tpu.matmul %533, %535, %cst_242 {dimension_numbers = #tpu.dot_dimension_numbers<[1], [0], [0], [1], [0, 0, 1, 1], [], []>} : vector<4x256xbf16>, vector<256x128xbf16>, vector<4x128xf32> -> vector<4x128xf32>
    %537 = arith.addf %508, %536 : vector<4x128xf32>
    %538 = tpu.iota {dimensions = array<i32: 0>} : vector<4x8xi32>
    %539 = tpu.iota {dimensions = array<i32: 1>} : vector<4x8xi32>
    %c2_i32_243 = arith.constant 2 : i32
    %540 = vector.broadcast %c2_i32_243 : i32 to vector<4x8xi32>
    %541 = arith.muli %540, %538 : vector<4x8xi32>
    %c3_i32_244 = arith.constant 3 : i32
    %542 = vector.broadcast %c3_i32_244 : i32 to vector<4x8xi32>
    %543 = arith.addi %541, %542 : vector<4x8xi32>
    %c1_i32_245 = arith.constant 1 : i32
    %544 = vector.broadcast %c1_i32_245 : i32 to vector<4x8xi32>
    %545 = arith.subi %543, %544 : vector<4x8xi32>
    %c0_i32_246 = arith.constant 0 : i32
    %546 = vector.broadcast %c0_i32_246 : i32 to vector<4x8xi32>
    %547 = arith.cmpi slt, %545, %546 : vector<4x8xi32>
    %c0_i32_247 = arith.constant 0 : i32
    %548 = vector.broadcast %c0_i32_247 : i32 to vector<4x8xi32>
    %549 = arith.subi %548, %545 : vector<4x8xi32>
    %550 = arith.select %547, %549, %545 : vector<4x8xi1>, vector<4x8xi32>
    %c7_i32_248 = arith.constant 7 : i32
    %551 = vector.broadcast %c7_i32_248 : i32 to vector<4x8xi32>
    %552 = arith.cmpi sgt, %550, %551 : vector<4x8xi32>
    %c14_i32_249 = arith.constant 14 : i32
    %553 = vector.broadcast %c14_i32_249 : i32 to vector<4x8xi32>
    %554 = arith.subi %553, %550 : vector<4x8xi32>
    %555 = arith.select %552, %554, %550 : vector<4x8xi1>, vector<4x8xi32>
    %556 = arith.cmpi eq, %539, %555 : vector<4x8xi32>
    %cst_250 = arith.constant 1.000000e+00 : f32
    %cst_251 = arith.constant 0.000000e+00 : f32
    %557 = vector.broadcast %cst_250 : f32 to vector<4x8xf32>
    %558 = vector.broadcast %cst_251 : f32 to vector<4x8xf32>
    %559 = arith.select %556, %557, %558 : vector<4x8xi1>, vector<4x8xf32>
    %560 = arith.truncf %559 : vector<4x8xf32> to vector<4x8xbf16>
    %cst_252 = arith.constant dense<0.000000e+00> : vector<4x256xf32>
    %561 = tpu.matmul %560, %451, %cst_252 {dimension_numbers = #tpu.dot_dimension_numbers<[1], [0], [0], [1], [0, 0, 1, 1], [], []>} : vector<4x8xbf16>, vector<8x256xbf16>, vector<4x256xf32> -> vector<4x256xf32>
    %562 = arith.truncf %561 : vector<4x256xf32> to vector<4x256xbf16>
    %c3_253 = arith.constant 3 : index
    %c0_254 = arith.constant 0 : index
    %c0_255 = arith.constant 0 : index
    %563 = vector.load %arg5[%c3_253, %c0_254, %c0_255] : memref<4x256x128xbf16, #tpu.memory_space<vmem>>, vector<1x256x128xbf16>
    %564 = vector.shape_cast %563 : vector<1x256x128xbf16> to vector<256x128xbf16>
    %cst_256 = arith.constant dense<0.000000e+00> : vector<4x128xf32>
    %565 = tpu.matmul %562, %564, %cst_256 {dimension_numbers = #tpu.dot_dimension_numbers<[1], [0], [0], [1], [0, 0, 1, 1], [], []>} : vector<4x256xbf16>, vector<256x128xbf16>, vector<4x128xf32> -> vector<4x128xf32>
    %566 = arith.addf %537, %565 : vector<4x128xf32>
    %c0_257 = arith.constant 0 : index
    %c0_258 = arith.constant 0 : index
    %567 = vector.load %arg10[%c0_257, %c0_258] : memref<1x128xf32, #tpu.memory_space<vmem>>, vector<1x128xf32>
    %568 = vector.broadcast %567 : vector<1x128xf32> to vector<4x128xf32>
    %569 = arith.addf %566, %568 : vector<4x128xf32>
    %cst_259 = arith.constant 0.000000e+00 : f32
    %570 = vector.broadcast %cst_259 : f32 to vector<4x128xf32>
    %571 = arith.maximumf %569, %570 : vector<4x128xf32>
    %572 = arith.truncf %571 : vector<4x128xf32> to vector<4x128xbf16>
    %573 = tpu.iota {dimensions = array<i32: 0>} : vector<2x4xi32>
    %574 = tpu.iota {dimensions = array<i32: 1>} : vector<2x4xi32>
    %c2_i32_260 = arith.constant 2 : i32
    %575 = vector.broadcast %c2_i32_260 : i32 to vector<2x4xi32>
    %576 = arith.muli %575, %573 : vector<2x4xi32>
    %c0_i32_261 = arith.constant 0 : i32
    %577 = vector.broadcast %c0_i32_261 : i32 to vector<2x4xi32>
    %578 = arith.addi %576, %577 : vector<2x4xi32>
    %c1_i32_262 = arith.constant 1 : i32
    %579 = vector.broadcast %c1_i32_262 : i32 to vector<2x4xi32>
    %580 = arith.subi %578, %579 : vector<2x4xi32>
    %c0_i32_263 = arith.constant 0 : i32
    %581 = vector.broadcast %c0_i32_263 : i32 to vector<2x4xi32>
    %582 = arith.cmpi slt, %580, %581 : vector<2x4xi32>
    %c0_i32_264 = arith.constant 0 : i32
    %583 = vector.broadcast %c0_i32_264 : i32 to vector<2x4xi32>
    %584 = arith.subi %583, %580 : vector<2x4xi32>
    %585 = arith.select %582, %584, %580 : vector<2x4xi1>, vector<2x4xi32>
    %c3_i32_265 = arith.constant 3 : i32
    %586 = vector.broadcast %c3_i32_265 : i32 to vector<2x4xi32>
    %587 = arith.cmpi sgt, %585, %586 : vector<2x4xi32>
    %c6_i32_266 = arith.constant 6 : i32
    %588 = vector.broadcast %c6_i32_266 : i32 to vector<2x4xi32>
    %589 = arith.subi %588, %585 : vector<2x4xi32>
    %590 = arith.select %587, %589, %585 : vector<2x4xi1>, vector<2x4xi32>
    %591 = arith.cmpi eq, %574, %590 : vector<2x4xi32>
    %cst_267 = arith.constant 1.000000e+00 : f32
    %cst_268 = arith.constant 0.000000e+00 : f32
    %592 = vector.broadcast %cst_267 : f32 to vector<2x4xf32>
    %593 = vector.broadcast %cst_268 : f32 to vector<2x4xf32>
    %594 = arith.select %591, %592, %593 : vector<2x4xi1>, vector<2x4xf32>
    %595 = arith.truncf %594 : vector<2x4xf32> to vector<2x4xbf16>
    %cst_269 = arith.constant dense<0.000000e+00> : vector<2x128xf32>
    %596 = tpu.matmul %595, %572, %cst_269 {dimension_numbers = #tpu.dot_dimension_numbers<[1], [0], [0], [1], [0, 0, 1, 1], [], []>} : vector<2x4xbf16>, vector<4x128xbf16>, vector<2x128xf32> -> vector<2x128xf32>
    %597 = arith.truncf %596 : vector<2x128xf32> to vector<2x128xbf16>
    %c0_270 = arith.constant 0 : index
    %c0_271 = arith.constant 0 : index
    %c0_272 = arith.constant 0 : index
    %598 = vector.load %arg6[%c0_270, %c0_271, %c0_272] : memref<4x128x64xbf16, #tpu.memory_space<vmem>>, vector<1x128x64xbf16>
    %599 = vector.shape_cast %598 : vector<1x128x64xbf16> to vector<128x64xbf16>
    %cst_273 = arith.constant dense<0.000000e+00> : vector<2x64xf32>
    %600 = tpu.matmul %597, %599, %cst_273 {dimension_numbers = #tpu.dot_dimension_numbers<[1], [0], [0], [1], [0, 0, 1, 1], [], []>} : vector<2x128xbf16>, vector<128x64xbf16>, vector<2x64xf32> -> vector<2x64xf32>
    %601 = tpu.iota {dimensions = array<i32: 0>} : vector<2x4xi32>
    %602 = tpu.iota {dimensions = array<i32: 1>} : vector<2x4xi32>
    %c2_i32_274 = arith.constant 2 : i32
    %603 = vector.broadcast %c2_i32_274 : i32 to vector<2x4xi32>
    %604 = arith.muli %603, %601 : vector<2x4xi32>
    %c1_i32_275 = arith.constant 1 : i32
    %605 = vector.broadcast %c1_i32_275 : i32 to vector<2x4xi32>
    %606 = arith.addi %604, %605 : vector<2x4xi32>
    %c1_i32_276 = arith.constant 1 : i32
    %607 = vector.broadcast %c1_i32_276 : i32 to vector<2x4xi32>
    %608 = arith.subi %606, %607 : vector<2x4xi32>
    %c0_i32_277 = arith.constant 0 : i32
    %609 = vector.broadcast %c0_i32_277 : i32 to vector<2x4xi32>
    %610 = arith.cmpi slt, %608, %609 : vector<2x4xi32>
    %c0_i32_278 = arith.constant 0 : i32
    %611 = vector.broadcast %c0_i32_278 : i32 to vector<2x4xi32>
    %612 = arith.subi %611, %608 : vector<2x4xi32>
    %613 = arith.select %610, %612, %608 : vector<2x4xi1>, vector<2x4xi32>
    %c3_i32_279 = arith.constant 3 : i32
    %614 = vector.broadcast %c3_i32_279 : i32 to vector<2x4xi32>
    %615 = arith.cmpi sgt, %613, %614 : vector<2x4xi32>
    %c6_i32_280 = arith.constant 6 : i32
    %616 = vector.broadcast %c6_i32_280 : i32 to vector<2x4xi32>
    %617 = arith.subi %616, %613 : vector<2x4xi32>
    %618 = arith.select %615, %617, %613 : vector<2x4xi1>, vector<2x4xi32>
    %619 = arith.cmpi eq, %602, %618 : vector<2x4xi32>
    %cst_281 = arith.constant 1.000000e+00 : f32
    %cst_282 = arith.constant 0.000000e+00 : f32
    %620 = vector.broadcast %cst_281 : f32 to vector<2x4xf32>
    %621 = vector.broadcast %cst_282 : f32 to vector<2x4xf32>
    %622 = arith.select %619, %620, %621 : vector<2x4xi1>, vector<2x4xf32>
    %623 = arith.truncf %622 : vector<2x4xf32> to vector<2x4xbf16>
    %cst_283 = arith.constant dense<0.000000e+00> : vector<2x128xf32>
    %624 = tpu.matmul %623, %572, %cst_283 {dimension_numbers = #tpu.dot_dimension_numbers<[1], [0], [0], [1], [0, 0, 1, 1], [], []>} : vector<2x4xbf16>, vector<4x128xbf16>, vector<2x128xf32> -> vector<2x128xf32>
    %625 = arith.truncf %624 : vector<2x128xf32> to vector<2x128xbf16>
    %c1_284 = arith.constant 1 : index
    %c0_285 = arith.constant 0 : index
    %c0_286 = arith.constant 0 : index
    %626 = vector.load %arg6[%c1_284, %c0_285, %c0_286] : memref<4x128x64xbf16, #tpu.memory_space<vmem>>, vector<1x128x64xbf16>
    %627 = vector.shape_cast %626 : vector<1x128x64xbf16> to vector<128x64xbf16>
    %cst_287 = arith.constant dense<0.000000e+00> : vector<2x64xf32>
    %628 = tpu.matmul %625, %627, %cst_287 {dimension_numbers = #tpu.dot_dimension_numbers<[1], [0], [0], [1], [0, 0, 1, 1], [], []>} : vector<2x128xbf16>, vector<128x64xbf16>, vector<2x64xf32> -> vector<2x64xf32>
    %629 = arith.addf %600, %628 : vector<2x64xf32>
    %630 = tpu.iota {dimensions = array<i32: 0>} : vector<2x4xi32>
    %631 = tpu.iota {dimensions = array<i32: 1>} : vector<2x4xi32>
    %c2_i32_288 = arith.constant 2 : i32
    %632 = vector.broadcast %c2_i32_288 : i32 to vector<2x4xi32>
    %633 = arith.muli %632, %630 : vector<2x4xi32>
    %c2_i32_289 = arith.constant 2 : i32
    %634 = vector.broadcast %c2_i32_289 : i32 to vector<2x4xi32>
    %635 = arith.addi %633, %634 : vector<2x4xi32>
    %c1_i32_290 = arith.constant 1 : i32
    %636 = vector.broadcast %c1_i32_290 : i32 to vector<2x4xi32>
    %637 = arith.subi %635, %636 : vector<2x4xi32>
    %c0_i32_291 = arith.constant 0 : i32
    %638 = vector.broadcast %c0_i32_291 : i32 to vector<2x4xi32>
    %639 = arith.cmpi slt, %637, %638 : vector<2x4xi32>
    %c0_i32_292 = arith.constant 0 : i32
    %640 = vector.broadcast %c0_i32_292 : i32 to vector<2x4xi32>
    %641 = arith.subi %640, %637 : vector<2x4xi32>
    %642 = arith.select %639, %641, %637 : vector<2x4xi1>, vector<2x4xi32>
    %c3_i32_293 = arith.constant 3 : i32
    %643 = vector.broadcast %c3_i32_293 : i32 to vector<2x4xi32>
    %644 = arith.cmpi sgt, %642, %643 : vector<2x4xi32>
    %c6_i32_294 = arith.constant 6 : i32
    %645 = vector.broadcast %c6_i32_294 : i32 to vector<2x4xi32>
    %646 = arith.subi %645, %642 : vector<2x4xi32>
    %647 = arith.select %644, %646, %642 : vector<2x4xi1>, vector<2x4xi32>
    %648 = arith.cmpi eq, %631, %647 : vector<2x4xi32>
    %cst_295 = arith.constant 1.000000e+00 : f32
    %cst_296 = arith.constant 0.000000e+00 : f32
    %649 = vector.broadcast %cst_295 : f32 to vector<2x4xf32>
    %650 = vector.broadcast %cst_296 : f32 to vector<2x4xf32>
    %651 = arith.select %648, %649, %650 : vector<2x4xi1>, vector<2x4xf32>
    %652 = arith.truncf %651 : vector<2x4xf32> to vector<2x4xbf16>
    %cst_297 = arith.constant dense<0.000000e+00> : vector<2x128xf32>
    %653 = tpu.matmul %652, %572, %cst_297 {dimension_numbers = #tpu.dot_dimension_numbers<[1], [0], [0], [1], [0, 0, 1, 1], [], []>} : vector<2x4xbf16>, vector<4x128xbf16>, vector<2x128xf32> -> vector<2x128xf32>
    %654 = arith.truncf %653 : vector<2x128xf32> to vector<2x128xbf16>
    %c2_298 = arith.constant 2 : index
    %c0_299 = arith.constant 0 : index
    %c0_300 = arith.constant 0 : index
    %655 = vector.load %arg6[%c2_298, %c0_299, %c0_300] : memref<4x128x64xbf16, #tpu.memory_space<vmem>>, vector<1x128x64xbf16>
    %656 = vector.shape_cast %655 : vector<1x128x64xbf16> to vector<128x64xbf16>
    %cst_301 = arith.constant dense<0.000000e+00> : vector<2x64xf32>
    %657 = tpu.matmul %654, %656, %cst_301 {dimension_numbers = #tpu.dot_dimension_numbers<[1], [0], [0], [1], [0, 0, 1, 1], [], []>} : vector<2x128xbf16>, vector<128x64xbf16>, vector<2x64xf32> -> vector<2x64xf32>
    %658 = arith.addf %629, %657 : vector<2x64xf32>
    %659 = tpu.iota {dimensions = array<i32: 0>} : vector<2x4xi32>
    %660 = tpu.iota {dimensions = array<i32: 1>} : vector<2x4xi32>
    %c2_i32_302 = arith.constant 2 : i32
    %661 = vector.broadcast %c2_i32_302 : i32 to vector<2x4xi32>
    %662 = arith.muli %661, %659 : vector<2x4xi32>
    %c3_i32_303 = arith.constant 3 : i32
    %663 = vector.broadcast %c3_i32_303 : i32 to vector<2x4xi32>
    %664 = arith.addi %662, %663 : vector<2x4xi32>
    %c1_i32_304 = arith.constant 1 : i32
    %665 = vector.broadcast %c1_i32_304 : i32 to vector<2x4xi32>
    %666 = arith.subi %664, %665 : vector<2x4xi32>
    %c0_i32_305 = arith.constant 0 : i32
    %667 = vector.broadcast %c0_i32_305 : i32 to vector<2x4xi32>
    %668 = arith.cmpi slt, %666, %667 : vector<2x4xi32>
    %c0_i32_306 = arith.constant 0 : i32
    %669 = vector.broadcast %c0_i32_306 : i32 to vector<2x4xi32>
    %670 = arith.subi %669, %666 : vector<2x4xi32>
    %671 = arith.select %668, %670, %666 : vector<2x4xi1>, vector<2x4xi32>
    %c3_i32_307 = arith.constant 3 : i32
    %672 = vector.broadcast %c3_i32_307 : i32 to vector<2x4xi32>
    %673 = arith.cmpi sgt, %671, %672 : vector<2x4xi32>
    %c6_i32_308 = arith.constant 6 : i32
    %674 = vector.broadcast %c6_i32_308 : i32 to vector<2x4xi32>
    %675 = arith.subi %674, %671 : vector<2x4xi32>
    %676 = arith.select %673, %675, %671 : vector<2x4xi1>, vector<2x4xi32>
    %677 = arith.cmpi eq, %660, %676 : vector<2x4xi32>
    %cst_309 = arith.constant 1.000000e+00 : f32
    %cst_310 = arith.constant 0.000000e+00 : f32
    %678 = vector.broadcast %cst_309 : f32 to vector<2x4xf32>
    %679 = vector.broadcast %cst_310 : f32 to vector<2x4xf32>
    %680 = arith.select %677, %678, %679 : vector<2x4xi1>, vector<2x4xf32>
    %681 = arith.truncf %680 : vector<2x4xf32> to vector<2x4xbf16>
    %cst_311 = arith.constant dense<0.000000e+00> : vector<2x128xf32>
    %682 = tpu.matmul %681, %572, %cst_311 {dimension_numbers = #tpu.dot_dimension_numbers<[1], [0], [0], [1], [0, 0, 1, 1], [], []>} : vector<2x4xbf16>, vector<4x128xbf16>, vector<2x128xf32> -> vector<2x128xf32>
    %683 = arith.truncf %682 : vector<2x128xf32> to vector<2x128xbf16>
    %c3_312 = arith.constant 3 : index
    %c0_313 = arith.constant 0 : index
    %c0_314 = arith.constant 0 : index
    %684 = vector.load %arg6[%c3_312, %c0_313, %c0_314] : memref<4x128x64xbf16, #tpu.memory_space<vmem>>, vector<1x128x64xbf16>
    %685 = vector.shape_cast %684 : vector<1x128x64xbf16> to vector<128x64xbf16>
    %cst_315 = arith.constant dense<0.000000e+00> : vector<2x64xf32>
    %686 = tpu.matmul %683, %685, %cst_315 {dimension_numbers = #tpu.dot_dimension_numbers<[1], [0], [0], [1], [0, 0, 1, 1], [], []>} : vector<2x128xbf16>, vector<128x64xbf16>, vector<2x64xf32> -> vector<2x64xf32>
    %687 = arith.addf %658, %686 : vector<2x64xf32>
    %c0_316 = arith.constant 0 : index
    %c0_317 = arith.constant 0 : index
    %688 = vector.load %arg11[%c0_316, %c0_317] : memref<1x64xf32, #tpu.memory_space<vmem>>, vector<1x64xf32>
    %689 = vector.broadcast %688 : vector<1x64xf32> to vector<2x64xf32>
    %690 = arith.addf %687, %689 : vector<2x64xf32>
    %cst_318 = arith.constant 0.000000e+00 : f32
    %691 = vector.broadcast %cst_318 : f32 to vector<2x64xf32>
    %692 = arith.maximumf %690, %691 : vector<2x64xf32>
    %cst_319 = arith.constant dense<0.000000e+00> : vector<64xf32>
    %693 = vector.multi_reduction <add>, %692, %cst_319 [0] : vector<2x64xf32> to vector<64xf32>
    %694 = vector.shape_cast %693 : vector<64xf32> to vector<1x64xf32>
    %c0_320 = arith.constant 0 : index
    %c0_321 = arith.constant 0 : index
    %695 = vector.load %arg12[%c0_320, %c0_321] : memref<64x128xf32, #tpu.memory_space<vmem>>, vector<64x128xf32>
    %cst_322 = arith.constant dense<0.000000e+00> : vector<1x128xf32>
    %696 = tpu.matmul %694, %695, %cst_322 {dimension_numbers = #tpu.dot_dimension_numbers<[1], [0], [0], [1], [0, 0, 1, 1], [], []>} : vector<1x64xf32>, vector<64x128xf32>, vector<1x128xf32> -> vector<1x128xf32>
    %c0_323 = arith.constant 0 : index
    %c0_324 = arith.constant 0 : index
    %697 = vector.load %arg13[%c0_323, %c0_324] : memref<1x128xf32, #tpu.memory_space<vmem>>, vector<1x128xf32>
    %698 = arith.addf %696, %697 : vector<1x128xf32>
    %c0_325 = arith.constant 0 : index
    %c0_326 = arith.constant 0 : index
    %c0_327 = arith.constant 0 : index
    %699 = vector.load %arg14[%c0_325, %c0_326, %c0_327] : memref<1x1x128xf32, #tpu.memory_space<vmem>>, vector<1x1x128xf32>
    %700 = vector.shape_cast %699 : vector<1x1x128xf32> to vector<1x128xf32>
    %701 = vector.shape_cast %698 : vector<1x128xf32> to vector<1x1x128xf32>
    tpu.vector_store %arg14[%c0_325, %c0_326, %c0_327], %701 {strides = array<i32>} : memref<1x1x128xf32, #tpu.memory_space<vmem>>, vector<1x1x128xf32>,
    return
  }
  func.func @transform_0(%arg0: i32) -> (i32, i32, i32) {
    %c0_i32 = arith.constant 0 : i32
    %c0_i32_0 = arith.constant 0 : i32
    %c0_i32_1 = arith.constant 0 : i32
    return %arg0, %c0_i32, %c0_i32_0 : i32, i32, i32
  }
  func.func @transform_1(%arg0: i32) -> (i32, i32, i32) {
    %c0_i32 = arith.constant 0 : i32
    %c0_i32_0 = arith.constant 0 : i32
    %c0_i32_1 = arith.constant 0 : i32
    %c0_i32_2 = arith.constant 0 : i32
    return %c0_i32, %c0_i32_0, %c0_i32_1 : i32, i32, i32
  }
  func.func @transform_2(%arg0: i32) -> (i32, i32, i32) {
    %c0_i32 = arith.constant 0 : i32
    %c0_i32_0 = arith.constant 0 : i32
    %c0_i32_1 = arith.constant 0 : i32
    %c0_i32_2 = arith.constant 0 : i32
    return %c0_i32, %c0_i32_0, %c0_i32_1 : i32, i32, i32
  }
  func.func @transform_3(%arg0: i32) -> (i32, i32, i32) {
    %c0_i32 = arith.constant 0 : i32
    %c0_i32_0 = arith.constant 0 : i32
    %c0_i32_1 = arith.constant 0 : i32
    %c0_i32_2 = arith.constant 0 : i32
    return %c0_i32, %c0_i32_0, %c0_i32_1 : i32, i32, i32
  }
  func.func @transform_4(%arg0: i32) -> (i32, i32, i32) {
    %c0_i32 = arith.constant 0 : i32
    %c0_i32_0 = arith.constant 0 : i32
    %c0_i32_1 = arith.constant 0 : i32
    %c0_i32_2 = arith.constant 0 : i32
    return %c0_i32, %c0_i32_0, %c0_i32_1 : i32, i32, i32
  }
  func.func @transform_5(%arg0: i32) -> (i32, i32, i32) {
    %c0_i32 = arith.constant 0 : i32
    %c0_i32_0 = arith.constant 0 : i32
    %c0_i32_1 = arith.constant 0 : i32
    %c0_i32_2 = arith.constant 0 : i32
    return %c0_i32, %c0_i32_0, %c0_i32_1 : i32, i32, i32
  }
  func.func @transform_6(%arg0: i32) -> (i32, i32) {
    %c0_i32 = arith.constant 0 : i32
    %c0_i32_0 = arith.constant 0 : i32
    %c0_i32_1 = arith.constant 0 : i32
    return %c0_i32, %c0_i32_0 : i32, i32
  }
  func.func @transform_7(%arg0: i32) -> (i32, i32) {
    %c0_i32 = arith.constant 0 : i32
    %c0_i32_0 = arith.constant 0 : i32
    %c0_i32_1 = arith.constant 0 : i32
    return %c0_i32, %c0_i32_0 : i32, i32
  }
  func.func @transform_8(%arg0: i32) -> (i32, i32) {
    %c0_i32 = arith.constant 0 : i32
    %c0_i32_0 = arith.constant 0 : i32
    %c0_i32_1 = arith.constant 0 : i32
    return %c0_i32, %c0_i32_0 : i32, i32
  }
  func.func @transform_9(%arg0: i32) -> (i32, i32) {
    %c0_i32 = arith.constant 0 : i32
    %c0_i32_0 = arith.constant 0 : i32
    %c0_i32_1 = arith.constant 0 : i32
    return %c0_i32, %c0_i32_0 : i32, i32
  }
  func.func @transform_10(%arg0: i32) -> (i32, i32) {
    %c0_i32 = arith.constant 0 : i32
    %c0_i32_0 = arith.constant 0 : i32
    %c0_i32_1 = arith.constant 0 : i32
    return %c0_i32, %c0_i32_0 : i32, i32
  }
  func.func @transform_11(%arg0: i32) -> (i32, i32) {
    %c0_i32 = arith.constant 0 : i32
    %c0_i32_0 = arith.constant 0 : i32
    %c0_i32_1 = arith.constant 0 : i32
    return %c0_i32, %c0_i32_0 : i32, i32
  }
  func.func @transform_12(%arg0: i32) -> (i32, i32) {
    %c0_i32 = arith.constant 0 : i32
    %c0_i32_0 = arith.constant 0 : i32
    %c0_i32_1 = arith.constant 0 : i32
    return %c0_i32, %c0_i32_0 : i32, i32
  }
  func.func @transform_13(%arg0: i32) -> (i32, i32, i32) {
    %c0_i32 = arith.constant 0 : i32
    %c0_i32_0 = arith.constant 0 : i32
    %c0_i32_1 = arith.constant 0 : i32
    return %arg0, %c0_i32, %c0_i32_0 : i32, i32, i32
  }
}

</mosaic_0001>

<llo_original>
// kernel: style_encoder_forward.1
$region0: #{style_encoder_forward.1}
  #allocation0 [shape = 'u32[]', space=smem, size = 0x4, offset = 0x4, fixed_abs, tag = 'smem constant byte address 0x4 - core index']
  #allocation1 [shape = 'u32[72,128]{1,0:T(1,128)}', space=vmem, size = 0x9000, scoped, tag = 'internal scratch']
  %s0 = inlined_call_operand.vmem [shape: bf16[2,32,128], index: 0, kind: input, shape index: {}]
  %s1 = inlined_call_operand.hbm [shape: bf16[7,128,256], index: 1, kind: input, shape index: {}]
  %s2 = inlined_call_operand.hbm [shape: bf16[4,256,256], index: 2, kind: input, shape index: {}]
  %s3 = inlined_call_operand.hbm [shape: bf16[4,256,256], index: 3, kind: input, shape index: {}]
  %s4 = inlined_call_operand.vmem [shape: bf16[4,256,128], index: 4, kind: input, shape index: {}]
  %s5 = inlined_call_operand.vmem [shape: bf16[4,128,64], index: 5, kind: input, shape index: {}]
  %s6 = inlined_call_operand.vmem [shape: f32[1,256], index: 6, kind: input, shape index: {}]
  %s7 = inlined_call_operand.vmem [shape: f32[1,256], index: 7, kind: input, shape index: {}]
  %s8 = inlined_call_operand.vmem [shape: f32[1,256], index: 8, kind: input, shape index: {}]
  %s9 = inlined_call_operand.vmem [shape: f32[1,128], index: 9, kind: input, shape index: {}]
  %s10 = inlined_call_operand.vmem [shape: f32[1,64], index: 10, kind: input, shape index: {}]
  %s11 = inlined_call_operand.vmem [shape: f32[64,128], index: 11, kind: input, shape index: {}]
  %s12 = inlined_call_operand.vmem [shape: f32[1,128], index: 12, kind: input, shape index: {}]
  %s13 = inlined_call_operand.vmem [shape: f32[2,1,128], index: 13, kind: output, shape index: {}]
  %s14 = sld [smem:[#allocation0]]
  $region97: #{style_encoder_forward.1} parent=0
    _
  %s16 = ssub.s32 1, %s14
  %s17 = scalar_select 0, %s16, %s14
  $region1: #{style_encoder_forward.1} parent=0
    #allocation2 [shape = 'u8[458752]{0}', space=vmem, size = 0x70000, scoped, tag = 'input window, operand 1, single buffered']
    #allocation3 [shape = 's32[2]{0}', space=sflag, size = 0x8, scoped, tag = 'scoped memory for style_encoder_forward.1']
    #allocation4 [shape = 'u8[524288]{0}', space=vmem, size = 0x80000, scoped, tag = 'input window, operand 2, single buffered']
    #allocation5 [shape = 's32[1]{0}', space=sflag, size = 0x4, scoped, tag = 'scoped memory for style_encoder_forward.1']
    #allocation6 [shape = 'u8[524288]{0}', space=vmem, size = 0x80000, scoped, tag = 'input window, operand 3, single buffered']
    %18 = vsyncpa [#allocation3], 0
    %19 = vsyncpa [#allocation5], 0
    loop: start=0, step=1, limit=4
    $region2: #{style_encoder_forward.1} parent=1 // loop_pre_header
      _
    $region3: #{style_encoder_forward.1} parent=1 // loop_header
      %s21 = sphi 0, %s25
      %p22 = scmp.ge.s32.totalorder %s21, 4
      %s31 = sphi 0, %s33
      %s34 = sphi 0, %s31
      %s35 = sphi 0, %s34
      %s51 = sphi 0, %s35
      %s55 = sphi 0, %s55
      %s57 = sphi 0, %s55
      %s58 = sphi 0, %s57
      %s72 = sphi 0, %s58
      %s76 = sphi 0, %s76
      %s78 = sphi 0, %s76
      %s79 = sphi 0, %s78
      %s93 = sphi 0, %s79
      %s97 = sphi 0, %s97
      %s99 = sphi 0, %s97
      %s100 = sphi 0, %s99
      %s114 = sphi 0, %s100
      %s118 = sphi 0, %s118
      %s120 = sphi 0, %s118
      %s121 = sphi 0, %s120
      %s135 = sphi 0, %s121
      %s139 = sphi 0, %s139
      %s141 = sphi 0, %s139
      %s142 = sphi 0, %s141
      %s156 = sphi 0, %s142
      %s160 = sphi 0, %s160
      %s162 = sphi 0, %s160
      %s163 = sphi 0, %s162
      %s177 = sphi 0, %s163
      %s181 = sphi 0, %s181
      %s183 = sphi 0, %s181
      %s184 = sphi 0, %s183
      %s198 = sphi 0, %s184
      %s202 = sphi 0, %s202
      %s204 = sphi 0, %s202
      %s205 = sphi 0, %s204
      %s219 = sphi 0, %s205
      %s223 = sphi 0, %s223
      %s225 = sphi 0, %s223
      %s226 = sphi 0, %s225
      %s240 = sphi 0, %s226
      %s244 = sphi 0, %s244
      %s246 = sphi 0, %s244
      %s247 = sphi 0, %s246
      %s261 = sphi 0, %s247
      %s265 = sphi 0, %s265
      %s267 = sphi 0, %s265
      %s268 = sphi 0, %s267
      %s282 = sphi 0, %s268
      %s286 = sphi 0, %s286
      %s288 = sphi 0, %s286
      %s289 = sphi 0, %s288
      %s303 = sphi 0, %s289
      %s309 = sphi 0, %s311
      %s312 = sphi 0, %s309
      %s313 = sphi 0, %s312
      %s329 = sphi 0, %s313
    $region4: #{style_encoder_forward.1} parent=1 // loop_header_branch
      %24 = sbr.rel (%p22) target = $region8
    $region5: #{style_encoder_forward.1} parent=1 // loop_body
      %s26 = ssub.s32 %s21, 1
      %s27 = ssub.s32 %s21, 2
      %s28 = sadd.s32 %s21, 1
      %s29 = ssub.s32 %s21, %s28
      %p30 = scmp.eq.s32.totalorder %s29, 0
      %s32 = sadd.s32 %s31, 1
      %s33 = scalar_select %p30, %s31, %s32
      %p36 = pneg %p30
      %p37 = scmp.eq.s32.totalorder %s21, 1
      %p38 = por %p36, %p37
      %p39 = scmp.ne.s32.totalorder %s31, %s34
      %p40 = scmp.eq.s32.totalorder %s21, 0
      %p41 = por %p39, %p40
      %p42 = scmp.ne.s32.totalorder %s31, %s34
      %p43 = scmp.eq.s32.totalorder %s26, 1
      %p44 = por %p42, %p43
      %p45 = scmp.ne.s32.totalorder %s34, %s35
      %p46 = scmp.eq.s32.totalorder %s26, 0
      %p47 = por %p45, %p46
      %p48 = scmp.ne.s32.totalorder %s34, %s35
      %p49 = scmp.eq.s32.totalorder %s27, 1
      %p50 = por %p48, %p49
      %p52 = scmp.ne.s32.totalorder %s35, %s51
      %p53 = scmp.eq.s32.totalorder %s27, 0
      %p54 = por %p52, %p53
      %s56 = sadd.s32 %s55, 1
      %p59 = scmp.eq.s32.totalorder %s21, 1
      %p60 = scmp.ne.s32.totalorder %s55, %s57
      %p61 = scmp.eq.s32.totalorder %s21, 0
      %p62 = por %p60, %p61
      %p63 = scmp.ne.s32.totalorder %s55, %s57
      %p64 = scmp.eq.s32.totalorder %s26, 1
      %p65 = por %p63, %p64
      %p66 = scmp.ne.s32.totalorder %s57, %s58
      %p67 = scmp.eq.s32.totalorder %s26, 0
      %p68 = por %p66, %p67
      %p69 = scmp.ne.s32.totalorder %s57, %s58
      %p70 = scmp.eq.s32.totalorder %s27, 1
      %p71 = por %p69, %p70
      %p73 = scmp.ne.s32.totalorder %s58, %s72
      %p74 = scmp.eq.s32.totalorder %s27, 0
      %p75 = por %p73, %p74
      %s77 = sadd.s32 %s76, 1
      %p80 = scmp.eq.s32.totalorder %s21, 1
      %p81 = scmp.ne.s32.totalorder %s76, %s78
      %p82 = scmp.eq.s32.totalorder %s21, 0
      %p83 = por %p81, %p82
      %p84 = scmp.ne.s32.totalorder %s76, %s78
      %p85 = scmp.eq.s32.totalorder %s26, 1
      %p86 = por %p84, %p85
      %p87 = scmp.ne.s32.totalorder %s78, %s79
      %p88 = scmp.eq.s32.totalorder %s26, 0
      %p89 = por %p87, %p88
      %p90 = scmp.ne.s32.totalorder %s78, %s79
      %p91 = scmp.eq.s32.totalorder %s27, 1
      %p92 = por %p90, %p91
      %p94 = scmp.ne.s32.totalorder %s79, %s93
      %p95 = scmp.eq.s32.totalorder %s27, 0
      %p96 = por %p94, %p95
      %s98 = sadd.s32 %s97, 1
      %p101 = scmp.eq.s32.totalorder %s21, 1
      %p102 = scmp.ne.s32.totalorder %s97, %s99
      %p103 = scmp.eq.s32.totalorder %s21, 0
      %p104 = por %p102, %p103
      %p105 = scmp.ne.s32.totalorder %s97, %s99
      %p106 = scmp.eq.s32.totalorder %s26, 1
      %p107 = por %p105, %p106
      %p108 = scmp.ne.s32.totalorder %s99, %s100
      %p109 = scmp.eq.s32.totalorder %s26, 0
      %p110 = por %p108, %p109
      %p111 = scmp.ne.s32.totalorder %s99, %s100
      %p112 = scmp.eq.s32.totalorder %s27, 1
      %p113 = por %p111, %p112
      %p115 = scmp.ne.s32.totalorder %s100, %s114
      %p116 = scmp.eq.s32.totalorder %s27, 0
      %p117 = por %p115, %p116
      %s119 = sadd.s32 %s118, 1
      %p122 = scmp.eq.s32.totalorder %s21, 1
      %p123 = scmp.ne.s32.totalorder %s118, %s120
      %p124 = scmp.eq.s32.totalorder %s21, 0
      %p125 = por %p123, %p124
      %p126 = scmp.ne.s32.totalorder %s118, %s120
      %p127 = scmp.eq.s32.totalorder %s26, 1
      %p128 = por %p126, %p127
      %p129 = scmp.ne.s32.totalorder %s120, %s121
      %p130 = scmp.eq.s32.totalorder %s26, 0
      %p131 = por %p129, %p130
      %p132 = scmp.ne.s32.totalorder %s120, %s121
      %p133 = scmp.eq.s32.totalorder %s27, 1
      %p134 = por %p132, %p133
      %p136 = scmp.ne.s32.totalorder %s121, %s135
      %p137 = scmp.eq.s32.totalorder %s27, 0
      %p138 = por %p136, %p137
      %s140 = sadd.s32 %s139, 1
      %p143 = scmp.eq.s32.totalorder %s21, 1
      %p144 = scmp.ne.s32.totalorder %s139, %s141
      %p145 = scmp.eq.s32.totalorder %s21, 0
      %p146 = por %p144, %p145
      %p147 = scmp.ne.s32.totalorder %s139, %s141
      %p148 = scmp.eq.s32.totalorder %s26, 1
      %p149 = por %p147, %p148
      %p150 = scmp.ne.s32.totalorder %s141, %s142
      %p151 = scmp.eq.s32.totalorder %s26, 0
      %p152 = por %p150, %p151
      %p153 = scmp.ne.s32.totalorder %s141, %s142
      %p154 = scmp.eq.s32.totalorder %s27, 1
      %p155 = por %p153, %p154
      %p157 = scmp.ne.s32.totalorder %s142, %s156
      %p158 = scmp.eq.s32.totalorder %s27, 0
      %p159 = por %p157, %p158
      %s161 = sadd.s32 %s160, 1
      %p164 = scmp.eq.s32.totalorder %s21, 1
      %p165 = scmp.ne.s32.totalorder %s160, %s162
      %p166 = scmp.eq.s32.totalorder %s21, 0
      %p167 = por %p165, %p166
      %p168 = scmp.ne.s32.totalorder %s160, %s162
      %p169 = scmp.eq.s32.totalorder %s26, 1
      %p170 = por %p168, %p169
      %p171 = scmp.ne.s32.totalorder %s162, %s163
      %p172 = scmp.eq.s32.totalorder %s26, 0
      %p173 = por %p171, %p172
      %p174 = scmp.ne.s32.totalorder %s162, %s163
      %p175 = scmp.eq.s32.totalorder %s27, 1
      %p176 = por %p174, %p175
      %p178 = scmp.ne.s32.totalorder %s163, %s177
      %p179 = scmp.eq.s32.totalorder %s27, 0
      %p180 = por %p178, %p179
      %s182 = sadd.s32 %s181, 1
      %p185 = scmp.eq.s32.totalorder %s21, 1
      %p186 = scmp.ne.s32.totalorder %s181, %s183
      %p187 = scmp.eq.s32.totalorder %s21, 0
      %p188 = por %p186, %p187
      %p189 = scmp.ne.s32.totalorder %s181, %s183
      %p190 = scmp.eq.s32.totalorder %s26, 1
      %p191 = por %p189, %p190
      %p192 = scmp.ne.s32.totalorder %s183, %s184
      %p193 = scmp.eq.s32.totalorder %s26, 0
      %p194 = por %p192, %p193
      %p195 = scmp.ne.s32.totalorder %s183, %s184
      %p196 = scmp.eq.s32.totalorder %s27, 1
      %p197 = por %p195, %p196
      %p199 = scmp.ne.s32.totalorder %s184, %s198
      %p200 = scmp.eq.s32.totalorder %s27, 0
      %p201 = por %p199, %p200
      %s203 = sadd.s32 %s202, 1
      %p206 = scmp.eq.s32.totalorder %s21, 1
      %p207 = scmp.ne.s32.totalorder %s202, %s204
      %p208 = scmp.eq.s32.totalorder %s21, 0
      %p209 = por %p207, %p208
      %p210 = scmp.ne.s32.totalorder %s202, %s204
      %p211 = scmp.eq.s32.totalorder %s26, 1
      %p212 = por %p210, %p211
      %p213 = scmp.ne.s32.totalorder %s204, %s205
      %p214 = scmp.eq.s32.totalorder %s26, 0
      %p215 = por %p213, %p214
      %p216 = scmp.ne.s32.totalorder %s204, %s205
      %p217 = scmp.eq.s32.totalorder %s27, 1
      %p218 = por %p216, %p217
      %p220 = scmp.ne.s32.totalorder %s205, %s219
      %p221 = scmp.eq.s32.totalorder %s27, 0
      %p222 = por %p220, %p221
      %s224 = sadd.s32 %s223, 1
      %p227 = scmp.eq.s32.totalorder %s21, 1
      %p228 = scmp.ne.s32.totalorder %s223, %s225
      %p229 = scmp.eq.s32.totalorder %s21, 0
      %p230 = por %p228, %p229
      %p231 = scmp.ne.s32.totalorder %s223, %s225
      %p232 = scmp.eq.s32.totalorder %s26, 1
      %p233 = por %p231, %p232
      %p234 = scmp.ne.s32.totalorder %s225, %s226
      %p235 = scmp.eq.s32.totalorder %s26, 0
      %p236 = por %p234, %p235
      %p237 = scmp.ne.s32.totalorder %s225, %s226
      %p238 = scmp.eq.s32.totalorder %s27, 1
      %p239 = por %p237, %p238
      %p241 = scmp.ne.s32.totalorder %s226, %s240
      %p242 = scmp.eq.s32.totalorder %s27, 0
      %p243 = por %p241, %p242
      %s245 = sadd.s32 %s244, 1
      %p248 = scmp.eq.s32.totalorder %s21, 1
      %p249 = scmp.ne.s32.totalorder %s244, %s246
      %p250 = scmp.eq.s32.totalorder %s21, 0
      %p251 = por %p249, %p250
      %p252 = scmp.ne.s32.totalorder %s244, %s246
      %p253 = scmp.eq.s32.totalorder %s26, 1
      %p254 = por %p252, %p253
      %p255 = scmp.ne.s32.totalorder %s246, %s247
      %p256 = scmp.eq.s32.totalorder %s26, 0
      %p257 = por %p255, %p256
      %p258 = scmp.ne.s32.totalorder %s246, %s247
      %p259 = scmp.eq.s32.totalorder %s27, 1
      %p260 = por %p258, %p259
      %p262 = scmp.ne.s32.totalorder %s247, %s261
      %p263 = scmp.eq.s32.totalorder %s27, 0
      %p264 = por %p262, %p263
      %s266 = sadd.s32 %s265, 1
      %p269 = scmp.eq.s32.totalorder %s21, 1
      %p270 = scmp.ne.s32.totalorder %s265, %s267
      %p271 = scmp.eq.s32.totalorder %s21, 0
      %p272 = por %p270, %p271
      %p273 = scmp.ne.s32.totalorder %s265, %s267
      %p274 = scmp.eq.s32.totalorder %s26, 1
      %p275 = por %p273, %p274
      %p276 = scmp.ne.s32.totalorder %s267, %s268
      %p277 = scmp.eq.s32.totalorder %s26, 0
      %p278 = por %p276, %p277
      %p279 = scmp.ne.s32.totalorder %s267, %s268
      %p280 = scmp.eq.s32.totalorder %s27, 1
      %p281 = por %p279, %p280
      %p283 = scmp.ne.s32.totalorder %s268, %s282
      %p284 = scmp.eq.s32.totalorder %s27, 0
      %p285 = por %p283, %p284
      %s287 = sadd.s32 %s286, 1
      %p290 = scmp.eq.s32.totalorder %s21, 1
      %p291 = scmp.ne.s32.totalorder %s286, %s288
      %p292 = scmp.eq.s32.totalorder %s21, 0
      %p293 = por %p291, %p292
      %p294 = scmp.ne.s32.totalorder %s286, %s288
      %p295 = scmp.eq.s32.totalorder %s26, 1
      %p296 = por %p294, %p295
      %p297 = scmp.ne.s32.totalorder %s288, %s289
      %p298 = scmp.eq.s32.totalorder %s26, 0
      %p299 = por %p297, %p298
      %p300 = scmp.ne.s32.totalorder %s288, %s289
      %p301 = scmp.eq.s32.totalorder %s27, 1
      %p302 = por %p300, %p301
      %p304 = scmp.ne.s32.totalorder %s289, %s303
      %p305 = scmp.eq.s32.totalorder %s27, 0
      %p306 = por %p304, %p305
      %s307 = ssub.s32 %s21, %s28
      %p308 = scmp.eq.s32.totalorder %s307, 0
      %s310 = sadd.s32 %s309, 1
      %s311 = scalar_select %p308, %s309, %s310
      %p314 = pneg %p308
      %p315 = scmp.eq.s32.totalorder %s21, 1
      %p316 = por %p314, %p315
      %p317 = scmp.ne.s32.totalorder %s309, %s312
      %p318 = scmp.eq.s32.totalorder %s21, 0
      %p319 = por %p317, %p318
      %p320 = scmp.ne.s32.totalorder %s309, %s312
      %p321 = scmp.eq.s32.totalorder %s26, 1
      %p322 = por %p320, %p321
      %p323 = scmp.ne.s32.totalorder %s312, %s313
      %p324 = scmp.eq.s32.totalorder %s26, 0
      %p325 = por %p323, %p324
      %p326 = scmp.ne.s32.totalorder %s312, %s313
      %p327 = scmp.eq.s32.totalorder %s27, 1
      %p328 = por %p326, %p327
      %p330 = scmp.ne.s32.totalorder %s313, %s329
      %p331 = scmp.eq.s32.totalorder %s27, 0
      %p332 = por %p330, %p331
      %p333 = scmp.le.s32.totalorder 1, %s21
      %p334 = scmp.lt.s32.totalorder %s21, 3
      %p335 = pnand %p333, %p334
      %p336 = pneg %p335
      // Predicated region
      $region9: #{style_encoder_forward.1} parent=5 // pred_check
        _
      $region10: #{style_encoder_forward.1} parent=5 // pred_check_branch
        %338 = sbr.rel (%p335) target = $region12
      $region11: #{style_encoder_forward.1} parent=5 // pred_region
        %s339 = ssub.s32 %s21, 1
        // Predicated region
        $region13: #{style_encoder_forward.1} parent=11 // pred_check
          %p340 = pneg %p68
        $region14: #{style_encoder_forward.1} parent=11 // pred_check_branch
          %342 = sbr.rel (%p340) target = $region16
        $region15: #{style_encoder_forward.1} parent=11 // pred_region
          %344 = vsyncadd [#allocation3], 0
          %s345 = sshll.u32 %s1, 4
          %s346 = int_to_ptr.hbm [resolvable:$true] %s345
          %s347 = sshll.u32 [#allocation2], 4
          %s348 = int_to_ptr.vmem [resolvable:$true] %s347
          %353 = dma.hbm_to_vmem [thread:$0]  %s346, 14336, %s348, [#allocation3], 128, 128, 8
        $region16: #{style_encoder_forward.1} parent=11 // pred_fallthru
          _
        // Predicated region
        $region17: #{style_encoder_forward.1} parent=11 // pred_check
          %p354 = pneg %p89
        $region18: #{style_encoder_forward.1} parent=11 // pred_check_branch
          %356 = sbr.rel (%p354) target = $region20
        $region19: #{style_encoder_forward.1} parent=11 // pred_region
          %358 = vsyncadd [#allocation5], 0
          %s359 = sshll.u32 %s2, 4
          %s360 = int_to_ptr.hbm [resolvable:$true] %s359
          %s361 = sshll.u32 [#allocation4], 4
          %s362 = int_to_ptr.vmem [resolvable:$true] %s361
          %367 = dma.hbm_to_vmem [thread:$0]  %s360, 16384, %s362, [#allocation5], 128, 128, 8
        $region20: #{style_encoder_forward.1} parent=11 // pred_fallthru
          _
        // Predicated region
        $region21: #{style_encoder_forward.1} parent=11 // pred_check
          %p368 = pneg %p110
        $region22: #{style_encoder_forward.1} parent=11 // pred_check_branch
          %370 = sbr.rel (%p368) target = $region24
        $region23: #{style_encoder_forward.1} parent=11 // pred_region
          %372 = vsyncadd [#allocation5], 0
          %s373 = sshll.u32 %s3, 4
          %s374 = int_to_ptr.hbm [resolvable:$true] %s373
          %s375 = sshll.u32 [#allocation6], 4
          %s376 = int_to_ptr.vmem [resolvable:$true] %s375
          %381 = dma.hbm_to_vmem [thread:$0]  %s374, 16384, %s376, [#allocation5], 128, 128, 8
        $region24: #{style_encoder_forward.1} parent=11 // pred_fallthru
          _
        // Predicated region
        $region25: #{style_encoder_forward.1} parent=11 // pred_check
          %p382 = pneg %p131
        $region26: #{style_encoder_forward.1} parent=11 // pred_check_branch
          %384 = sbr.rel (%p382) target = $region28
        $region27: #{style_encoder_forward.1} parent=11 // pred_region
          _
        $region28: #{style_encoder_forward.1} parent=11 // pred_fallthru
          _
        // Predicated region
        $region29: #{style_encoder_forward.1} parent=11 // pred_check
          %p385 = pneg %p152
        $region30: #{style_encoder_forward.1} parent=11 // pred_check_branch
          %387 = sbr.rel (%p385) target = $region32
        $region31: #{style_encoder_forward.1} parent=11 // pred_region
          _
        $region32: #{style_encoder_forward.1} parent=11 // pred_fallthru
          _
        // Predicated region
        $region33: #{style_encoder_forward.1} parent=11 // pred_check
          %p388 = pneg %p173
        $region34: #{style_encoder_forward.1} parent=11 // pred_check_branch
          %390 = sbr.rel (%p388) target = $region36
        $region35: #{style_encoder_forward.1} parent=11 // pred_region
          _
        $region36: #{style_encoder_forward.1} parent=11 // pred_fallthru
          _
        // Predicated region
        $region37: #{style_encoder_forward.1} parent=11 // pred_check
          %p391 = pneg %p194
        $region38: #{style_encoder_forward.1} parent=11 // pred_check_branch
          %393 = sbr.rel (%p391) target = $region40
        $region39: #{style_encoder_forward.1} parent=11 // pred_region
          _
        $region40: #{style_encoder_forward.1} parent=11 // pred_fallthru
          _
        // Predicated region
        $region41: #{style_encoder_forward.1} parent=11 // pred_check
          %p394 = pneg %p215
        $region42: #{style_encoder_forward.1} parent=11 // pred_check_branch
          %396 = sbr.rel (%p394) target = $region44
        $region43: #{style_encoder_forward.1} parent=11 // pred_region
          _
        $region44: #{style_encoder_forward.1} parent=11 // pred_fallthru
          _
        // Predicated region
        $region45: #{style_encoder_forward.1} parent=11 // pred_check
          %p397 = pneg %p236
        $region46: #{style_encoder_forward.1} parent=11 // pred_check_branch
          %399 = sbr.rel (%p397) target = $region48
        $region47: #{style_encoder_forward.1} parent=11 // pred_region
          _
        $region48: #{style_encoder_forward.1} parent=11 // pred_fallthru
          _
        // Predicated region
        $region49: #{style_encoder_forward.1} parent=11 // pred_check
          %p400 = pneg %p257
        $region50: #{style_encoder_forward.1} parent=11 // pred_check_branch
          %402 = sbr.rel (%p400) target = $region52
        $region51: #{style_encoder_forward.1} parent=11 // pred_region
          _
        $region52: #{style_encoder_forward.1} parent=11 // pred_fallthru
          _
        // Predicated region
        $region53: #{style_encoder_forward.1} parent=11 // pred_check
          %p403 = pneg %p278
        $region54: #{style_encoder_forward.1} parent=11 // pred_check_branch
          %405 = sbr.rel (%p403) target = $region56
        $region55: #{style_encoder_forward.1} parent=11 // pred_region
          _
        $region56: #{style_encoder_forward.1} parent=11 // pred_fallthru
          _
        // Predicated region
        $region57: #{style_encoder_forward.1} parent=11 // pred_check
          %p406 = pneg %p299
        $region58: #{style_encoder_forward.1} parent=11 // pred_check_branch
          %408 = sbr.rel (%p406) target = $region60
        $region59: #{style_encoder_forward.1} parent=11 // pred_region
          _
        $region60: #{style_encoder_forward.1} parent=11 // pred_fallthru
          _
      $region12: #{style_encoder_forward.1} parent=5 // pred_fallthru
        _
      %p409 = scmp.lt.s32.totalorder %s21, 2
      // Predicated region
      $region61: #{style_encoder_forward.1} parent=5 // pred_check
        %p410 = pneg %p409
      $region62: #{style_encoder_forward.1} parent=5 // pred_check_branch
        %412 = sbr.rel (%p410) target = $region64
      $region63: #{style_encoder_forward.1} parent=5 // pred_region
        // Predicated region
        $region65: #{style_encoder_forward.1} parent=63 // pred_check
          %p413 = pneg %p41
        $region66: #{style_encoder_forward.1} parent=63 // pred_check_branch
          %415 = sbr.rel (%p413) target = $region68
        $region67: #{style_encoder_forward.1} parent=63 // pred_region
          %p416 = scmp.lt.s32.totalorder %s21, 1
          %s417 = scalar_select %p416, %s21, 1
          %s418 = smul.addr %s417, 4
          %s419 = smul.addr %s418, 4
          %s420 = scalar_lea.vmem %s0, %s419
        $region68: #{style_encoder_forward.1} parent=63 // pred_fallthru
          _
      $region64: #{style_encoder_forward.1} parent=5 // pred_fallthru
        _
      %p421 = scmp.le.s32.totalorder 1, %s21
      %p422 = scmp.lt.s32.totalorder %s21, 3
      %p423 = pnand %p421, %p422
      %p424 = pneg %p423
      // Predicated region
      $region69: #{style_encoder_forward.1} parent=5 // pred_check
        _
      $region70: #{style_encoder_forward.1} parent=5 // pred_check_branch
        %426 = sbr.rel (%p423) target = $region72
      $region71: #{style_encoder_forward.1} parent=5 // pred_region
        %s427 = ssub.s32 %s21, 1
        // Predicated region
        $region73: #{style_encoder_forward.1} parent=71 // pred_check
          %p428 = pneg %p68
        $region74: #{style_encoder_forward.1} parent=71 // pred_check_branch
          %430 = sbr.rel (%p428) target = $region76
        $region75: #{style_encoder_forward.1} parent=71 // pred_region
          %432 = dma.done [#allocation3], 14336
        $region76: #{style_encoder_forward.1} parent=71 // pred_fallthru
          _
        // Predicated region
        $region77: #{style_encoder_forward.1} parent=71 // pred_check
          %p433 = pneg %p89
        $region78: #{style_encoder_forward.1} parent=71 // pred_check_branch
          %435 = sbr.rel (%p433) target = $region80
        $region79: #{style_encoder_forward.1} parent=71 // pred_region
          %437 = dma.done [#allocation5], 16384
        $region80: #{style_encoder_forward.1} parent=71 // pred_fallthru
          _
        // Predicated region
        $region81: #{style_encoder_forward.1} parent=71 // pred_check
          %p438 = pneg %p110
        $region82: #{style_encoder_forward.1} parent=71 // pred_check_branch
          %440 = sbr.rel (%p438) target = $region84
        $region83: #{style_encoder_forward.1} parent=71 // pred_region
          %442 = dma.done [#allocation5], 16384
        $region84: #{style_encoder_forward.1} parent=71 // pred_fallthru
          _
        %p443 = scmp.lt.s32.totalorder %s26, 1
        %s444 = scalar_select %p443, %s26, 1
        %s445 = smul.addr %s444, 4
        %s446 = smul.addr %s445, 4
        %s447 = scalar_lea.vmem %s0, %s446
        %p448 = pneg %p47
        %p449 = pneg %p44
        %p450 = pneg %p68
        %p451 = pneg %p65
        %p452 = pneg %p89
        %p453 = pneg %p86
        %p454 = pneg %p110
        %p455 = pneg %p107
        %p456 = pneg %p131
        %p457 = pneg %p128
        %p458 = pneg %p152
        %p459 = pneg %p149
        %p460 = pneg %p173
        %p461 = pneg %p170
        %p462 = pneg %p194
        %p463 = pneg %p191
        %p464 = pneg %p215
        %p465 = pneg %p212
        %p466 = pneg %p236
        %p467 = pneg %p233
        %p468 = pneg %p257
        %p469 = pneg %p254
        %p470 = pneg %p278
        %p471 = pneg %p275
        %p472 = pneg %p299
        %p473 = pneg %p296
        %p474 = pneg %p325
        %p475 = pneg %p322
        %p476 = scmp.lt.s32.totalorder %s26, 1
        %s477 = scalar_select %p476, %s26, 1
        %s478 = scalar_lea.vmem %s13, %s477
        %p479 = scmp.lt.s32.totalorder %s26, 1
        %s480 = scalar_select %p479, %s26, 1
        %s481 = smul.addr %s480, 4
        %s482 = smul.addr %s481, 4
        %s483 = scalar_lea.vmem %s0, %s482
        %p484 = scmp.lt.s32.totalorder %s26, 1
        %s485 = scalar_select %p484, %s26, 1
        %s486 = scalar_lea.vmem %s13, %s485
        %v488 = vld [vmem:[%s483] sm:$0xf]
        %v489 = vld [vmem:[%s483 + $0x4] sm:$0xf]
        %v490 = vld [vmem:[%s483 + $0x8] sm:$0xf]
        %v491 = vld [vmem:[%s483 + $0xc] sm:$0xf]
        %v492 = vlaneseq
        %v493 = vshrl.u32 %v492, 7
        %v494 = vadd.s32 %v493, 8
        %v495 = vadd.s32 %v493, 16
        %v496 = vadd.s32 %v493, 24
        %v497 = vlaneseq
        %v498 = vand.u32 %v497, 127
        %v499 = vsub.s32 %v493, 3
        %v500 = vsub.s32 %v494, 3
        %v501 = vsub.s32 %v495, 3
        %v502 = vsub.s32 %v496, 3
        %vm503 = vcmp.lt.s32.totalorder %v499, 0
        %vm504 = vcmp.lt.s32.totalorder %v500, 0
        %vm505 = vcmp.lt.s32.totalorder %v501, 0
        %vm506 = vcmp.lt.s32.totalorder %v502, 0
        %v507 = vsub.s32 0, %v499
        %v508 = vsub.s32 0, %v500
        %v509 = vsub.s32 0, %v501
        %v510 = vsub.s32 0, %v502
        %v511 = vsel %vm503, %v507, %v499
        %v512 = vsel %vm504, %v508, %v500
        %v513 = vsel %vm505, %v509, %v501
        %v514 = vsel %vm506, %v510, %v502
        %vm515 = vcmp.gt.s32.totalorder %v511, 31
        %vm516 = vcmp.gt.s32.totalorder %v512, 31
        %vm517 = vcmp.gt.s32.totalorder %v513, 31
        %vm518 = vcmp.gt.s32.totalorder %v514, 31
        %v519 = vsub.s32 62, %v511
        %v520 = vsub.s32 62, %v512
        %v521 = vsub.s32 62, %v513
        %v522 = vsub.s32 62, %v514
        %v523 = vsel %vm515, %v519, %v511
        %v524 = vsel %vm516, %v520, %v512
        %v525 = vsel %vm517, %v521, %v513
        %v526 = vsel %vm518, %v522, %v514
        %vm527 = vcmp.eq.s32.totalorder %v498, %v523
        %vm528 = vcmp.eq.s32.totalorder %v498, %v524
        %vm529 = vcmp.eq.s32.totalorder %v498, %v525
        %vm530 = vcmp.eq.s32.totalorder %v498, %v526
        %v531 = vsel %vm527, 1.0, 0.0
        %v532 = vsel %vm528, 1.0, 0.0
        %v533 = vsel %vm529, 1.0, 0.0
        %v534 = vsel %vm530, 1.0, 0.0
        %v535 = vpack.c.bf16 %v532, %v531
        %v536 = vpack.c.bf16 %v534, %v533
        %v541 = vunpack.c.l.b16 %v488
        %v542 = vunpack.c.l.b16 %v489
        %v543 = vunpack.c.l.b16 %v490
        %v544 = vunpack.c.l.b16 %v491
        %v545 = vpack.c.b16 %v542, %v541
        %v546 = vpack.c.b16 %v544, %v543
        %vm549 = vcmask 261120
        %v551 = vsel %vm549, %v535, 0
        %v554 = vsel %vm549, %v536, 0
        %556 = vmatpush.bf16.msra.mxu0 0
        %557 = vmatpush.bf16.msra.mxu0 0
        %558 = vmatpush.bf16.msra.mxu0 0
        %559 = vmatpush.bf16.msra.mxu0 0
        %560 = vmatpush.bf16.msra.mxu0 0
        %561 = vmatpush.bf16.msra.mxu0 0
        %562 = vmatpush.bf16.msra.mxu0 %v546
        %563 = vmatpush.bf16.msra.mxu0 %v545
        %564 = vmatmul.bf16.gmra.mxu0 %v551
        %v565 = vpop.f32.mrf.mxu0
        %v566 = vadd.f32 0.0, %v565
        %v567 = vpop.f32.mrf.mxu0
        %v568 = vadd.f32 0.0, %v567
        %569 = vmatmul.bf16.gmra.mxu0 %v554
        %v570 = vpop.f32.mrf.mxu0
        %v571 = vadd.f32 0.0, %v570
        %v572 = vpop.f32.mrf.mxu0
        %v573 = vadd.f32 0.0, %v572
        %574 = vdwg.mxu0
        %v575 = vpack.c.bf16 %v568, %v566
        %v576 = vpack.c.bf16 %v573, %v571
        %v577 = vld [vmem:[#allocation2] sm:$0xff]
        %v578 = vld [vmem:[#allocation2 + $0x8] sm:$0xff]
        %v579 = vld [vmem:[#allocation2 + $0x10] sm:$0xff]
        %v580 = vld [vmem:[#allocation2 + $0x18] sm:$0xff]
        %v581 = vld [vmem:[#allocation2 + $0x20] sm:$0xff]
        %v582 = vld [vmem:[#allocation2 + $0x28] sm:$0xff]
        %v583 = vld [vmem:[#allocation2 + $0x30] sm:$0xff]
        %v584 = vld [vmem:[#allocation2 + $0x38] sm:$0xff]
        %v585 = vld [vmem:[#allocation2 + $0x40] sm:$0xff]
        %v586 = vld [vmem:[#allocation2 + $0x48] sm:$0xff]
        %v587 = vld [vmem:[#allocation2 + $0x50] sm:$0xff]
        %v588 = vld [vmem:[#allocation2 + $0x58] sm:$0xff]
        %v589 = vld [vmem:[#allocation2 + $0x60] sm:$0xff]
        %v590 = vld [vmem:[#allocation2 + $0x68] sm:$0xff]
        %v591 = vld [vmem:[#allocation2 + $0x70] sm:$0xff]
        %v592 = vld [vmem:[#allocation2 + $0x78] sm:$0xff]
        %v593 = vadd.s32 %v493, 1
        %v594 = vadd.s32 %v494, 1
        %v595 = vadd.s32 %v495, 1
        %v596 = vadd.s32 %v496, 1
        %v597 = vsub.s32 %v593, 3
        %v598 = vsub.s32 %v594, 3
        %v599 = vsub.s32 %v595, 3
        %v600 = vsub.s32 %v596, 3
        %vm601 = vcmp.lt.s32.totalorder %v597, 0
        %vm602 = vcmp.lt.s32.totalorder %v598, 0
        %vm603 = vcmp.lt.s32.totalorder %v599, 0
        %vm604 = vcmp.lt.s32.totalorder %v600, 0
        %v605 = vsub.s32 0, %v597
        %v606 = vsub.s32 0, %v598
        %v607 = vsub.s32 0, %v599
        %v608 = vsub.s32 0, %v600
        %v609 = vsel %vm601, %v605, %v597
        %v610 = vsel %vm602, %v606, %v598
        %v611 = vsel %vm603, %v607, %v599
        %v612 = vsel %vm604, %v608, %v600
        %vm613 = vcmp.gt.s32.totalorder %v609, 31
        %vm614 = vcmp.gt.s32.totalorder %v610, 31
        %vm615 = vcmp.gt.s32.totalorder %v611, 31
        %vm616 = vcmp.gt.s32.totalorder %v612, 31
        %v617 = vsub.s32 62, %v609
        %v618 = vsub.s32 62, %v610
        %v619 = vsub.s32 62, %v611
        %v620 = vsub.s32 62, %v612
        %v621 = vsel %vm613, %v617, %v609
        %v622 = vsel %vm614, %v618, %v610
        %v623 = vsel %vm615, %v619, %v611
        %v624 = vsel %vm616, %v620, %v612
        %vm625 = vcmp.eq.s32.totalorder %v498, %v621
        %vm626 = vcmp.eq.s32.totalorder %v498, %v622
        %vm627 = vcmp.eq.s32.totalorder %v498, %v623
        %vm628 = vcmp.eq.s32.totalorder %v498, %v624
        %v629 = vsel %vm625, 1.0, 0.0
        %v630 = vsel %vm626, 1.0, 0.0
        %v631 = vsel %vm627, 1.0, 0.0
        %v632 = vsel %vm628, 1.0, 0.0
        %v633 = vpack.c.bf16 %v630, %v629
        %v634 = vpack.c.bf16 %v632, %v631
        %v636 = vsel %vm549, %v633, 0
        %v639 = vsel %vm549, %v634, 0
        %641 = vmatpush.bf16.msra.mxu0 0
        %642 = vmatpush.bf16.msra.mxu0 0
        %643 = vmatpush.bf16.msra.mxu0 0
        %644 = vmatpush.bf16.msra.mxu0 0
        %645 = vmatpush.bf16.msra.mxu0 0
        %646 = vmatpush.bf16.msra.mxu0 0
        %647 = vmatpush.bf16.msra.mxu0 %v546
        %648 = vmatpush.bf16.msra.mxu0 %v545
        %649 = vmatmul.bf16.gmra.mxu0 %v636
        %v650 = vpop.f32.mrf.mxu0
        %v651 = vadd.f32 0.0, %v650
        %v652 = vpop.f32.mrf.mxu0
        %v653 = vadd.f32 0.0, %v652
        %654 = vmatmul.bf16.gmra.mxu0 %v639
        %v655 = vpop.f32.mrf.mxu0
        %v656 = vadd.f32 0.0, %v655
        %v657 = vpop.f32.mrf.mxu0
        %v658 = vadd.f32 0.0, %v657
        %659 = vdwg.mxu0
        %v660 = vpack.c.bf16 %v653, %v651
        %v661 = vpack.c.bf16 %v658, %v656
        %s662 = scalar_lea.vmem [#allocation2], 128
        %v663 = vld [vmem:[%s662] sm:$0xff]
        %v664 = vld [vmem:[%s662 + $0x8] sm:$0xff]
        %v665 = vld [vmem:[%s662 + $0x10] sm:$0xff]
        %v666 = vld [vmem:[%s662 + $0x18] sm:$0xff]
        %v667 = vld [vmem:[%s662 + $0x20] sm:$0xff]
        %v668 = vld [vmem:[%s662 + $0x28] sm:$0xff]
        %v669 = vld [vmem:[%s662 + $0x30] sm:$0xff]
        %v670 = vld [vmem:[%s662 + $0x38] sm:$0xff]
        %v671 = vld [vmem:[%s662 + $0x40] sm:$0xff]
        %v672 = vld [vmem:[%s662 + $0x48] sm:$0xff]
        %v673 = vld [vmem:[%s662 + $0x50] sm:$0xff]
        %v674 = vld [vmem:[%s662 + $0x58] sm:$0xff]
        %v675 = vld [vmem:[%s662 + $0x60] sm:$0xff]
        %v676 = vld [vmem:[%s662 + $0x68] sm:$0xff]
        %v677 = vld [vmem:[%s662 + $0x70] sm:$0xff]
        %v678 = vld [vmem:[%s662 + $0x78] sm:$0xff]
        %v695 = vunpack.c.l.b16 %v663
        %v696 = vunpack.c.h.b16 %v663
        %v697 = vunpack.c.l.b16 %v664
        %v698 = vunpack.c.h.b16 %v664
        %v699 = vunpack.c.l.b16 %v665
        %v700 = vunpack.c.h.b16 %v665
        %v701 = vunpack.c.l.b16 %v666
        %v702 = vunpack.c.h.b16 %v666
        %v703 = vunpack.c.l.b16 %v667
        %v704 = vunpack.c.h.b16 %v667
        %v705 = vunpack.c.l.b16 %v668
        %v706 = vunpack.c.h.b16 %v668
        %v707 = vunpack.c.l.b16 %v669
        %v708 = vunpack.c.h.b16 %v669
        %v709 = vunpack.c.l.b16 %v670
        %v710 = vunpack.c.h.b16 %v670
        %v711 = vunpack.c.l.b16 %v671
        %v712 = vunpack.c.h.b16 %v671
        %v713 = vunpack.c.l.b16 %v672
        %v714 = vunpack.c.h.b16 %v672
        %v715 = vunpack.c.l.b16 %v673
        %v716 = vunpack.c.h.b16 %v673
        %v717 = vunpack.c.l.b16 %v674
        %v718 = vunpack.c.h.b16 %v674
        %v719 = vunpack.c.l.b16 %v675
        %v720 = vunpack.c.h.b16 %v675
        %v721 = vunpack.c.l.b16 %v676
        %v722 = vunpack.c.h.b16 %v676
        %v723 = vunpack.c.l.b16 %v677
        %v724 = vunpack.c.h.b16 %v677
        %v725 = vunpack.c.l.b16 %v678
        %v726 = vunpack.c.h.b16 %v678
        %v727 = vpack.c.b16 %v697, %v695
        %v728 = vpack.c.b16 %v698, %v696
        %v729 = vpack.c.b16 %v701, %v699
        %v730 = vpack.c.b16 %v702, %v700
        %v731 = vpack.c.b16 %v705, %v703
        %v732 = vpack.c.b16 %v706, %v704
        %v733 = vpack.c.b16 %v709, %v707
        %v734 = vpack.c.b16 %v710, %v708
        %v735 = vpack.c.b16 %v713, %v711
        %v736 = vpack.c.b16 %v714, %v712
        %v737 = vpack.c.b16 %v717, %v715
        %v738 = vpack.c.b16 %v718, %v716
        %v739 = vpack.c.b16 %v721, %v719
        %v740 = vpack.c.b16 %v722, %v720
        %v741 = vpack.c.b16 %v725, %v723
        %v742 = vpack.c.b16 %v726, %v724
        %759 = vmatpush.bf16.msra.mxu0 %v741
        %760 = vmatpush.bf16.msra.mxu0 %v739
        %761 = vmatpush.bf16.msra.mxu0 %v737
        %762 = vmatpush.bf16.msra.mxu0 %v735
        %763 = vmatpush.bf16.msra.mxu0 %v733
        %764 = vmatpush.bf16.msra.mxu0 %v731
        %765 = vmatpush.bf16.msra.mxu0 %v729
        %766 = vmatpush.bf16.msra.mxu0 %v727
        %767 = vmatmul.bf16.gmra.mxu0 %v660
        %v768 = vpop.f32.mrf.mxu0
        %v769 = vadd.f32 0.0, %v768
        %v770 = vpop.f32.mrf.mxu0
        %v771 = vadd.f32 0.0, %v770
        %772 = vmatmul.bf16.gmra.mxu0 %v661
        %v773 = vpop.f32.mrf.mxu0
        %v774 = vadd.f32 0.0, %v773
        %v775 = vpop.f32.mrf.mxu0
        %v776 = vadd.f32 0.0, %v775
        %777 = vdwg.mxu0
        %778 = vmatpush.bf16.msra.mxu0 %v742
        %779 = vmatpush.bf16.msra.mxu0 %v740
        %780 = vmatpush.bf16.msra.mxu0 %v738
        %781 = vmatpush.bf16.msra.mxu0 %v736
        %782 = vmatpush.bf16.msra.mxu0 %v734
        %783 = vmatpush.bf16.msra.mxu0 %v732
        %784 = vmatpush.bf16.msra.mxu0 %v730
        %785 = vmatpush.bf16.msra.mxu0 %v728
        %786 = vmatmul.bf16.gmra.mxu0 %v660
        %v787 = vpop.f32.mrf.mxu0
        %v788 = vadd.f32 0.0, %v787
        %v789 = vpop.f32.mrf.mxu0
        %v790 = vadd.f32 0.0, %v789
        %791 = vmatmul.bf16.gmra.mxu0 %v661
        %v792 = vpop.f32.mrf.mxu0
        %v793 = vadd.f32 0.0, %v792
        %v794 = vpop.f32.mrf.mxu0
        %v795 = vadd.f32 0.0, %v794
        %796 = vdwg.mxu0
        %v813 = vunpack.c.l.b16 %v577
        %v814 = vunpack.c.h.b16 %v577
        %v815 = vunpack.c.l.b16 %v578
        %v816 = vunpack.c.h.b16 %v578
        %v817 = vunpack.c.l.b16 %v579
        %v818 = vunpack.c.h.b16 %v579
        %v819 = vunpack.c.l.b16 %v580
        %v820 = vunpack.c.h.b16 %v580
        %v821 = vunpack.c.l.b16 %v581
        %v822 = vunpack.c.h.b16 %v581
        %v823 = vunpack.c.l.b16 %v582
        %v824 = vunpack.c.h.b16 %v582
        %v825 = vunpack.c.l.b16 %v583
        %v826 = vunpack.c.h.b16 %v583
        %v827 = vunpack.c.l.b16 %v584
        %v828 = vunpack.c.h.b16 %v584
        %v829 = vunpack.c.l.b16 %v585
        %v830 = vunpack.c.h.b16 %v585
        %v831 = vunpack.c.l.b16 %v586
        %v832 = vunpack.c.h.b16 %v586
        %v833 = vunpack.c.l.b16 %v587
        %v834 = vunpack.c.h.b16 %v587
        %v835 = vunpack.c.l.b16 %v588
        %v836 = vunpack.c.h.b16 %v588
        %v837 = vunpack.c.l.b16 %v589
        %v838 = vunpack.c.h.b16 %v589
        %v839 = vunpack.c.l.b16 %v590
        %v840 = vunpack.c.h.b16 %v590
        %v841 = vunpack.c.l.b16 %v591
        %v842 = vunpack.c.h.b16 %v591
        %v843 = vunpack.c.l.b16 %v592
        %v844 = vunpack.c.h.b16 %v592
        %v845 = vpack.c.b16 %v815, %v813
        %v846 = vpack.c.b16 %v816, %v814
        %v847 = vpack.c.b16 %v819, %v817
        %v848 = vpack.c.b16 %v820, %v818
        %v849 = vpack.c.b16 %v823, %v821
        %v850 = vpack.c.b16 %v824, %v822
        %v851 = vpack.c.b16 %v827, %v825
        %v852 = vpack.c.b16 %v828, %v826
        %v853 = vpack.c.b16 %v831, %v829
        %v854 = vpack.c.b16 %v832, %v830
        %v855 = vpack.c.b16 %v835, %v833
        %v856 = vpack.c.b16 %v836, %v834
        %v857 = vpack.c.b16 %v839, %v837
        %v858 = vpack.c.b16 %v840, %v838
        %v859 = vpack.c.b16 %v843, %v841
        %v860 = vpack.c.b16 %v844, %v842
        %877 = vmatpush.bf16.msra.mxu0 %v859
        %878 = vmatpush.bf16.msra.mxu0 %v857
        %879 = vmatpush.bf16.msra.mxu0 %v855
        %880 = vmatpush.bf16.msra.mxu0 %v853
        %881 = vmatpush.bf16.msra.mxu0 %v851
        %882 = vmatpush.bf16.msra.mxu0 %v849
        %883 = vmatpush.bf16.msra.mxu0 %v847
        %884 = vmatpush.bf16.msra.mxu0 %v845
        %885 = vmatmul.bf16.gmra.mxu0 %v575
        %v886 = vpop.f32.mrf.mxu0
        %v887 = vadd.f32 %v769, %v886
        %v888 = vpop.f32.mrf.mxu0
        %v889 = vadd.f32 %v771, %v888
        %890 = vmatmul.bf16.gmra.mxu0 %v576
        %v891 = vpop.f32.mrf.mxu0
        %v892 = vadd.f32 %v774, %v891
        %v893 = vpop.f32.mrf.mxu0
        %v894 = vadd.f32 %v776, %v893
        %895 = vdwg.mxu0
        %896 = vmatpush.bf16.msra.mxu0 %v860
        %897 = vmatpush.bf16.msra.mxu0 %v858
        %898 = vmatpush.bf16.msra.mxu0 %v856
        %899 = vmatpush.bf16.msra.mxu0 %v854
        %900 = vmatpush.bf16.msra.mxu0 %v852
        %901 = vmatpush.bf16.msra.mxu0 %v850
        %902 = vmatpush.bf16.msra.mxu0 %v848
        %903 = vmatpush.bf16.msra.mxu0 %v846
        %904 = vmatmul.bf16.gmra.mxu0 %v575
        %v905 = vpop.f32.mrf.mxu0
        %v906 = vadd.f32 %v788, %v905
        %v907 = vpop.f32.mrf.mxu0
        %v908 = vadd.f32 %v790, %v907
        %909 = vmatmul.bf16.gmra.mxu0 %v576
        %v910 = vpop.f32.mrf.mxu0
        %v911 = vadd.f32 %v793, %v910
        %v912 = vpop.f32.mrf.mxu0
        %v913 = vadd.f32 %v795, %v912
        %914 = vdwg.mxu0
        %v915 = vadd.s32 %v493, 2
        %v916 = vadd.s32 %v494, 2
        %v917 = vadd.s32 %v495, 2
        %v918 = vadd.s32 %v496, 2
        %v919 = vsub.s32 %v915, 3
        %v920 = vsub.s32 %v916, 3
        %v921 = vsub.s32 %v917, 3
        %v922 = vsub.s32 %v918, 3
        %vm923 = vcmp.lt.s32.totalorder %v919, 0
        %vm924 = vcmp.lt.s32.totalorder %v920, 0
        %vm925 = vcmp.lt.s32.totalorder %v921, 0
        %vm926 = vcmp.lt.s32.totalorder %v922, 0
        %v927 = vsub.s32 0, %v919
        %v928 = vsub.s32 0, %v920
        %v929 = vsub.s32 0, %v921
        %v930 = vsub.s32 0, %v922
        %v931 = vsel %vm923, %v927, %v919
        %v932 = vsel %vm924, %v928, %v920
        %v933 = vsel %vm925, %v929, %v921
        %v934 = vsel %vm926, %v930, %v922
        %vm935 = vcmp.gt.s32.totalorder %v931, 31
        %vm936 = vcmp.gt.s32.totalorder %v932, 31
        %vm937 = vcmp.gt.s32.totalorder %v933, 31
        %vm938 = vcmp.gt.s32.totalorder %v934, 31
        %v939 = vsub.s32 62, %v931
        %v940 = vsub.s32 62, %v932
        %v941 = vsub.s32 62, %v933
        %v942 = vsub.s32 62, %v934
        %v943 = vsel %vm935, %v939, %v931
        %v944 = vsel %vm936, %v940, %v932
        %v945 = vsel %vm937, %v941, %v933
        %v946 = vsel %vm938, %v942, %v934
        %vm947 = vcmp.eq.s32.totalorder %v498, %v943
        %vm948 = vcmp.eq.s32.totalorder %v498, %v944
        %vm949 = vcmp.eq.s32.totalorder %v498, %v945
        %vm950 = vcmp.eq.s32.totalorder %v498, %v946
        %v951 = vsel %vm947, 1.0, 0.0
        %v952 = vsel %vm948, 1.0, 0.0
        %v953 = vsel %vm949, 1.0, 0.0
        %v954 = vsel %vm950, 1.0, 0.0
        %v955 = vpack.c.bf16 %v952, %v951
        %v956 = vpack.c.bf16 %v954, %v953
        %v958 = vsel %vm549, %v955, 0
        %v961 = vsel %vm549, %v956, 0
        %963 = vmatpush.bf16.msra.mxu0 0
        %964 = vmatpush.bf16.msra.mxu0 0
        %965 = vmatpush.bf16.msra.mxu0 0
        %966 = vmatpush.bf16.msra.mxu0 0
        %967 = vmatpush.bf16.msra.mxu0 0
        %968 = vmatpush.bf16.msra.mxu0 0
        %969 = vmatpush.bf16.msra.mxu0 %v546
        %970 = vmatpush.bf16.msra.mxu0 %v545
        %971 = vmatmul.bf16.gmra.mxu0 %v958
        %v972 = vpop.f32.mrf.mxu0
        %v973 = vadd.f32 0.0, %v972
        %v974 = vpop.f32.mrf.mxu0
        %v975 = vadd.f32 0.0, %v974
        %976 = vmatmul.bf16.gmra.mxu0 %v961
        %v977 = vpop.f32.mrf.mxu0
        %v978 = vadd.f32 0.0, %v977
        %v979 = vpop.f32.mrf.mxu0
        %v980 = vadd.f32 0.0, %v979
        %981 = vdwg.mxu0
        %v982 = vpack.c.bf16 %v975, %v973
        %v983 = vpack.c.bf16 %v980, %v978
        %s984 = scalar_lea.vmem [#allocation2], 256
        %v985 = vld [vmem:[%s984] sm:$0xff]
        %v986 = vld [vmem:[%s984 + $0x8] sm:$0xff]
        %v987 = vld [vmem:[%s984 + $0x10] sm:$0xff]
        %v988 = vld [vmem:[%s984 + $0x18] sm:$0xff]
        %v989 = vld [vmem:[%s984 + $0x20] sm:$0xff]
        %v990 = vld [vmem:[%s984 + $0x28] sm:$0xff]
        %v991 = vld [vmem:[%s984 + $0x30] sm:$0xff]
        %v992 = vld [vmem:[%s984 + $0x38] sm:$0xff]
        %v993 = vld [vmem:[%s984 + $0x40] sm:$0xff]
        %v994 = vld [vmem:[%s984 + $0x48] sm:$0xff]
        %v995 = vld [vmem:[%s984 + $0x50] sm:$0xff]
        %v996 = vld [vmem:[%s984 + $0x58] sm:$0xff]
        %v997 = vld [vmem:[%s984 + $0x60] sm:$0xff]
        %v998 = vld [vmem:[%s984 + $0x68] sm:$0xff]
        %v999 = vld [vmem:[%s984 + $0x70] sm:$0xff]
        %v1000 = vld [vmem:[%s984 + $0x78] sm:$0xff]
        %v1017 = vunpack.c.l.b16 %v985
        %v1018 = vunpack.c.h.b16 %v985
        %v1019 = vunpack.c.l.b16 %v986
        %v1020 = vunpack.c.h.b16 %v986
        %v1021 = vunpack.c.l.b16 %v987
        %v1022 = vunpack.c.h.b16 %v987
        %v1023 = vunpack.c.l.b16 %v988
        %v1024 = vunpack.c.h.b16 %v988
        %v1025 = vunpack.c.l.b16 %v989
        %v1026 = vunpack.c.h.b16 %v989
        %v1027 = vunpack.c.l.b16 %v990
        %v1028 = vunpack.c.h.b16 %v990
        %v1029 = vunpack.c.l.b16 %v991
        %v1030 = vunpack.c.h.b16 %v991
        %v1031 = vunpack.c.l.b16 %v992
        %v1032 = vunpack.c.h.b16 %v992
        %v1033 = vunpack.c.l.b16 %v993
        %v1034 = vunpack.c.h.b16 %v993
        %v1035 = vunpack.c.l.b16 %v994
        %v1036 = vunpack.c.h.b16 %v994
        %v1037 = vunpack.c.l.b16 %v995
        %v1038 = vunpack.c.h.b16 %v995
        %v1039 = vunpack.c.l.b16 %v996
        %v1040 = vunpack.c.h.b16 %v996
        %v1041 = vunpack.c.l.b16 %v997
        %v1042 = vunpack.c.h.b16 %v997
        %v1043 = vunpack.c.l.b16 %v998
        %v1044 = vunpack.c.h.b16 %v998
        %v1045 = vunpack.c.l.b16 %v999
        %v1046 = vunpack.c.h.b16 %v999
        %v1047 = vunpack.c.l.b16 %v1000
        %v1048 = vunpack.c.h.b16 %v1000
        %v1049 = vpack.c.b16 %v1019, %v1017
        %v1050 = vpack.c.b16 %v1020, %v1018
        %v1051 = vpack.c.b16 %v1023, %v1021
        %v1052 = vpack.c.b16 %v1024, %v1022
        %v1053 = vpack.c.b16 %v1027, %v1025
        %v1054 = vpack.c.b16 %v1028, %v1026
        %v1055 = vpack.c.b16 %v1031, %v1029
        %v1056 = vpack.c.b16 %v1032, %v1030
        %v1057 = vpack.c.b16 %v1035, %v1033
        %v1058 = vpack.c.b16 %v1036, %v1034
        %v1059 = vpack.c.b16 %v1039, %v1037
        %v1060 = vpack.c.b16 %v1040, %v1038
        %v1061 = vpack.c.b16 %v1043, %v1041
        %v1062 = vpack.c.b16 %v1044, %v1042
        %v1063 = vpack.c.b16 %v1047, %v1045
        %v1064 = vpack.c.b16 %v1048, %v1046
        %1081 = vmatpush.bf16.msra.mxu0 %v1063
        %1082 = vmatpush.bf16.msra.mxu0 %v1061
        %1083 = vmatpush.bf16.msra.mxu0 %v1059
        %1084 = vmatpush.bf16.msra.mxu0 %v1057
        %1085 = vmatpush.bf16.msra.mxu0 %v1055
        %1086 = vmatpush.bf16.msra.mxu0 %v1053
        %1087 = vmatpush.bf16.msra.mxu0 %v1051
        %1088 = vmatpush.bf16.msra.mxu0 %v1049
        %1089 = vmatmul.bf16.gmra.mxu0 %v982
        %v1090 = vpop.f32.mrf.mxu0
        %v1091 = vadd.f32 0.0, %v1090
        %v1092 = vpop.f32.mrf.mxu0
        %v1093 = vadd.f32 0.0, %v1092
        %1094 = vmatmul.bf16.gmra.mxu0 %v983
        %v1095 = vpop.f32.mrf.mxu0
        %v1096 = vadd.f32 0.0, %v1095
        %v1097 = vpop.f32.mrf.mxu0
        %v1098 = vadd.f32 0.0, %v1097
        %1099 = vdwg.mxu0
        %1100 = vmatpush.bf16.msra.mxu0 %v1064
        %1101 = vmatpush.bf16.msra.mxu0 %v1062
        %1102 = vmatpush.bf16.msra.mxu0 %v1060
        %1103 = vmatpush.bf16.msra.mxu0 %v1058
        %1104 = vmatpush.bf16.msra.mxu0 %v1056
        %1105 = vmatpush.bf16.msra.mxu0 %v1054
        %1106 = vmatpush.bf16.msra.mxu0 %v1052
        %1107 = vmatpush.bf16.msra.mxu0 %v1050
        %1108 = vmatmul.bf16.gmra.mxu0 %v982
        %v1109 = vpop.f32.mrf.mxu0
        %v1110 = vadd.f32 0.0, %v1109
        %v1111 = vpop.f32.mrf.mxu0
        %v1112 = vadd.f32 0.0, %v1111
        %1113 = vmatmul.bf16.gmra.mxu0 %v983
        %v1114 = vpop.f32.mrf.mxu0
        %v1115 = vadd.f32 0.0, %v1114
        %v1116 = vpop.f32.mrf.mxu0
        %v1117 = vadd.f32 0.0, %v1116
        %1118 = vdwg.mxu0
        %v1119 = vadd.f32 %v887, %v1091
        %v1120 = vadd.f32 %v906, %v1110
        %v1121 = vadd.f32 %v889, %v1093
        %v1122 = vadd.f32 %v908, %v1112
        %v1123 = vadd.f32 %v892, %v1096
        %v1124 = vadd.f32 %v911, %v1115
        %v1125 = vadd.f32 %v894, %v1098
        %v1126 = vadd.f32 %v913, %v1117
        %vm1127 = vcmp.lt.s32.totalorder %v493, 0
        %vm1128 = vcmp.lt.s32.totalorder %v494, 0
        %vm1129 = vcmp.lt.s32.totalorder %v495, 0
        %vm1130 = vcmp.lt.s32.totalorder %v496, 0
        %v1131 = vsub.s32 0, %v493
        %v1132 = vsub.s32 0, %v494
        %v1133 = vsub.s32 0, %v495
        %v1134 = vsub.s32 0, %v496
        %v1135 = vsel %vm1127, %v1131, %v493
        %v1136 = vsel %vm1128, %v1132, %v494
        %v1137 = vsel %vm1129, %v1133, %v495
        %v1138 = vsel %vm1130, %v1134, %v496
        %vm1139 = vcmp.gt.s32.totalorder %v1135, 31
        %vm1140 = vcmp.gt.s32.totalorder %v1136, 31
        %vm1141 = vcmp.gt.s32.totalorder %v1137, 31
        %vm1142 = vcmp.gt.s32.totalorder %v1138, 31
        %v1143 = vsub.s32 62, %v1135
        %v1144 = vsub.s32 62, %v1136
        %v1145 = vsub.s32 62, %v1137
        %v1146 = vsub.s32 62, %v1138
        %v1147 = vsel %vm1139, %v1143, %v1135
        %v1148 = vsel %vm1140, %v1144, %v1136
        %v1149 = vsel %vm1141, %v1145, %v1137
        %v1150 = vsel %vm1142, %v1146, %v1138
        %vm1151 = vcmp.eq.s32.totalorder %v498, %v1147
        %vm1152 = vcmp.eq.s32.totalorder %v498, %v1148
        %vm1153 = vcmp.eq.s32.totalorder %v498, %v1149
        %vm1154 = vcmp.eq.s32.totalorder %v498, %v1150
        %v1155 = vsel %vm1151, 1.0, 0.0
        %v1156 = vsel %vm1152, 1.0, 0.0
        %v1157 = vsel %vm1153, 1.0, 0.0
        %v1158 = vsel %vm1154, 1.0, 0.0
        %v1159 = vpack.c.bf16 %v1156, %v1155
        %v1160 = vpack.c.bf16 %v1158, %v1157
        %v1162 = vsel %vm549, %v1159, 0
        %v1165 = vsel %vm549, %v1160, 0
        %1167 = vmatpush.bf16.msra.mxu0 0
        %1168 = vmatpush.bf16.msra.mxu0 0
        %1169 = vmatpush.bf16.msra.mxu0 0
        %1170 = vmatpush.bf16.msra.mxu0 0
        %1171 = vmatpush.bf16.msra.mxu0 0
        %1172 = vmatpush.bf16.msra.mxu0 0
        %1173 = vmatpush.bf16.msra.mxu0 %v546
        %1174 = vmatpush.bf16.msra.mxu0 %v545
        %1175 = vmatmul.bf16.gmra.mxu0 %v1162
        %v1176 = vpop.f32.mrf.mxu0
        %v1177 = vadd.f32 0.0, %v1176
        %v1178 = vpop.f32.mrf.mxu0
        %v1179 = vadd.f32 0.0, %v1178
        %1180 = vmatmul.bf16.gmra.mxu0 %v1165
        %v1181 = vpop.f32.mrf.mxu0
        %v1182 = vadd.f32 0.0, %v1181
        %v1183 = vpop.f32.mrf.mxu0
        %v1184 = vadd.f32 0.0, %v1183
        %1185 = vdwg.mxu0
        %v1186 = vpack.c.bf16 %v1179, %v1177
        %v1187 = vpack.c.bf16 %v1184, %v1182
        %s1188 = scalar_lea.vmem [#allocation2], 384
        %v1189 = vld [vmem:[%s1188] sm:$0xff]
        %v1190 = vld [vmem:[%s1188 + $0x8] sm:$0xff]
        %v1191 = vld [vmem:[%s1188 + $0x10] sm:$0xff]
        %v1192 = vld [vmem:[%s1188 + $0x18] sm:$0xff]
        %v1193 = vld [vmem:[%s1188 + $0x20] sm:$0xff]
        %v1194 = vld [vmem:[%s1188 + $0x28] sm:$0xff]
        %v1195 = vld [vmem:[%s1188 + $0x30] sm:$0xff]
        %v1196 = vld [vmem:[%s1188 + $0x38] sm:$0xff]
        %v1197 = vld [vmem:[%s1188 + $0x40] sm:$0xff]
        %v1198 = vld [vmem:[%s1188 + $0x48] sm:$0xff]
        %v1199 = vld [vmem:[%s1188 + $0x50] sm:$0xff]
        %v1200 = vld [vmem:[%s1188 + $0x58] sm:$0xff]
        %v1201 = vld [vmem:[%s1188 + $0x60] sm:$0xff]
        %v1202 = vld [vmem:[%s1188 + $0x68] sm:$0xff]
        %v1203 = vld [vmem:[%s1188 + $0x70] sm:$0xff]
        %v1204 = vld [vmem:[%s1188 + $0x78] sm:$0xff]
        %v1221 = vunpack.c.l.b16 %v1189
        %v1222 = vunpack.c.h.b16 %v1189
        %v1223 = vunpack.c.l.b16 %v1190
        %v1224 = vunpack.c.h.b16 %v1190
        %v1225 = vunpack.c.l.b16 %v1191
        %v1226 = vunpack.c.h.b16 %v1191
        %v1227 = vunpack.c.l.b16 %v1192
        %v1228 = vunpack.c.h.b16 %v1192
        %v1229 = vunpack.c.l.b16 %v1193
        %v1230 = vunpack.c.h.b16 %v1193
        %v1231 = vunpack.c.l.b16 %v1194
        %v1232 = vunpack.c.h.b16 %v1194
        %v1233 = vunpack.c.l.b16 %v1195
        %v1234 = vunpack.c.h.b16 %v1195
        %v1235 = vunpack.c.l.b16 %v1196
        %v1236 = vunpack.c.h.b16 %v1196
        %v1237 = vunpack.c.l.b16 %v1197
        %v1238 = vunpack.c.h.b16 %v1197
        %v1239 = vunpack.c.l.b16 %v1198
        %v1240 = vunpack.c.h.b16 %v1198
        %v1241 = vunpack.c.l.b16 %v1199
        %v1242 = vunpack.c.h.b16 %v1199
        %v1243 = vunpack.c.l.b16 %v1200
        %v1244 = vunpack.c.h.b16 %v1200
        %v1245 = vunpack.c.l.b16 %v1201
        %v1246 = vunpack.c.h.b16 %v1201
        %v1247 = vunpack.c.l.b16 %v1202
        %v1248 = vunpack.c.h.b16 %v1202
        %v1249 = vunpack.c.l.b16 %v1203
        %v1250 = vunpack.c.h.b16 %v1203
        %v1251 = vunpack.c.l.b16 %v1204
        %v1252 = vunpack.c.h.b16 %v1204
        %v1253 = vpack.c.b16 %v1223, %v1221
        %v1254 = vpack.c.b16 %v1224, %v1222
        %v1255 = vpack.c.b16 %v1227, %v1225
        %v1256 = vpack.c.b16 %v1228, %v1226
        %v1257 = vpack.c.b16 %v1231, %v1229
        %v1258 = vpack.c.b16 %v1232, %v1230
        %v1259 = vpack.c.b16 %v1235, %v1233
        %v1260 = vpack.c.b16 %v1236, %v1234
        %v1261 = vpack.c.b16 %v1239, %v1237
        %v1262 = vpack.c.b16 %v1240, %v1238
        %v1263 = vpack.c.b16 %v1243, %v1241
        %v1264 = vpack.c.b16 %v1244, %v1242
        %v1265 = vpack.c.b16 %v1247, %v1245
        %v1266 = vpack.c.b16 %v1248, %v1246
        %v1267 = vpack.c.b16 %v1251, %v1249
        %v1268 = vpack.c.b16 %v1252, %v1250
        %1285 = vmatpush.bf16.msra.mxu0 %v1267
        %1286 = vmatpush.bf16.msra.mxu0 %v1265
        %1287 = vmatpush.bf16.msra.mxu0 %v1263
        %1288 = vmatpush.bf16.msra.mxu0 %v1261
        %1289 = vmatpush.bf16.msra.mxu0 %v1259
        %1290 = vmatpush.bf16.msra.mxu0 %v1257
        %1291 = vmatpush.bf16.msra.mxu0 %v1255
        %1292 = vmatpush.bf16.msra.mxu0 %v1253
        %1293 = vmatmul.bf16.gmra.mxu0 %v1186
        %v1294 = vpop.f32.mrf.mxu0
        %v1295 = vadd.f32 0.0, %v1294
        %v1296 = vpop.f32.mrf.mxu0
        %v1297 = vadd.f32 0.0, %v1296
        %1298 = vmatmul.bf16.gmra.mxu0 %v1187
        %v1299 = vpop.f32.mrf.mxu0
        %v1300 = vadd.f32 0.0, %v1299
        %v1301 = vpop.f32.mrf.mxu0
        %v1302 = vadd.f32 0.0, %v1301
        %1303 = vdwg.mxu0
        %1304 = vmatpush.bf16.msra.mxu0 %v1268
        %1305 = vmatpush.bf16.msra.mxu0 %v1266
        %1306 = vmatpush.bf16.msra.mxu0 %v1264
        %1307 = vmatpush.bf16.msra.mxu0 %v1262
        %1308 = vmatpush.bf16.msra.mxu0 %v1260
        %1309 = vmatpush.bf16.msra.mxu0 %v1258
        %1310 = vmatpush.bf16.msra.mxu0 %v1256
        %1311 = vmatpush.bf16.msra.mxu0 %v1254
        %1312 = vmatmul.bf16.gmra.mxu0 %v1186
        %v1313 = vpop.f32.mrf.mxu0
        %v1314 = vadd.f32 0.0, %v1313
        %v1315 = vpop.f32.mrf.mxu0
        %v1316 = vadd.f32 0.0, %v1315
        %1317 = vmatmul.bf16.gmra.mxu0 %v1187
        %v1318 = vpop.f32.mrf.mxu0
        %v1319 = vadd.f32 0.0, %v1318
        %v1320 = vpop.f32.mrf.mxu0
        %v1321 = vadd.f32 0.0, %v1320
        %1322 = vdwg.mxu0
        %v1323 = vadd.f32 %v1119, %v1295
        %v1324 = vadd.f32 %v1120, %v1314
        %v1325 = vadd.f32 %v1121, %v1297
        %v1326 = vadd.f32 %v1122, %v1316
        %v1327 = vadd.f32 %v1123, %v1300
        %v1328 = vadd.f32 %v1124, %v1319
        %v1329 = vadd.f32 %v1125, %v1302
        %v1330 = vadd.f32 %v1126, %v1321
        %v1331 = vadd.s32 %v493, 4
        %v1332 = vadd.s32 %v494, 4
        %v1333 = vadd.s32 %v495, 4
        %v1334 = vadd.s32 %v496, 4
        %v1335 = vsub.s32 %v1331, 3
        %v1336 = vsub.s32 %v1332, 3
        %v1337 = vsub.s32 %v1333, 3
        %v1338 = vsub.s32 %v1334, 3
        %vm1339 = vcmp.lt.s32.totalorder %v1335, 0
        %vm1340 = vcmp.lt.s32.totalorder %v1336, 0
        %vm1341 = vcmp.lt.s32.totalorder %v1337, 0
        %vm1342 = vcmp.lt.s32.totalorder %v1338, 0
        %v1343 = vsub.s32 0, %v1335
        %v1344 = vsub.s32 0, %v1336
        %v1345 = vsub.s32 0, %v1337
        %v1346 = vsub.s32 0, %v1338
        %v1347 = vsel %vm1339, %v1343, %v1335
        %v1348 = vsel %vm1340, %v1344, %v1336
        %v1349 = vsel %vm1341, %v1345, %v1337
        %v1350 = vsel %vm1342, %v1346, %v1338
        %vm1351 = vcmp.gt.s32.totalorder %v1347, 31
        %vm1352 = vcmp.gt.s32.totalorder %v1348, 31
        %vm1353 = vcmp.gt.s32.totalorder %v1349, 31
        %vm1354 = vcmp.gt.s32.totalorder %v1350, 31
        %v1355 = vsub.s32 62, %v1347
        %v1356 = vsub.s32 62, %v1348
        %v1357 = vsub.s32 62, %v1349
        %v1358 = vsub.s32 62, %v1350
        %v1359 = vsel %vm1351, %v1355, %v1347
        %v1360 = vsel %vm1352, %v1356, %v1348
        %v1361 = vsel %vm1353, %v1357, %v1349
        %v1362 = vsel %vm1354, %v1358, %v1350
        %vm1363 = vcmp.eq.s32.totalorder %v498, %v1359
        %vm1364 = vcmp.eq.s32.totalorder %v498, %v1360
        %vm1365 = vcmp.eq.s32.totalorder %v498, %v1361
        %vm1366 = vcmp.eq.s32.totalorder %v498, %v1362
        %v1367 = vsel %vm1363, 1.0, 0.0
        %v1368 = vsel %vm1364, 1.0, 0.0
        %v1369 = vsel %vm1365, 1.0, 0.0
        %v1370 = vsel %vm1366, 1.0, 0.0
        %v1371 = vpack.c.bf16 %v1368, %v1367
        %v1372 = vpack.c.bf16 %v1370, %v1369
        %v1374 = vsel %vm549, %v1371, 0
        %v1377 = vsel %vm549, %v1372, 0
        %1379 = vmatpush.bf16.msra.mxu0 0
        %1380 = vmatpush.bf16.msra.mxu0 0
        %1381 = vmatpush.bf16.msra.mxu0 0
        %1382 = vmatpush.bf16.msra.mxu0 0
        %1383 = vmatpush.bf16.msra.mxu0 0
        %1384 = vmatpush.bf16.msra.mxu0 0
        %1385 = vmatpush.bf16.msra.mxu0 %v546
        %1386 = vmatpush.bf16.msra.mxu0 %v545
        %1387 = vmatmul.bf16.gmra.mxu0 %v1374
        %v1388 = vpop.f32.mrf.mxu0
        %v1389 = vadd.f32 0.0, %v1388
        %v1390 = vpop.f32.mrf.mxu0
        %v1391 = vadd.f32 0.0, %v1390
        %1392 = vmatmul.bf16.gmra.mxu0 %v1377
        %v1393 = vpop.f32.mrf.mxu0
        %v1394 = vadd.f32 0.0, %v1393
        %v1395 = vpop.f32.mrf.mxu0
        %v1396 = vadd.f32 0.0, %v1395
        %1397 = vdwg.mxu0
        %v1398 = vpack.c.bf16 %v1391, %v1389
        %v1399 = vpack.c.bf16 %v1396, %v1394
        %s1400 = scalar_lea.vmem [#allocation2], 512
        %v1401 = vld [vmem:[%s1400] sm:$0xff]
        %v1402 = vld [vmem:[%s1400 + $0x8] sm:$0xff]
        %v1403 = vld [vmem:[%s1400 + $0x10] sm:$0xff]
        %v1404 = vld [vmem:[%s1400 + $0x18] sm:$0xff]
        %v1405 = vld [vmem:[%s1400 + $0x20] sm:$0xff]
        %v1406 = vld [vmem:[%s1400 + $0x28] sm:$0xff]
        %v1407 = vld [vmem:[%s1400 + $0x30] sm:$0xff]
        %v1408 = vld [vmem:[%s1400 + $0x38] sm:$0xff]
        %v1409 = vld [vmem:[%s1400 + $0x40] sm:$0xff]
        %v1410 = vld [vmem:[%s1400 + $0x48] sm:$0xff]
        %v1411 = vld [vmem:[%s1400 + $0x50] sm:$0xff]
        %v1412 = vld [vmem:[%s1400 + $0x58] sm:$0xff]
        %v1413 = vld [vmem:[%s1400 + $0x60] sm:$0xff]
        %v1414 = vld [vmem:[%s1400 + $0x68] sm:$0xff]
        %v1415 = vld [vmem:[%s1400 + $0x70] sm:$0xff]
        %v1416 = vld [vmem:[%s1400 + $0x78] sm:$0xff]
        %v1433 = vunpack.c.l.b16 %v1401
        %v1434 = vunpack.c.h.b16 %v1401
        %v1435 = vunpack.c.l.b16 %v1402
        %v1436 = vunpack.c.h.b16 %v1402
        %v1437 = vunpack.c.l.b16 %v1403
        %v1438 = vunpack.c.h.b16 %v1403
        %v1439 = vunpack.c.l.b16 %v1404
        %v1440 = vunpack.c.h.b16 %v1404
        %v1441 = vunpack.c.l.b16 %v1405
        %v1442 = vunpack.c.h.b16 %v1405
        %v1443 = vunpack.c.l.b16 %v1406
        %v1444 = vunpack.c.h.b16 %v1406
        %v1445 = vunpack.c.l.b16 %v1407
        %v1446 = vunpack.c.h.b16 %v1407
        %v1447 = vunpack.c.l.b16 %v1408
        %v1448 = vunpack.c.h.b16 %v1408
        %v1449 = vunpack.c.l.b16 %v1409
        %v1450 = vunpack.c.h.b16 %v1409
        %v1451 = vunpack.c.l.b16 %v1410
        %v1452 = vunpack.c.h.b16 %v1410
        %v1453 = vunpack.c.l.b16 %v1411
        %v1454 = vunpack.c.h.b16 %v1411
        %v1455 = vunpack.c.l.b16 %v1412
        %v1456 = vunpack.c.h.b16 %v1412
        %v1457 = vunpack.c.l.b16 %v1413
        %v1458 = vunpack.c.h.b16 %v1413
        %v1459 = vunpack.c.l.b16 %v1414
        %v1460 = vunpack.c.h.b16 %v1414
        %v1461 = vunpack.c.l.b16 %v1415
        %v1462 = vunpack.c.h.b16 %v1415
        %v1463 = vunpack.c.l.b16 %v1416
        %v1464 = vunpack.c.h.b16 %v1416
        %v1465 = vpack.c.b16 %v1435, %v1433
        %v1466 = vpack.c.b16 %v1436, %v1434
        %v1467 = vpack.c.b16 %v1439, %v1437
        %v1468 = vpack.c.b16 %v1440, %v1438
        %v1469 = vpack.c.b16 %v1443, %v1441
        %v1470 = vpack.c.b16 %v1444, %v1442
        %v1471 = vpack.c.b16 %v1447, %v1445
        %v1472 = vpack.c.b16 %v1448, %v1446
        %v1473 = vpack.c.b16 %v1451, %v1449
        %v1474 = vpack.c.b16 %v1452, %v1450
        %v1475 = vpack.c.b16 %v1455, %v1453
        %v1476 = vpack.c.b16 %v1456, %v1454
        %v1477 = vpack.c.b16 %v1459, %v1457
        %v1478 = vpack.c.b16 %v1460, %v1458
        %v1479 = vpack.c.b16 %v1463, %v1461
        %v1480 = vpack.c.b16 %v1464, %v1462
        %1497 = vmatpush.bf16.msra.mxu0 %v1479
        %1498 = vmatpush.bf16.msra.mxu0 %v1477
        %1499 = vmatpush.bf16.msra.mxu0 %v1475
        %1500 = vmatpush.bf16.msra.mxu0 %v1473
        %1501 = vmatpush.bf16.msra.mxu0 %v1471
        %1502 = vmatpush.bf16.msra.mxu0 %v1469
        %1503 = vmatpush.bf16.msra.mxu0 %v1467
        %1504 = vmatpush.bf16.msra.mxu0 %v1465
        %1505 = vmatmul.bf16.gmra.mxu0 %v1398
        %v1506 = vpop.f32.mrf.mxu0
        %v1507 = vadd.f32 0.0, %v1506
        %v1508 = vpop.f32.mrf.mxu0
        %v1509 = vadd.f32 0.0, %v1508
        %1510 = vmatmul.bf16.gmra.mxu0 %v1399
        %v1511 = vpop.f32.mrf.mxu0
        %v1512 = vadd.f32 0.0, %v1511
        %v1513 = vpop.f32.mrf.mxu0
        %v1514 = vadd.f32 0.0, %v1513
        %1515 = vdwg.mxu0
        %1516 = vmatpush.bf16.msra.mxu0 %v1480
        %1517 = vmatpush.bf16.msra.mxu0 %v1478
        %1518 = vmatpush.bf16.msra.mxu0 %v1476
        %1519 = vmatpush.bf16.msra.mxu0 %v1474
        %1520 = vmatpush.bf16.msra.mxu0 %v1472
        %1521 = vmatpush.bf16.msra.mxu0 %v1470
        %1522 = vmatpush.bf16.msra.mxu0 %v1468
        %1523 = vmatpush.bf16.msra.mxu0 %v1466
        %1524 = vmatmul.bf16.gmra.mxu0 %v1398
        %v1525 = vpop.f32.mrf.mxu0
        %v1526 = vadd.f32 0.0, %v1525
        %v1527 = vpop.f32.mrf.mxu0
        %v1528 = vadd.f32 0.0, %v1527
        %1529 = vmatmul.bf16.gmra.mxu0 %v1399
        %v1530 = vpop.f32.mrf.mxu0
        %v1531 = vadd.f32 0.0, %v1530
        %v1532 = vpop.f32.mrf.mxu0
        %v1533 = vadd.f32 0.0, %v1532
        %1534 = vdwg.mxu0
        %v1535 = vadd.f32 %v1323, %v1507
        %v1536 = vadd.f32 %v1324, %v1526
        %v1537 = vadd.f32 %v1325, %v1509
        %v1538 = vadd.f32 %v1326, %v1528
        %v1539 = vadd.f32 %v1327, %v1512
        %v1540 = vadd.f32 %v1328, %v1531
        %v1541 = vadd.f32 %v1329, %v1514
        %v1542 = vadd.f32 %v1330, %v1533
        %v1543 = vadd.s32 %v493, 5
        %v1544 = vadd.s32 %v494, 5
        %v1545 = vadd.s32 %v495, 5
        %v1546 = vadd.s32 %v496, 5
        %v1547 = vsub.s32 %v1543, 3
        %v1548 = vsub.s32 %v1544, 3
        %v1549 = vsub.s32 %v1545, 3
        %v1550 = vsub.s32 %v1546, 3
        %vm1551 = vcmp.lt.s32.totalorder %v1547, 0
        %vm1552 = vcmp.lt.s32.totalorder %v1548, 0
        %vm1553 = vcmp.lt.s32.totalorder %v1549, 0
        %vm1554 = vcmp.lt.s32.totalorder %v1550, 0
        %v1555 = vsub.s32 0, %v1547
        %v1556 = vsub.s32 0, %v1548
        %v1557 = vsub.s32 0, %v1549
        %v1558 = vsub.s32 0, %v1550
        %v1559 = vsel %vm1551, %v1555, %v1547
        %v1560 = vsel %vm1552, %v1556, %v1548
        %v1561 = vsel %vm1553, %v1557, %v1549
        %v1562 = vsel %vm1554, %v1558, %v1550
        %vm1563 = vcmp.gt.s32.totalorder %v1559, 31
        %vm1564 = vcmp.gt.s32.totalorder %v1560, 31
        %vm1565 = vcmp.gt.s32.totalorder %v1561, 31
        %vm1566 = vcmp.gt.s32.totalorder %v1562, 31
        %v1567 = vsub.s32 62, %v1559
        %v1568 = vsub.s32 62, %v1560
        %v1569 = vsub.s32 62, %v1561
        %v1570 = vsub.s32 62, %v1562
        %v1571 = vsel %vm1563, %v1567, %v1559
        %v1572 = vsel %vm1564, %v1568, %v1560
        %v1573 = vsel %vm1565, %v1569, %v1561
        %v1574 = vsel %vm1566, %v1570, %v1562
        %vm1575 = vcmp.eq.s32.totalorder %v498, %v1571
        %vm1576 = vcmp.eq.s32.totalorder %v498, %v1572
        %vm1577 = vcmp.eq.s32.totalorder %v498, %v1573
        %vm1578 = vcmp.eq.s32.totalorder %v498, %v1574
        %v1579 = vsel %vm1575, 1.0, 0.0
        %v1580 = vsel %vm1576, 1.0, 0.0
        %v1581 = vsel %vm1577, 1.0, 0.0
        %v1582 = vsel %vm1578, 1.0, 0.0
        %v1583 = vpack.c.bf16 %v1580, %v1579
        %v1584 = vpack.c.bf16 %v1582, %v1581
        %v1586 = vsel %vm549, %v1583, 0
        %v1589 = vsel %vm549, %v1584, 0
        %1591 = vmatpush.bf16.msra.mxu0 0
        %1592 = vmatpush.bf16.msra.mxu0 0
        %1593 = vmatpush.bf16.msra.mxu0 0
        %1594 = vmatpush.bf16.msra.mxu0 0
        %1595 = vmatpush.bf16.msra.mxu0 0
        %1596 = vmatpush.bf16.msra.mxu0 0
        %1597 = vmatpush.bf16.msra.mxu0 %v546
        %1598 = vmatpush.bf16.msra.mxu0 %v545
        %1599 = vmatmul.bf16.gmra.mxu0 %v1586
        %v1600 = vpop.f32.mrf.mxu0
        %v1601 = vadd.f32 0.0, %v1600
        %v1602 = vpop.f32.mrf.mxu0
        %v1603 = vadd.f32 0.0, %v1602
        %1604 = vmatmul.bf16.gmra.mxu0 %v1589
        %v1605 = vpop.f32.mrf.mxu0
        %v1606 = vadd.f32 0.0, %v1605
        %v1607 = vpop.f32.mrf.mxu0
        %v1608 = vadd.f32 0.0, %v1607
        %1609 = vdwg.mxu0
        %v1610 = vpack.c.bf16 %v1603, %v1601
        %v1611 = vpack.c.bf16 %v1608, %v1606
        %s1612 = scalar_lea.vmem [#allocation2], 640
        %v1613 = vld [vmem:[%s1612] sm:$0xff]
        %v1614 = vld [vmem:[%s1612 + $0x8] sm:$0xff]
        %v1615 = vld [vmem:[%s1612 + $0x10] sm:$0xff]
        %v1616 = vld [vmem:[%s1612 + $0x18] sm:$0xff]
        %v1617 = vld [vmem:[%s1612 + $0x20] sm:$0xff]
        %v1618 = vld [vmem:[%s1612 + $0x28] sm:$0xff]
        %v1619 = vld [vmem:[%s1612 + $0x30] sm:$0xff]
        %v1620 = vld [vmem:[%s1612 + $0x38] sm:$0xff]
        %v1621 = vld [vmem:[%s1612 + $0x40] sm:$0xff]
        %v1622 = vld [vmem:[%s1612 + $0x48] sm:$0xff]
        %v1623 = vld [vmem:[%s1612 + $0x50] sm:$0xff]
        %v1624 = vld [vmem:[%s1612 + $0x58] sm:$0xff]
        %v1625 = vld [vmem:[%s1612 + $0x60] sm:$0xff]
        %v1626 = vld [vmem:[%s1612 + $0x68] sm:$0xff]
        %v1627 = vld [vmem:[%s1612 + $0x70] sm:$0xff]
        %v1628 = vld [vmem:[%s1612 + $0x78] sm:$0xff]
        %v1645 = vunpack.c.l.b16 %v1613
        %v1646 = vunpack.c.h.b16 %v1613
        %v1647 = vunpack.c.l.b16 %v1614
        %v1648 = vunpack.c.h.b16 %v1614
        %v1649 = vunpack.c.l.b16 %v1615
        %v1650 = vunpack.c.h.b16 %v1615
        %v1651 = vunpack.c.l.b16 %v1616
        %v1652 = vunpack.c.h.b16 %v1616
        %v1653 = vunpack.c.l.b16 %v1617
        %v1654 = vunpack.c.h.b16 %v1617
        %v1655 = vunpack.c.l.b16 %v1618
        %v1656 = vunpack.c.h.b16 %v1618
        %v1657 = vunpack.c.l.b16 %v1619
        %v1658 = vunpack.c.h.b16 %v1619
        %v1659 = vunpack.c.l.b16 %v1620
        %v1660 = vunpack.c.h.b16 %v1620
        %v1661 = vunpack.c.l.b16 %v1621
        %v1662 = vunpack.c.h.b16 %v1621
        %v1663 = vunpack.c.l.b16 %v1622
        %v1664 = vunpack.c.h.b16 %v1622
        %v1665 = vunpack.c.l.b16 %v1623
        %v1666 = vunpack.c.h.b16 %v1623
        %v1667 = vunpack.c.l.b16 %v1624
        %v1668 = vunpack.c.h.b16 %v1624
        %v1669 = vunpack.c.l.b16 %v1625
        %v1670 = vunpack.c.h.b16 %v1625
        %v1671 = vunpack.c.l.b16 %v1626
        %v1672 = vunpack.c.h.b16 %v1626
        %v1673 = vunpack.c.l.b16 %v1627
        %v1674 = vunpack.c.h.b16 %v1627
        %v1675 = vunpack.c.l.b16 %v1628
        %v1676 = vunpack.c.h.b16 %v1628
        %v1677 = vpack.c.b16 %v1647, %v1645
        %v1678 = vpack.c.b16 %v1648, %v1646
        %v1679 = vpack.c.b16 %v1651, %v1649
        %v1680 = vpack.c.b16 %v1652, %v1650
        %v1681 = vpack.c.b16 %v1655, %v1653
        %v1682 = vpack.c.b16 %v1656, %v1654
        %v1683 = vpack.c.b16 %v1659, %v1657
        %v1684 = vpack.c.b16 %v1660, %v1658
        %v1685 = vpack.c.b16 %v1663, %v1661
        %v1686 = vpack.c.b16 %v1664, %v1662
        %v1687 = vpack.c.b16 %v1667, %v1665
        %v1688 = vpack.c.b16 %v1668, %v1666
        %v1689 = vpack.c.b16 %v1671, %v1669
        %v1690 = vpack.c.b16 %v1672, %v1670
        %v1691 = vpack.c.b16 %v1675, %v1673
        %v1692 = vpack.c.b16 %v1676, %v1674
        %1709 = vmatpush.bf16.msra.mxu0 %v1691
        %1710 = vmatpush.bf16.msra.mxu0 %v1689
        %1711 = vmatpush.bf16.msra.mxu0 %v1687
        %1712 = vmatpush.bf16.msra.mxu0 %v1685
        %1713 = vmatpush.bf16.msra.mxu0 %v1683
        %1714 = vmatpush.bf16.msra.mxu0 %v1681
        %1715 = vmatpush.bf16.msra.mxu0 %v1679
        %1716 = vmatpush.bf16.msra.mxu0 %v1677
        %1717 = vmatmul.bf16.gmra.mxu0 %v1610
        %v1718 = vpop.f32.mrf.mxu0
        %v1719 = vadd.f32 0.0, %v1718
        %v1720 = vpop.f32.mrf.mxu0
        %v1721 = vadd.f32 0.0, %v1720
        %1722 = vmatmul.bf16.gmra.mxu0 %v1611
        %v1723 = vpop.f32.mrf.mxu0
        %v1724 = vadd.f32 0.0, %v1723
        %v1725 = vpop.f32.mrf.mxu0
        %v1726 = vadd.f32 0.0, %v1725
        %1727 = vdwg.mxu0
        %1728 = vmatpush.bf16.msra.mxu0 %v1692
        %1729 = vmatpush.bf16.msra.mxu0 %v1690
        %1730 = vmatpush.bf16.msra.mxu0 %v1688
        %1731 = vmatpush.bf16.msra.mxu0 %v1686
        %1732 = vmatpush.bf16.msra.mxu0 %v1684
        %1733 = vmatpush.bf16.msra.mxu0 %v1682
        %1734 = vmatpush.bf16.msra.mxu0 %v1680
        %1735 = vmatpush.bf16.msra.mxu0 %v1678
        %1736 = vmatmul.bf16.gmra.mxu0 %v1610
        %v1737 = vpop.f32.mrf.mxu0
        %v1738 = vadd.f32 0.0, %v1737
        %v1739 = vpop.f32.mrf.mxu0
        %v1740 = vadd.f32 0.0, %v1739
        %1741 = vmatmul.bf16.gmra.mxu0 %v1611
        %v1742 = vpop.f32.mrf.mxu0
        %v1743 = vadd.f32 0.0, %v1742
        %v1744 = vpop.f32.mrf.mxu0
        %v1745 = vadd.f32 0.0, %v1744
        %1746 = vdwg.mxu0
        %v1747 = vadd.f32 %v1535, %v1719
        %v1748 = vadd.f32 %v1536, %v1738
        %v1749 = vadd.f32 %v1537, %v1721
        %v1750 = vadd.f32 %v1538, %v1740
        %v1751 = vadd.f32 %v1539, %v1724
        %v1752 = vadd.f32 %v1540, %v1743
        %v1753 = vadd.f32 %v1541, %v1726
        %v1754 = vadd.f32 %v1542, %v1745
        %v1755 = vadd.s32 %v493, 6
        %v1756 = vadd.s32 %v494, 6
        %v1757 = vadd.s32 %v495, 6
        %v1758 = vadd.s32 %v496, 6
        %v1759 = vsub.s32 %v1755, 3
        %v1760 = vsub.s32 %v1756, 3
        %v1761 = vsub.s32 %v1757, 3
        %v1762 = vsub.s32 %v1758, 3
        %vm1763 = vcmp.lt.s32.totalorder %v1759, 0
        %vm1764 = vcmp.lt.s32.totalorder %v1760, 0
        %vm1765 = vcmp.lt.s32.totalorder %v1761, 0
        %vm1766 = vcmp.lt.s32.totalorder %v1762, 0
        %v1767 = vsub.s32 0, %v1759
        %v1768 = vsub.s32 0, %v1760
        %v1769 = vsub.s32 0, %v1761
        %v1770 = vsub.s32 0, %v1762
        %v1771 = vsel %vm1763, %v1767, %v1759
        %v1772 = vsel %vm1764, %v1768, %v1760
        %v1773 = vsel %vm1765, %v1769, %v1761
        %v1774 = vsel %vm1766, %v1770, %v1762
        %vm1775 = vcmp.gt.s32.totalorder %v1771, 31
        %vm1776 = vcmp.gt.s32.totalorder %v1772, 31
        %vm1777 = vcmp.gt.s32.totalorder %v1773, 31
        %vm1778 = vcmp.gt.s32.totalorder %v1774, 31
        %v1779 = vsub.s32 62, %v1771
        %v1780 = vsub.s32 62, %v1772
        %v1781 = vsub.s32 62, %v1773
        %v1782 = vsub.s32 62, %v1774
        %v1783 = vsel %vm1775, %v1779, %v1771
        %v1784 = vsel %vm1776, %v1780, %v1772
        %v1785 = vsel %vm1777, %v1781, %v1773
        %v1786 = vsel %vm1778, %v1782, %v1774
        %vm1787 = vcmp.eq.s32.totalorder %v498, %v1783
        %vm1788 = vcmp.eq.s32.totalorder %v498, %v1784
        %vm1789 = vcmp.eq.s32.totalorder %v498, %v1785
        %vm1790 = vcmp.eq.s32.totalorder %v498, %v1786
        %v1791 = vsel %vm1787, 1.0, 0.0
        %v1792 = vsel %vm1788, 1.0, 0.0
        %v1793 = vsel %vm1789, 1.0, 0.0
        %v1794 = vsel %vm1790, 1.0, 0.0
        %v1795 = vpack.c.bf16 %v1792, %v1791
        %v1796 = vpack.c.bf16 %v1794, %v1793
        %v1798 = vsel %vm549, %v1795, 0
        %v1801 = vsel %vm549, %v1796, 0
        %1803 = vmatpush.bf16.msra.mxu0 0
        %1804 = vmatpush.bf16.msra.mxu0 0
        %1805 = vmatpush.bf16.msra.mxu0 0
        %1806 = vmatpush.bf16.msra.mxu0 0
        %1807 = vmatpush.bf16.msra.mxu0 0
        %1808 = vmatpush.bf16.msra.mxu0 0
        %1809 = vmatpush.bf16.msra.mxu0 %v546
        %1810 = vmatpush.bf16.msra.mxu0 %v545
        %1811 = vmatmul.bf16.gmra.mxu0 %v1798
        %v1812 = vpop.f32.mrf.mxu0
        %v1813 = vadd.f32 0.0, %v1812
        %v1814 = vpop.f32.mrf.mxu0
        %v1815 = vadd.f32 0.0, %v1814
        %1816 = vmatmul.bf16.gmra.mxu0 %v1801
        %v1817 = vpop.f32.mrf.mxu0
        %v1818 = vadd.f32 0.0, %v1817
        %v1819 = vpop.f32.mrf.mxu0
        %v1820 = vadd.f32 0.0, %v1819
        %1821 = vdwg.mxu0
        %v1822 = vpack.c.bf16 %v1815, %v1813
        %v1823 = vpack.c.bf16 %v1820, %v1818
        %s1824 = scalar_lea.vmem [#allocation2], 768
        %v1825 = vld [vmem:[%s1824] sm:$0xff]
        %v1826 = vld [vmem:[%s1824 + $0x8] sm:$0xff]
        %v1827 = vld [vmem:[%s1824 + $0x10] sm:$0xff]
        %v1828 = vld [vmem:[%s1824 + $0x18] sm:$0xff]
        %v1829 = vld [vmem:[%s1824 + $0x20] sm:$0xff]
        %v1830 = vld [vmem:[%s1824 + $0x28] sm:$0xff]
        %v1831 = vld [vmem:[%s1824 + $0x30] sm:$0xff]
        %v1832 = vld [vmem:[%s1824 + $0x38] sm:$0xff]
        %v1833 = vld [vmem:[%s1824 + $0x40] sm:$0xff]
        %v1834 = vld [vmem:[%s1824 + $0x48] sm:$0xff]
        %v1835 = vld [vmem:[%s1824 + $0x50] sm:$0xff]
        %v1836 = vld [vmem:[%s1824 + $0x58] sm:$0xff]
        %v1837 = vld [vmem:[%s1824 + $0x60] sm:$0xff]
        %v1838 = vld [vmem:[%s1824 + $0x68] sm:$0xff]
        %v1839 = vld [vmem:[%s1824 + $0x70] sm:$0xff]
        %v1840 = vld [vmem:[%s1824 + $0x78] sm:$0xff]
        %v1857 = vunpack.c.l.b16 %v1825
        %v1858 = vunpack.c.h.b16 %v1825
        %v1859 = vunpack.c.l.b16 %v1826
        %v1860 = vunpack.c.h.b16 %v1826
        %v1861 = vunpack.c.l.b16 %v1827
        %v1862 = vunpack.c.h.b16 %v1827
        %v1863 = vunpack.c.l.b16 %v1828
        %v1864 = vunpack.c.h.b16 %v1828
        %v1865 = vunpack.c.l.b16 %v1829
        %v1866 = vunpack.c.h.b16 %v1829
        %v1867 = vunpack.c.l.b16 %v1830
        %v1868 = vunpack.c.h.b16 %v1830
        %v1869 = vunpack.c.l.b16 %v1831
        %v1870 = vunpack.c.h.b16 %v1831
        %v1871 = vunpack.c.l.b16 %v1832
        %v1872 = vunpack.c.h.b16 %v1832
        %v1873 = vunpack.c.l.b16 %v1833
        %v1874 = vunpack.c.h.b16 %v1833
        %v1875 = vunpack.c.l.b16 %v1834
        %v1876 = vunpack.c.h.b16 %v1834
        %v1877 = vunpack.c.l.b16 %v1835
        %v1878 = vunpack.c.h.b16 %v1835
        %v1879 = vunpack.c.l.b16 %v1836
        %v1880 = vunpack.c.h.b16 %v1836
        %v1881 = vunpack.c.l.b16 %v1837
        %v1882 = vunpack.c.h.b16 %v1837
        %v1883 = vunpack.c.l.b16 %v1838
        %v1884 = vunpack.c.h.b16 %v1838
        %v1885 = vunpack.c.l.b16 %v1839
        %v1886 = vunpack.c.h.b16 %v1839
        %v1887 = vunpack.c.l.b16 %v1840
        %v1888 = vunpack.c.h.b16 %v1840
        %v1889 = vpack.c.b16 %v1859, %v1857
        %v1890 = vpack.c.b16 %v1860, %v1858
        %v1891 = vpack.c.b16 %v1863, %v1861
        %v1892 = vpack.c.b16 %v1864, %v1862
        %v1893 = vpack.c.b16 %v1867, %v1865
        %v1894 = vpack.c.b16 %v1868, %v1866
        %v1895 = vpack.c.b16 %v1871, %v1869
        %v1896 = vpack.c.b16 %v1872, %v1870
        %v1897 = vpack.c.b16 %v1875, %v1873
        %v1898 = vpack.c.b16 %v1876, %v1874
        %v1899 = vpack.c.b16 %v1879, %v1877
        %v1900 = vpack.c.b16 %v1880, %v1878
        %v1901 = vpack.c.b16 %v1883, %v1881
        %v1902 = vpack.c.b16 %v1884, %v1882
        %v1903 = vpack.c.b16 %v1887, %v1885
        %v1904 = vpack.c.b16 %v1888, %v1886
        %1921 = vmatpush.bf16.msra.mxu0 %v1903
        %1922 = vmatpush.bf16.msra.mxu0 %v1901
        %1923 = vmatpush.bf16.msra.mxu0 %v1899
        %1924 = vmatpush.bf16.msra.mxu0 %v1897
        %1925 = vmatpush.bf16.msra.mxu0 %v1895
        %1926 = vmatpush.bf16.msra.mxu0 %v1893
        %1927 = vmatpush.bf16.msra.mxu0 %v1891
        %1928 = vmatpush.bf16.msra.mxu0 %v1889
        %1929 = vmatmul.bf16.gmra.mxu0 %v1822
        %v1930 = vpop.f32.mrf.mxu0
        %v1931 = vadd.f32 0.0, %v1930
        %v1932 = vpop.f32.mrf.mxu0
        %v1933 = vadd.f32 0.0, %v1932
        %1934 = vmatmul.bf16.gmra.mxu0 %v1823
        %v1935 = vpop.f32.mrf.mxu0
        %v1936 = vadd.f32 0.0, %v1935
        %v1937 = vpop.f32.mrf.mxu0
        %v1938 = vadd.f32 0.0, %v1937
        %1939 = vdwg.mxu0
        %1940 = vmatpush.bf16.msra.mxu0 %v1904
        %1941 = vmatpush.bf16.msra.mxu0 %v1902
        %1942 = vmatpush.bf16.msra.mxu0 %v1900
        %1943 = vmatpush.bf16.msra.mxu0 %v1898
        %1944 = vmatpush.bf16.msra.mxu0 %v1896
        %1945 = vmatpush.bf16.msra.mxu0 %v1894
        %1946 = vmatpush.bf16.msra.mxu0 %v1892
        %1947 = vmatpush.bf16.msra.mxu0 %v1890
        %1948 = vmatmul.bf16.gmra.mxu0 %v1822
        %v1949 = vpop.f32.mrf.mxu0
        %v1950 = vadd.f32 0.0, %v1949
        %v1951 = vpop.f32.mrf.mxu0
        %v1952 = vadd.f32 0.0, %v1951
        %1953 = vmatmul.bf16.gmra.mxu0 %v1823
        %v1954 = vpop.f32.mrf.mxu0
        %v1955 = vadd.f32 0.0, %v1954
        %v1956 = vpop.f32.mrf.mxu0
        %v1957 = vadd.f32 0.0, %v1956
        %1958 = vdwg.mxu0
        %v1959 = vadd.f32 %v1747, %v1931
        %v1960 = vadd.f32 %v1748, %v1950
        %v1961 = vadd.f32 %v1749, %v1933
        %v1962 = vadd.f32 %v1750, %v1952
        %v1963 = vadd.f32 %v1751, %v1936
        %v1964 = vadd.f32 %v1752, %v1955
        %v1965 = vadd.f32 %v1753, %v1938
        %v1966 = vadd.f32 %v1754, %v1957
        %v1967 = vld [vmem:[%s6] sm:$0x3]
        %v1969 = vperm.slane %v1967, 0
        %v1970 = vperm.slane %v1967, 1
        %v1973 = vadd.f32 %v1959, %v1969
        %v1974 = vadd.f32 %v1960, %v1970
        %v1975 = vadd.f32 %v1961, %v1969
        %v1976 = vadd.f32 %v1962, %v1970
        %v1977 = vadd.f32 %v1963, %v1969
        %v1978 = vadd.f32 %v1964, %v1970
        %v1979 = vadd.f32 %v1965, %v1969
        %v1980 = vadd.f32 %v1966, %v1970
        %v1981 = vmax.f32 %v1973, 0.0
        %v1982 = vmax.f32 %v1974, 0.0
        %v1983 = vmax.f32 %v1975, 0.0
        %v1984 = vmax.f32 %v1976, 0.0
        %v1985 = vmax.f32 %v1977, 0.0
        %v1986 = vmax.f32 %v1978, 0.0
        %v1987 = vmax.f32 %v1979, 0.0
        %v1988 = vmax.f32 %v1980, 0.0
        %v1989 = vpack.c.bf16 %v1983, %v1981
        %v1990 = vpack.c.bf16 %v1984, %v1982
        %v1991 = vpack.c.bf16 %v1987, %v1985
        %v1992 = vpack.c.bf16 %v1988, %v1986
        %v1993 = vmul.u32 %v493, 2
        %v1994 = vmul.u32 %v494, 2
        %v1995 = vsub.s32 %v1993, 1
        %v1996 = vsub.s32 %v1994, 1
        %vm1997 = vcmp.lt.s32.totalorder %v1995, 0
        %vm1998 = vcmp.lt.s32.totalorder %v1996, 0
        %v1999 = vsub.s32 0, %v1995
        %v2000 = vsub.s32 0, %v1996
        %v2001 = vsel %vm1997, %v1999, %v1995
        %v2002 = vsel %vm1998, %v2000, %v1996
        %vm2003 = vcmp.gt.s32.totalorder %v2001, 31
        %vm2004 = vcmp.gt.s32.totalorder %v2002, 31
        %v2005 = vsub.s32 62, %v2001
        %v2006 = vsub.s32 62, %v2002
        %v2007 = vsel %vm2003, %v2005, %v2001
        %v2008 = vsel %vm2004, %v2006, %v2002
        %vm2009 = vcmp.eq.s32.totalorder %v498, %v2007
        %vm2010 = vcmp.eq.s32.totalorder %v498, %v2008
        %v2011 = vsel %vm2009, 1.0, 0.0
        %v2012 = vsel %vm2010, 1.0, 0.0
        %v2013 = vpack.c.bf16 %v2012, %v2011
        %v2015 = vsel %vm549, %v2013, 0
        %2017 = vmatpush.bf16.msra.mxu0 0
        %2018 = vmatpush.bf16.msra.mxu0 0
        %2019 = vmatpush.bf16.msra.mxu0 0
        %2020 = vmatpush.bf16.msra.mxu0 0
        %2021 = vmatpush.bf16.msra.mxu0 0
        %2022 = vmatpush.bf16.msra.mxu0 0
        %2023 = vmatpush.bf16.msra.mxu0 %v1991
        %2024 = vmatpush.bf16.msra.mxu0 %v1989
        %2025 = vmatmul.bf16.gmra.mxu0 %v2015
        %v2026 = vpop.f32.mrf.mxu0
        %v2027 = vadd.f32 0.0, %v2026
        %v2028 = vpop.f32.mrf.mxu0
        %v2029 = vadd.f32 0.0, %v2028
        %2030 = vdwg.mxu0
        %2031 = vmatpush.bf16.msra.mxu0 0
        %2032 = vmatpush.bf16.msra.mxu0 0
        %2033 = vmatpush.bf16.msra.mxu0 0
        %2034 = vmatpush.bf16.msra.mxu0 0
        %2035 = vmatpush.bf16.msra.mxu0 0
        %2036 = vmatpush.bf16.msra.mxu0 0
        %2037 = vmatpush.bf16.msra.mxu0 %v1992
        %2038 = vmatpush.bf16.msra.mxu0 %v1990
        %2039 = vmatmul.bf16.gmra.mxu0 %v2015
        %v2040 = vpop.f32.mrf.mxu0
        %v2041 = vadd.f32 0.0, %v2040
        %v2042 = vpop.f32.mrf.mxu0
        %v2043 = vadd.f32 0.0, %v2042
        %2044 = vdwg.mxu0
        %v2045 = vpack.c.bf16 %v2029, %v2027
        %v2046 = vpack.c.bf16 %v2043, %v2041
        %v2047 = vld [vmem:[#allocation4] sm:$0xff]
        %v2048 = vld [vmem:[#allocation4 + $0x8] sm:$0xff]
        %v2049 = vld [vmem:[#allocation4 + $0x10] sm:$0xff]
        %v2050 = vld [vmem:[#allocation4 + $0x18] sm:$0xff]
        %v2051 = vld [vmem:[#allocation4 + $0x20] sm:$0xff]
        %v2052 = vld [vmem:[#allocation4 + $0x28] sm:$0xff]
        %v2053 = vld [vmem:[#allocation4 + $0x30] sm:$0xff]
        %v2054 = vld [vmem:[#allocation4 + $0x38] sm:$0xff]
        %v2055 = vld [vmem:[#allocation4 + $0x40] sm:$0xff]
        %v2056 = vld [vmem:[#allocation4 + $0x48] sm:$0xff]
        %v2057 = vld [vmem:[#allocation4 + $0x50] sm:$0xff]
        %v2058 = vld [vmem:[#allocation4 + $0x58] sm:$0xff]
        %v2059 = vld [vmem:[#allocation4 + $0x60] sm:$0xff]
        %v2060 = vld [vmem:[#allocation4 + $0x68] sm:$0xff]
        %v2061 = vld [vmem:[#allocation4 + $0x70] sm:$0xff]
        %v2062 = vld [vmem:[#allocation4 + $0x78] sm:$0xff]
        %v2063 = vld [vmem:[#allocation4 + $0x80] sm:$0xff]
        %v2064 = vld [vmem:[#allocation4 + $0x88] sm:$0xff]
        %v2065 = vld [vmem:[#allocation4 + $0x90] sm:$0xff]
        %v2066 = vld [vmem:[#allocation4 + $0x98] sm:$0xff]
        %v2067 = vld [vmem:[#allocation4 + $0xa0] sm:$0xff]
        %v2068 = vld [vmem:[#allocation4 + $0xa8] sm:$0xff]
        %v2069 = vld [vmem:[#allocation4 + $0xb0] sm:$0xff]
        %v2070 = vld [vmem:[#allocation4 + $0xb8] sm:$0xff]
        %v2071 = vld [vmem:[#allocation4 + $0xc0] sm:$0xff]
        %v2072 = vld [vmem:[#allocation4 + $0xc8] sm:$0xff]
        %v2073 = vld [vmem:[#allocation4 + $0xd0] sm:$0xff]
        %v2074 = vld [vmem:[#allocation4 + $0xd8] sm:$0xff]
        %v2075 = vld [vmem:[#allocation4 + $0xe0] sm:$0xff]
        %v2076 = vld [vmem:[#allocation4 + $0xe8] sm:$0xff]
        %v2077 = vld [vmem:[#allocation4 + $0xf0] sm:$0xff]
        %v2078 = vld [vmem:[#allocation4 + $0xf8] sm:$0xff]
        %vm2079 = vcmp.lt.s32.totalorder %v1993, 0
        %vm2080 = vcmp.lt.s32.totalorder %v1994, 0
        %v2081 = vsub.s32 0, %v1993
        %v2082 = vsub.s32 0, %v1994
        %v2083 = vsel %vm2079, %v2081, %v1993
        %v2084 = vsel %vm2080, %v2082, %v1994
        %vm2085 = vcmp.gt.s32.totalorder %v2083, 31
        %vm2086 = vcmp.gt.s32.totalorder %v2084, 31
        %v2087 = vsub.s32 62, %v2083
        %v2088 = vsub.s32 62, %v2084
        %v2089 = vsel %vm2085, %v2087, %v2083
        %v2090 = vsel %vm2086, %v2088, %v2084
        %vm2091 = vcmp.eq.s32.totalorder %v498, %v2089
        %vm2092 = vcmp.eq.s32.totalorder %v498, %v2090
        %v2093 = vsel %vm2091, 1.0, 0.0
        %v2094 = vsel %vm2092, 1.0, 0.0
        %v2095 = vpack.c.bf16 %v2094, %v2093
        %v2097 = vsel %vm549, %v2095, 0
        %2099 = vmatpush.bf16.msra.mxu0 0
        %2100 = vmatpush.bf16.msra.mxu0 0
        %2101 = vmatpush.bf16.msra.mxu0 0
        %2102 = vmatpush.bf16.msra.mxu0 0
        %2103 = vmatpush.bf16.msra.mxu0 0
        %2104 = vmatpush.bf16.msra.mxu0 0
        %2105 = vmatpush.bf16.msra.mxu0 %v1991
        %2106 = vmatpush.bf16.msra.mxu0 %v1989
        %2107 = vmatmul.bf16.gmra.mxu0 %v2097
        %v2108 = vpop.f32.mrf.mxu0
        %v2109 = vadd.f32 0.0, %v2108
        %v2110 = vpop.f32.mrf.mxu0
        %v2111 = vadd.f32 0.0, %v2110
        %2112 = vdwg.mxu0
        %2113 = vmatpush.bf16.msra.mxu0 0
        %2114 = vmatpush.bf16.msra.mxu0 0
        %2115 = vmatpush.bf16.msra.mxu0 0
        %2116 = vmatpush.bf16.msra.mxu0 0
        %2117 = vmatpush.bf16.msra.mxu0 0
        %2118 = vmatpush.bf16.msra.mxu0 0
        %2119 = vmatpush.bf16.msra.mxu0 %v1992
        %2120 = vmatpush.bf16.msra.mxu0 %v1990
        %2121 = vmatmul.bf16.gmra.mxu0 %v2097
        %v2122 = vpop.f32.mrf.mxu0
        %v2123 = vadd.f32 0.0, %v2122
        %v2124 = vpop.f32.mrf.mxu0
        %v2125 = vadd.f32 0.0, %v2124
        %2126 = vdwg.mxu0
        %v2127 = vpack.c.bf16 %v2111, %v2109
        %v2128 = vpack.c.bf16 %v2125, %v2123
        %s2129 = scalar_lea.vmem [#allocation4], 256
        %v2130 = vld [vmem:[%s2129] sm:$0xff]
        %v2131 = vld [vmem:[%s2129 + $0x8] sm:$0xff]
        %v2132 = vld [vmem:[%s2129 + $0x10] sm:$0xff]
        %v2133 = vld [vmem:[%s2129 + $0x18] sm:$0xff]
        %v2134 = vld [vmem:[%s2129 + $0x20] sm:$0xff]
        %v2135 = vld [vmem:[%s2129 + $0x28] sm:$0xff]
        %v2136 = vld [vmem:[%s2129 + $0x30] sm:$0xff]
        %v2137 = vld [vmem:[%s2129 + $0x38] sm:$0xff]
        %v2138 = vld [vmem:[%s2129 + $0x40] sm:$0xff]
        %v2139 = vld [vmem:[%s2129 + $0x48] sm:$0xff]
        %v2140 = vld [vmem:[%s2129 + $0x50] sm:$0xff]
        %v2141 = vld [vmem:[%s2129 + $0x58] sm:$0xff]
        %v2142 = vld [vmem:[%s2129 + $0x60] sm:$0xff]
        %v2143 = vld [vmem:[%s2129 + $0x68] sm:$0xff]
        %v2144 = vld [vmem:[%s2129 + $0x70] sm:$0xff]
        %v2145 = vld [vmem:[%s2129 + $0x78] sm:$0xff]
        %v2146 = vld [vmem:[%s2129 + $0x80] sm:$0xff]
        %v2147 = vld [vmem:[%s2129 + $0x88] sm:$0xff]
        %v2148 = vld [vmem:[%s2129 + $0x90] sm:$0xff]
        %v2149 = vld [vmem:[%s2129 + $0x98] sm:$0xff]
        %v2150 = vld [vmem:[%s2129 + $0xa0] sm:$0xff]
        %v2151 = vld [vmem:[%s2129 + $0xa8] sm:$0xff]
        %v2152 = vld [vmem:[%s2129 + $0xb0] sm:$0xff]
        %v2153 = vld [vmem:[%s2129 + $0xb8] sm:$0xff]
        %v2154 = vld [vmem:[%s2129 + $0xc0] sm:$0xff]
        %v2155 = vld [vmem:[%s2129 + $0xc8] sm:$0xff]
        %v2156 = vld [vmem:[%s2129 + $0xd0] sm:$0xff]
        %v2157 = vld [vmem:[%s2129 + $0xd8] sm:$0xff]
        %v2158 = vld [vmem:[%s2129 + $0xe0] sm:$0xff]
        %v2159 = vld [vmem:[%s2129 + $0xe8] sm:$0xff]
        %v2160 = vld [vmem:[%s2129 + $0xf0] sm:$0xff]
        %v2161 = vld [vmem:[%s2129 + $0xf8] sm:$0xff]
        %v2194 = vunpack.c.l.b16 %v2130
        %v2195 = vunpack.c.h.b16 %v2130
        %v2196 = vunpack.c.l.b16 %v2131
        %v2197 = vunpack.c.h.b16 %v2131
        %v2198 = vunpack.c.l.b16 %v2132
        %v2199 = vunpack.c.h.b16 %v2132
        %v2200 = vunpack.c.l.b16 %v2133
        %v2201 = vunpack.c.h.b16 %v2133
        %v2202 = vunpack.c.l.b16 %v2134
        %v2203 = vunpack.c.h.b16 %v2134
        %v2204 = vunpack.c.l.b16 %v2135
        %v2205 = vunpack.c.h.b16 %v2135
        %v2206 = vunpack.c.l.b16 %v2136
        %v2207 = vunpack.c.h.b16 %v2136
        %v2208 = vunpack.c.l.b16 %v2137
        %v2209 = vunpack.c.h.b16 %v2137
        %v2210 = vunpack.c.l.b16 %v2138
        %v2211 = vunpack.c.h.b16 %v2138
        %v2212 = vunpack.c.l.b16 %v2139
        %v2213 = vunpack.c.h.b16 %v2139
        %v2214 = vunpack.c.l.b16 %v2140
        %v2215 = vunpack.c.h.b16 %v2140
        %v2216 = vunpack.c.l.b16 %v2141
        %v2217 = vunpack.c.h.b16 %v2141
        %v2218 = vunpack.c.l.b16 %v2142
        %v2219 = vunpack.c.h.b16 %v2142
        %v2220 = vunpack.c.l.b16 %v2143
        %v2221 = vunpack.c.h.b16 %v2143
        %v2222 = vunpack.c.l.b16 %v2144
        %v2223 = vunpack.c.h.b16 %v2144
        %v2224 = vunpack.c.l.b16 %v2145
        %v2225 = vunpack.c.h.b16 %v2145
        %v2226 = vunpack.c.l.b16 %v2146
        %v2227 = vunpack.c.h.b16 %v2146
        %v2228 = vunpack.c.l.b16 %v2147
        %v2229 = vunpack.c.h.b16 %v2147
        %v2230 = vunpack.c.l.b16 %v2148
        %v2231 = vunpack.c.h.b16 %v2148
        %v2232 = vunpack.c.l.b16 %v2149
        %v2233 = vunpack.c.h.b16 %v2149
        %v2234 = vunpack.c.l.b16 %v2150
        %v2235 = vunpack.c.h.b16 %v2150
        %v2236 = vunpack.c.l.b16 %v2151
        %v2237 = vunpack.c.h.b16 %v2151
        %v2238 = vunpack.c.l.b16 %v2152
        %v2239 = vunpack.c.h.b16 %v2152
        %v2240 = vunpack.c.l.b16 %v2153
        %v2241 = vunpack.c.h.b16 %v2153
        %v2242 = vunpack.c.l.b16 %v2154
        %v2243 = vunpack.c.h.b16 %v2154
        %v2244 = vunpack.c.l.b16 %v2155
        %v2245 = vunpack.c.h.b16 %v2155
        %v2246 = vunpack.c.l.b16 %v2156
        %v2247 = vunpack.c.h.b16 %v2156
        %v2248 = vunpack.c.l.b16 %v2157
        %v2249 = vunpack.c.h.b16 %v2157
        %v2250 = vunpack.c.l.b16 %v2158
        %v2251 = vunpack.c.h.b16 %v2158
        %v2252 = vunpack.c.l.b16 %v2159
        %v2253 = vunpack.c.h.b16 %v2159
        %v2254 = vunpack.c.l.b16 %v2160
        %v2255 = vunpack.c.h.b16 %v2160
        %v2256 = vunpack.c.l.b16 %v2161
        %v2257 = vunpack.c.h.b16 %v2161
        %v2258 = vpack.c.b16 %v2196, %v2194
        %v2259 = vpack.c.b16 %v2197, %v2195
        %v2260 = vpack.c.b16 %v2200, %v2198
        %v2261 = vpack.c.b16 %v2201, %v2199
        %v2262 = vpack.c.b16 %v2204, %v2202
        %v2263 = vpack.c.b16 %v2205, %v2203
        %v2264 = vpack.c.b16 %v2208, %v2206
        %v2265 = vpack.c.b16 %v2209, %v2207
        %v2266 = vpack.c.b16 %v2212, %v2210
        %v2267 = vpack.c.b16 %v2213, %v2211
        %v2268 = vpack.c.b16 %v2216, %v2214
        %v2269 = vpack.c.b16 %v2217, %v2215
        %v2270 = vpack.c.b16 %v2220, %v2218
        %v2271 = vpack.c.b16 %v2221, %v2219
        %v2272 = vpack.c.b16 %v2224, %v2222
        %v2273 = vpack.c.b16 %v2225, %v2223
        %v2274 = vpack.c.b16 %v2228, %v2226
        %v2275 = vpack.c.b16 %v2229, %v2227
        %v2276 = vpack.c.b16 %v2232, %v2230
        %v2277 = vpack.c.b16 %v2233, %v2231
        %v2278 = vpack.c.b16 %v2236, %v2234
        %v2279 = vpack.c.b16 %v2237, %v2235
        %v2280 = vpack.c.b16 %v2240, %v2238
        %v2281 = vpack.c.b16 %v2241, %v2239
        %v2282 = vpack.c.b16 %v2244, %v2242
        %v2283 = vpack.c.b16 %v2245, %v2243
        %v2284 = vpack.c.b16 %v2248, %v2246
        %v2285 = vpack.c.b16 %v2249, %v2247
        %v2286 = vpack.c.b16 %v2252, %v2250
        %v2287 = vpack.c.b16 %v2253, %v2251
        %v2288 = vpack.c.b16 %v2256, %v2254
        %v2289 = vpack.c.b16 %v2257, %v2255
        %2322 = vmatpush.bf16.msra.mxu0 %v2272
        %2323 = vmatpush.bf16.msra.mxu0 %v2270
        %2324 = vmatpush.bf16.msra.mxu0 %v2268
        %2325 = vmatpush.bf16.msra.mxu0 %v2266
        %2326 = vmatpush.bf16.msra.mxu0 %v2264
        %2327 = vmatpush.bf16.msra.mxu0 %v2262
        %2328 = vmatpush.bf16.msra.mxu0 %v2260
        %2329 = vmatpush.bf16.msra.mxu0 %v2258
        %2330 = vmatmul.bf16.gmra.mxu0 %v2127
        %v2331 = vpop.f32.mrf.mxu0
        %v2332 = vadd.f32 0.0, %v2331
        %v2333 = vpop.f32.mrf.mxu0
        %v2334 = vadd.f32 0.0, %v2333
        %2335 = vdwg.mxu0
        %2336 = vmatpush.bf16.msra.mxu0 %v2288
        %2337 = vmatpush.bf16.msra.mxu0 %v2286
        %2338 = vmatpush.bf16.msra.mxu0 %v2284
        %2339 = vmatpush.bf16.msra.mxu0 %v2282
        %2340 = vmatpush.bf16.msra.mxu0 %v2280
        %2341 = vmatpush.bf16.msra.mxu0 %v2278
        %2342 = vmatpush.bf16.msra.mxu0 %v2276
        %2343 = vmatpush.bf16.msra.mxu0 %v2274
        %2344 = vmatmul.bf16.gmra.mxu0 %v2128
        %v2345 = vpop.f32.mrf.mxu0
        %v2346 = vadd.f32 %v2332, %v2345
        %v2347 = vpop.f32.mrf.mxu0
        %v2348 = vadd.f32 %v2334, %v2347
        %2349 = vdwg.mxu0
        %2350 = vmatpush.bf16.msra.mxu0 %v2273
        %2351 = vmatpush.bf16.msra.mxu0 %v2271
        %2352 = vmatpush.bf16.msra.mxu0 %v2269
        %2353 = vmatpush.bf16.msra.mxu0 %v2267
        %2354 = vmatpush.bf16.msra.mxu0 %v2265
        %2355 = vmatpush.bf16.msra.mxu0 %v2263
        %2356 = vmatpush.bf16.msra.mxu0 %v2261
        %2357 = vmatpush.bf16.msra.mxu0 %v2259
        %2358 = vmatmul.bf16.gmra.mxu0 %v2127
        %v2359 = vpop.f32.mrf.mxu0
        %v2360 = vadd.f32 0.0, %v2359
        %v2361 = vpop.f32.mrf.mxu0
        %v2362 = vadd.f32 0.0, %v2361
        %2363 = vdwg.mxu0
        %2364 = vmatpush.bf16.msra.mxu0 %v2289
        %2365 = vmatpush.bf16.msra.mxu0 %v2287
        %2366 = vmatpush.bf16.msra.mxu0 %v2285
        %2367 = vmatpush.bf16.msra.mxu0 %v2283
        %2368 = vmatpush.bf16.msra.mxu0 %v2281
        %2369 = vmatpush.bf16.msra.mxu0 %v2279
        %2370 = vmatpush.bf16.msra.mxu0 %v2277
        %2371 = vmatpush.bf16.msra.mxu0 %v2275
        %2372 = vmatmul.bf16.gmra.mxu0 %v2128
        %v2373 = vpop.f32.mrf.mxu0
        %v2374 = vadd.f32 %v2360, %v2373
        %v2375 = vpop.f32.mrf.mxu0
        %v2376 = vadd.f32 %v2362, %v2375
        %2377 = vdwg.mxu0
        %v2410 = vunpack.c.l.b16 %v2047
        %v2411 = vunpack.c.h.b16 %v2047
        %v2412 = vunpack.c.l.b16 %v2048
        %v2413 = vunpack.c.h.b16 %v2048
        %v2414 = vunpack.c.l.b16 %v2049
        %v2415 = vunpack.c.h.b16 %v2049
        %v2416 = vunpack.c.l.b16 %v2050
        %v2417 = vunpack.c.h.b16 %v2050
        %v2418 = vunpack.c.l.b16 %v2051
        %v2419 = vunpack.c.h.b16 %v2051
        %v2420 = vunpack.c.l.b16 %v2052
        %v2421 = vunpack.c.h.b16 %v2052
        %v2422 = vunpack.c.l.b16 %v2053
        %v2423 = vunpack.c.h.b16 %v2053
        %v2424 = vunpack.c.l.b16 %v2054
        %v2425 = vunpack.c.h.b16 %v2054
        %v2426 = vunpack.c.l.b16 %v2055
        %v2427 = vunpack.c.h.b16 %v2055
        %v2428 = vunpack.c.l.b16 %v2056
        %v2429 = vunpack.c.h.b16 %v2056
        %v2430 = vunpack.c.l.b16 %v2057
        %v2431 = vunpack.c.h.b16 %v2057
        %v2432 = vunpack.c.l.b16 %v2058
        %v2433 = vunpack.c.h.b16 %v2058
        %v2434 = vunpack.c.l.b16 %v2059
        %v2435 = vunpack.c.h.b16 %v2059
        %v2436 = vunpack.c.l.b16 %v2060
        %v2437 = vunpack.c.h.b16 %v2060
        %v2438 = vunpack.c.l.b16 %v2061
        %v2439 = vunpack.c.h.b16 %v2061
        %v2440 = vunpack.c.l.b16 %v2062
        %v2441 = vunpack.c.h.b16 %v2062
        %v2442 = vunpack.c.l.b16 %v2063
        %v2443 = vunpack.c.h.b16 %v2063
        %v2444 = vunpack.c.l.b16 %v2064
        %v2445 = vunpack.c.h.b16 %v2064
        %v2446 = vunpack.c.l.b16 %v2065
        %v2447 = vunpack.c.h.b16 %v2065
        %v2448 = vunpack.c.l.b16 %v2066
        %v2449 = vunpack.c.h.b16 %v2066
        %v2450 = vunpack.c.l.b16 %v2067
        %v2451 = vunpack.c.h.b16 %v2067
        %v2452 = vunpack.c.l.b16 %v2068
        %v2453 = vunpack.c.h.b16 %v2068
        %v2454 = vunpack.c.l.b16 %v2069
        %v2455 = vunpack.c.h.b16 %v2069
        %v2456 = vunpack.c.l.b16 %v2070
        %v2457 = vunpack.c.h.b16 %v2070
        %v2458 = vunpack.c.l.b16 %v2071
        %v2459 = vunpack.c.h.b16 %v2071
        %v2460 = vunpack.c.l.b16 %v2072
        %v2461 = vunpack.c.h.b16 %v2072
        %v2462 = vunpack.c.l.b16 %v2073
        %v2463 = vunpack.c.h.b16 %v2073
        %v2464 = vunpack.c.l.b16 %v2074
        %v2465 = vunpack.c.h.b16 %v2074
        %v2466 = vunpack.c.l.b16 %v2075
        %v2467 = vunpack.c.h.b16 %v2075
        %v2468 = vunpack.c.l.b16 %v2076
        %v2469 = vunpack.c.h.b16 %v2076
        %v2470 = vunpack.c.l.b16 %v2077
        %v2471 = vunpack.c.h.b16 %v2077
        %v2472 = vunpack.c.l.b16 %v2078
        %v2473 = vunpack.c.h.b16 %v2078
        %v2474 = vpack.c.b16 %v2412, %v2410
        %v2475 = vpack.c.b16 %v2413, %v2411
        %v2476 = vpack.c.b16 %v2416, %v2414
        %v2477 = vpack.c.b16 %v2417, %v2415
        %v2478 = vpack.c.b16 %v2420, %v2418
        %v2479 = vpack.c.b16 %v2421, %v2419
        %v2480 = vpack.c.b16 %v2424, %v2422
        %v2481 = vpack.c.b16 %v2425, %v2423
        %v2482 = vpack.c.b16 %v2428, %v2426
        %v2483 = vpack.c.b16 %v2429, %v2427
        %v2484 = vpack.c.b16 %v2432, %v2430
        %v2485 = vpack.c.b16 %v2433, %v2431
        %v2486 = vpack.c.b16 %v2436, %v2434
        %v2487 = vpack.c.b16 %v2437, %v2435
        %v2488 = vpack.c.b16 %v2440, %v2438
        %v2489 = vpack.c.b16 %v2441, %v2439
        %v2490 = vpack.c.b16 %v2444, %v2442
        %v2491 = vpack.c.b16 %v2445, %v2443
        %v2492 = vpack.c.b16 %v2448, %v2446
        %v2493 = vpack.c.b16 %v2449, %v2447
        %v2494 = vpack.c.b16 %v2452, %v2450
        %v2495 = vpack.c.b16 %v2453, %v2451
        %v2496 = vpack.c.b16 %v2456, %v2454
        %v2497 = vpack.c.b16 %v2457, %v2455
        %v2498 = vpack.c.b16 %v2460, %v2458
        %v2499 = vpack.c.b16 %v2461, %v2459
        %v2500 = vpack.c.b16 %v2464, %v2462
        %v2501 = vpack.c.b16 %v2465, %v2463
        %v2502 = vpack.c.b16 %v2468, %v2466
        %v2503 = vpack.c.b16 %v2469, %v2467
        %v2504 = vpack.c.b16 %v2472, %v2470
        %v2505 = vpack.c.b16 %v2473, %v2471
        %2538 = vmatpush.bf16.msra.mxu0 %v2488
        %2539 = vmatpush.bf16.msra.mxu0 %v2486
        %2540 = vmatpush.bf16.msra.mxu0 %v2484
        %2541 = vmatpush.bf16.msra.mxu0 %v2482
        %2542 = vmatpush.bf16.msra.mxu0 %v2480
        %2543 = vmatpush.bf16.msra.mxu0 %v2478
        %2544 = vmatpush.bf16.msra.mxu0 %v2476
        %2545 = vmatpush.bf16.msra.mxu0 %v2474
        %2546 = vmatmul.bf16.gmra.mxu0 %v2045
        %v2547 = vpop.f32.mrf.mxu0
        %v2548 = vadd.f32 %v2346, %v2547
        %v2549 = vpop.f32.mrf.mxu0
        %v2550 = vadd.f32 %v2348, %v2549
        %2551 = vdwg.mxu0
        %2552 = vmatpush.bf16.msra.mxu0 %v2504
        %2553 = vmatpush.bf16.msra.mxu0 %v2502
        %2554 = vmatpush.bf16.msra.mxu0 %v2500
        %2555 = vmatpush.bf16.msra.mxu0 %v2498
        %2556 = vmatpush.bf16.msra.mxu0 %v2496
        %2557 = vmatpush.bf16.msra.mxu0 %v2494
        %2558 = vmatpush.bf16.msra.mxu0 %v2492
        %2559 = vmatpush.bf16.msra.mxu0 %v2490
        %2560 = vmatmul.bf16.gmra.mxu0 %v2046
        %v2561 = vpop.f32.mrf.mxu0
        %v2562 = vadd.f32 %v2548, %v2561
        %v2563 = vpop.f32.mrf.mxu0
        %v2564 = vadd.f32 %v2550, %v2563
        %2565 = vdwg.mxu0
        %2566 = vmatpush.bf16.msra.mxu0 %v2489
        %2567 = vmatpush.bf16.msra.mxu0 %v2487
        %2568 = vmatpush.bf16.msra.mxu0 %v2485
        %2569 = vmatpush.bf16.msra.mxu0 %v2483
        %2570 = vmatpush.bf16.msra.mxu0 %v2481
        %2571 = vmatpush.bf16.msra.mxu0 %v2479
        %2572 = vmatpush.bf16.msra.mxu0 %v2477
        %2573 = vmatpush.bf16.msra.mxu0 %v2475
        %2574 = vmatmul.bf16.gmra.mxu0 %v2045
        %v2575 = vpop.f32.mrf.mxu0
        %v2576 = vadd.f32 %v2374, %v2575
        %v2577 = vpop.f32.mrf.mxu0
        %v2578 = vadd.f32 %v2376, %v2577
        %2579 = vdwg.mxu0
        %2580 = vmatpush.bf16.msra.mxu0 %v2505
        %2581 = vmatpush.bf16.msra.mxu0 %v2503
        %2582 = vmatpush.bf16.msra.mxu0 %v2501
        %2583 = vmatpush.bf16.msra.mxu0 %v2499
        %2584 = vmatpush.bf16.msra.mxu0 %v2497
        %2585 = vmatpush.bf16.msra.mxu0 %v2495
        %2586 = vmatpush.bf16.msra.mxu0 %v2493
        %2587 = vmatpush.bf16.msra.mxu0 %v2491
        %2588 = vmatmul.bf16.gmra.mxu0 %v2046
        %v2589 = vpop.f32.mrf.mxu0
        %v2590 = vadd.f32 %v2576, %v2589
        %v2591 = vpop.f32.mrf.mxu0
        %v2592 = vadd.f32 %v2578, %v2591
        %2593 = vdwg.mxu0
        %v2594 = vadd.s32 %v1993, 2
        %v2595 = vadd.s32 %v1994, 2
        %v2596 = vsub.s32 %v2594, 1
        %v2597 = vsub.s32 %v2595, 1
        %vm2598 = vcmp.lt.s32.totalorder %v2596, 0
        %vm2599 = vcmp.lt.s32.totalorder %v2597, 0
        %v2600 = vsub.s32 0, %v2596
        %v2601 = vsub.s32 0, %v2597
        %v2602 = vsel %vm2598, %v2600, %v2596
        %v2603 = vsel %vm2599, %v2601, %v2597
        %vm2604 = vcmp.gt.s32.totalorder %v2602, 31
        %vm2605 = vcmp.gt.s32.totalorder %v2603, 31
        %v2606 = vsub.s32 62, %v2602
        %v2607 = vsub.s32 62, %v2603
        %v2608 = vsel %vm2604, %v2606, %v2602
        %v2609 = vsel %vm2605, %v2607, %v2603
        %vm2610 = vcmp.eq.s32.totalorder %v498, %v2608
        %vm2611 = vcmp.eq.s32.totalorder %v498, %v2609
        %v2612 = vsel %vm2610, 1.0, 0.0
        %v2613 = vsel %vm2611, 1.0, 0.0
        %v2614 = vpack.c.bf16 %v2613, %v2612
        %v2616 = vsel %vm549, %v2614, 0
        %2618 = vmatpush.bf16.msra.mxu0 0
        %2619 = vmatpush.bf16.msra.mxu0 0
        %2620 = vmatpush.bf16.msra.mxu0 0
        %2621 = vmatpush.bf16.msra.mxu0 0
        %2622 = vmatpush.bf16.msra.mxu0 0
        %2623 = vmatpush.bf16.msra.mxu0 0
        %2624 = vmatpush.bf16.msra.mxu0 %v1991
        %2625 = vmatpush.bf16.msra.mxu0 %v1989
        %2626 = vmatmul.bf16.gmra.mxu0 %v2616
        %v2627 = vpop.f32.mrf.mxu0
        %v2628 = vadd.f32 0.0, %v2627
        %v2629 = vpop.f32.mrf.mxu0
        %v2630 = vadd.f32 0.0, %v2629
        %2631 = vdwg.mxu0
        %2632 = vmatpush.bf16.msra.mxu0 0
        %2633 = vmatpush.bf16.msra.mxu0 0
        %2634 = vmatpush.bf16.msra.mxu0 0
        %2635 = vmatpush.bf16.msra.mxu0 0
        %2636 = vmatpush.bf16.msra.mxu0 0
        %2637 = vmatpush.bf16.msra.mxu0 0
        %2638 = vmatpush.bf16.msra.mxu0 %v1992
        %2639 = vmatpush.bf16.msra.mxu0 %v1990
        %2640 = vmatmul.bf16.gmra.mxu0 %v2616
        %v2641 = vpop.f32.mrf.mxu0
        %v2642 = vadd.f32 0.0, %v2641
        %v2643 = vpop.f32.mrf.mxu0
        %v2644 = vadd.f32 0.0, %v2643
        %2645 = vdwg.mxu0
        %v2646 = vpack.c.bf16 %v2630, %v2628
        %v2647 = vpack.c.bf16 %v2644, %v2642
        %s2648 = scalar_lea.vmem [#allocation4], 512
        %v2649 = vld [vmem:[%s2648] sm:$0xff]
        %v2650 = vld [vmem:[%s2648 + $0x8] sm:$0xff]
        %v2651 = vld [vmem:[%s2648 + $0x10] sm:$0xff]
        %v2652 = vld [vmem:[%s2648 + $0x18] sm:$0xff]
        %v2653 = vld [vmem:[%s2648 + $0x20] sm:$0xff]
        %v2654 = vld [vmem:[%s2648 + $0x28] sm:$0xff]
        %v2655 = vld [vmem:[%s2648 + $0x30] sm:$0xff]
        %v2656 = vld [vmem:[%s2648 + $0x38] sm:$0xff]
        %v2657 = vld [vmem:[%s2648 + $0x40] sm:$0xff]
        %v2658 = vld [vmem:[%s2648 + $0x48] sm:$0xff]
        %v2659 = vld [vmem:[%s2648 + $0x50] sm:$0xff]
        %v2660 = vld [vmem:[%s2648 + $0x58] sm:$0xff]
        %v2661 = vld [vmem:[%s2648 + $0x60] sm:$0xff]
        %v2662 = vld [vmem:[%s2648 + $0x68] sm:$0xff]
        %v2663 = vld [vmem:[%s2648 + $0x70] sm:$0xff]
        %v2664 = vld [vmem:[%s2648 + $0x78] sm:$0xff]
        %v2665 = vld [vmem:[%s2648 + $0x80] sm:$0xff]
        %v2666 = vld [vmem:[%s2648 + $0x88] sm:$0xff]
        %v2667 = vld [vmem:[%s2648 + $0x90] sm:$0xff]
        %v2668 = vld [vmem:[%s2648 + $0x98] sm:$0xff]
        %v2669 = vld [vmem:[%s2648 + $0xa0] sm:$0xff]
        %v2670 = vld [vmem:[%s2648 + $0xa8] sm:$0xff]
        %v2671 = vld [vmem:[%s2648 + $0xb0] sm:$0xff]
        %v2672 = vld [vmem:[%s2648 + $0xb8] sm:$0xff]
        %v2673 = vld [vmem:[%s2648 + $0xc0] sm:$0xff]
        %v2674 = vld [vmem:[%s2648 + $0xc8] sm:$0xff]
        %v2675 = vld [vmem:[%s2648 + $0xd0] sm:$0xff]
        %v2676 = vld [vmem:[%s2648 + $0xd8] sm:$0xff]
        %v2677 = vld [vmem:[%s2648 + $0xe0] sm:$0xff]
        %v2678 = vld [vmem:[%s2648 + $0xe8] sm:$0xff]
        %v2679 = vld [vmem:[%s2648 + $0xf0] sm:$0xff]
        %v2680 = vld [vmem:[%s2648 + $0xf8] sm:$0xff]
        %v2713 = vunpack.c.l.b16 %v2649
        %v2714 = vunpack.c.h.b16 %v2649
        %v2715 = vunpack.c.l.b16 %v2650
        %v2716 = vunpack.c.h.b16 %v2650
        %v2717 = vunpack.c.l.b16 %v2651
        %v2718 = vunpack.c.h.b16 %v2651
        %v2719 = vunpack.c.l.b16 %v2652
        %v2720 = vunpack.c.h.b16 %v2652
        %v2721 = vunpack.c.l.b16 %v2653
        %v2722 = vunpack.c.h.b16 %v2653
        %v2723 = vunpack.c.l.b16 %v2654
        %v2724 = vunpack.c.h.b16 %v2654
        %v2725 = vunpack.c.l.b16 %v2655
        %v2726 = vunpack.c.h.b16 %v2655
        %v2727 = vunpack.c.l.b16 %v2656
        %v2728 = vunpack.c.h.b16 %v2656
        %v2729 = vunpack.c.l.b16 %v2657
        %v2730 = vunpack.c.h.b16 %v2657
        %v2731 = vunpack.c.l.b16 %v2658
        %v2732 = vunpack.c.h.b16 %v2658
        %v2733 = vunpack.c.l.b16 %v2659
        %v2734 = vunpack.c.h.b16 %v2659
        %v2735 = vunpack.c.l.b16 %v2660
        %v2736 = vunpack.c.h.b16 %v2660
        %v2737 = vunpack.c.l.b16 %v2661
        %v2738 = vunpack.c.h.b16 %v2661
        %v2739 = vunpack.c.l.b16 %v2662
        %v2740 = vunpack.c.h.b16 %v2662
        %v2741 = vunpack.c.l.b16 %v2663
        %v2742 = vunpack.c.h.b16 %v2663
        %v2743 = vunpack.c.l.b16 %v2664
        %v2744 = vunpack.c.h.b16 %v2664
        %v2745 = vunpack.c.l.b16 %v2665
        %v2746 = vunpack.c.h.b16 %v2665
        %v2747 = vunpack.c.l.b16 %v2666
        %v2748 = vunpack.c.h.b16 %v2666
        %v2749 = vunpack.c.l.b16 %v2667
        %v2750 = vunpack.c.h.b16 %v2667
        %v2751 = vunpack.c.l.b16 %v2668
        %v2752 = vunpack.c.h.b16 %v2668
        %v2753 = vunpack.c.l.b16 %v2669
        %v2754 = vunpack.c.h.b16 %v2669
        %v2755 = vunpack.c.l.b16 %v2670
        %v2756 = vunpack.c.h.b16 %v2670
        %v2757 = vunpack.c.l.b16 %v2671
        %v2758 = vunpack.c.h.b16 %v2671
        %v2759 = vunpack.c.l.b16 %v2672
        %v2760 = vunpack.c.h.b16 %v2672
        %v2761 = vunpack.c.l.b16 %v2673
        %v2762 = vunpack.c.h.b16 %v2673
        %v2763 = vunpack.c.l.b16 %v2674
        %v2764 = vunpack.c.h.b16 %v2674
        %v2765 = vunpack.c.l.b16 %v2675
        %v2766 = vunpack.c.h.b16 %v2675
        %v2767 = vunpack.c.l.b16 %v2676
        %v2768 = vunpack.c.h.b16 %v2676
        %v2769 = vunpack.c.l.b16 %v2677
        %v2770 = vunpack.c.h.b16 %v2677
        %v2771 = vunpack.c.l.b16 %v2678
        %v2772 = vunpack.c.h.b16 %v2678
        %v2773 = vunpack.c.l.b16 %v2679
        %v2774 = vunpack.c.h.b16 %v2679
        %v2775 = vunpack.c.l.b16 %v2680
        %v2776 = vunpack.c.h.b16 %v2680
        %v2777 = vpack.c.b16 %v2715, %v2713
        %v2778 = vpack.c.b16 %v2716, %v2714
        %v2779 = vpack.c.b16 %v2719, %v2717
        %v2780 = vpack.c.b16 %v2720, %v2718
        %v2781 = vpack.c.b16 %v2723, %v2721
        %v2782 = vpack.c.b16 %v2724, %v2722
        %v2783 = vpack.c.b16 %v2727, %v2725
        %v2784 = vpack.c.b16 %v2728, %v2726
        %v2785 = vpack.c.b16 %v2731, %v2729
        %v2786 = vpack.c.b16 %v2732, %v2730
        %v2787 = vpack.c.b16 %v2735, %v2733
        %v2788 = vpack.c.b16 %v2736, %v2734
        %v2789 = vpack.c.b16 %v2739, %v2737
        %v2790 = vpack.c.b16 %v2740, %v2738
        %v2791 = vpack.c.b16 %v2743, %v2741
        %v2792 = vpack.c.b16 %v2744, %v2742
        %v2793 = vpack.c.b16 %v2747, %v2745
        %v2794 = vpack.c.b16 %v2748, %v2746
        %v2795 = vpack.c.b16 %v2751, %v2749
        %v2796 = vpack.c.b16 %v2752, %v2750
        %v2797 = vpack.c.b16 %v2755, %v2753
        %v2798 = vpack.c.b16 %v2756, %v2754
        %v2799 = vpack.c.b16 %v2759, %v2757
        %v2800 = vpack.c.b16 %v2760, %v2758
        %v2801 = vpack.c.b16 %v2763, %v2761
        %v2802 = vpack.c.b16 %v2764, %v2762
        %v2803 = vpack.c.b16 %v2767, %v2765
        %v2804 = vpack.c.b16 %v2768, %v2766
        %v2805 = vpack.c.b16 %v2771, %v2769
        %v2806 = vpack.c.b16 %v2772, %v2770
        %v2807 = vpack.c.b16 %v2775, %v2773
        %v2808 = vpack.c.b16 %v2776, %v2774
        %2841 = vmatpush.bf16.msra.mxu0 %v2791
        %2842 = vmatpush.bf16.msra.mxu0 %v2789
        %2843 = vmatpush.bf16.msra.mxu0 %v2787
        %2844 = vmatpush.bf16.msra.mxu0 %v2785
        %2845 = vmatpush.bf16.msra.mxu0 %v2783
        %2846 = vmatpush.bf16.msra.mxu0 %v2781
        %2847 = vmatpush.bf16.msra.mxu0 %v2779
        %2848 = vmatpush.bf16.msra.mxu0 %v2777
        %2849 = vmatmul.bf16.gmra.mxu0 %v2646
        %v2850 = vpop.f32.mrf.mxu0
        %v2851 = vadd.f32 0.0, %v2850
        %v2852 = vpop.f32.mrf.mxu0
        %v2853 = vadd.f32 0.0, %v2852
        %2854 = vdwg.mxu0
        %2855 = vmatpush.bf16.msra.mxu0 %v2807
        %2856 = vmatpush.bf16.msra.mxu0 %v2805
        %2857 = vmatpush.bf16.msra.mxu0 %v2803
        %2858 = vmatpush.bf16.msra.mxu0 %v2801
        %2859 = vmatpush.bf16.msra.mxu0 %v2799
        %2860 = vmatpush.bf16.msra.mxu0 %v2797
        %2861 = vmatpush.bf16.msra.mxu0 %v2795
        %2862 = vmatpush.bf16.msra.mxu0 %v2793
        %2863 = vmatmul.bf16.gmra.mxu0 %v2647
        %v2864 = vpop.f32.mrf.mxu0
        %v2865 = vadd.f32 %v2851, %v2864
        %v2866 = vpop.f32.mrf.mxu0
        %v2867 = vadd.f32 %v2853, %v2866
        %2868 = vdwg.mxu0
        %2869 = vmatpush.bf16.msra.mxu0 %v2792
        %2870 = vmatpush.bf16.msra.mxu0 %v2790
        %2871 = vmatpush.bf16.msra.mxu0 %v2788
        %2872 = vmatpush.bf16.msra.mxu0 %v2786
        %2873 = vmatpush.bf16.msra.mxu0 %v2784
        %2874 = vmatpush.bf16.msra.mxu0 %v2782
        %2875 = vmatpush.bf16.msra.mxu0 %v2780
        %2876 = vmatpush.bf16.msra.mxu0 %v2778
        %2877 = vmatmul.bf16.gmra.mxu0 %v2646
        %v2878 = vpop.f32.mrf.mxu0
        %v2879 = vadd.f32 0.0, %v2878
        %v2880 = vpop.f32.mrf.mxu0
        %v2881 = vadd.f32 0.0, %v2880
        %2882 = vdwg.mxu0
        %2883 = vmatpush.bf16.msra.mxu0 %v2808
        %2884 = vmatpush.bf16.msra.mxu0 %v2806
        %2885 = vmatpush.bf16.msra.mxu0 %v2804
        %2886 = vmatpush.bf16.msra.mxu0 %v2802
        %2887 = vmatpush.bf16.msra.mxu0 %v2800
        %2888 = vmatpush.bf16.msra.mxu0 %v2798
        %2889 = vmatpush.bf16.msra.mxu0 %v2796
        %2890 = vmatpush.bf16.msra.mxu0 %v2794
        %2891 = vmatmul.bf16.gmra.mxu0 %v2647
        %v2892 = vpop.f32.mrf.mxu0
        %v2893 = vadd.f32 %v2879, %v2892
        %v2894 = vpop.f32.mrf.mxu0
        %v2895 = vadd.f32 %v2881, %v2894
        %2896 = vdwg.mxu0
        %v2897 = vadd.f32 %v2562, %v2865
        %v2898 = vadd.f32 %v2590, %v2893
        %v2899 = vadd.f32 %v2564, %v2867
        %v2900 = vadd.f32 %v2592, %v2895
        %v2901 = vadd.s32 %v1993, 3
        %v2902 = vadd.s32 %v1994, 3
        %v2903 = vsub.s32 %v2901, 1
        %v2904 = vsub.s32 %v2902, 1
        %vm2905 = vcmp.lt.s32.totalorder %v2903, 0
        %vm2906 = vcmp.lt.s32.totalorder %v2904, 0
        %v2907 = vsub.s32 0, %v2903
        %v2908 = vsub.s32 0, %v2904
        %v2909 = vsel %vm2905, %v2907, %v2903
        %v2910 = vsel %vm2906, %v2908, %v2904
        %vm2911 = vcmp.gt.s32.totalorder %v2909, 31
        %vm2912 = vcmp.gt.s32.totalorder %v2910, 31
        %v2913 = vsub.s32 62, %v2909
        %v2914 = vsub.s32 62, %v2910
        %v2915 = vsel %vm2911, %v2913, %v2909
        %v2916 = vsel %vm2912, %v2914, %v2910
        %vm2917 = vcmp.eq.s32.totalorder %v498, %v2915
        %vm2918 = vcmp.eq.s32.totalorder %v498, %v2916
        %v2919 = vsel %vm2917, 1.0, 0.0
        %v2920 = vsel %vm2918, 1.0, 0.0
        %v2921 = vpack.c.bf16 %v2920, %v2919
        %v2923 = vsel %vm549, %v2921, 0
        %2925 = vmatpush.bf16.msra.mxu0 0
        %2926 = vmatpush.bf16.msra.mxu0 0
        %2927 = vmatpush.bf16.msra.mxu0 0
        %2928 = vmatpush.bf16.msra.mxu0 0
        %2929 = vmatpush.bf16.msra.mxu0 0
        %2930 = vmatpush.bf16.msra.mxu0 0
        %2931 = vmatpush.bf16.msra.mxu0 %v1991
        %2932 = vmatpush.bf16.msra.mxu0 %v1989
        %2933 = vmatmul.bf16.gmra.mxu0 %v2923
        %v2934 = vpop.f32.mrf.mxu0
        %v2935 = vadd.f32 0.0, %v2934
        %v2936 = vpop.f32.mrf.mxu0
        %v2937 = vadd.f32 0.0, %v2936
        %2938 = vdwg.mxu0
        %2939 = vmatpush.bf16.msra.mxu0 0
        %2940 = vmatpush.bf16.msra.mxu0 0
        %2941 = vmatpush.bf16.msra.mxu0 0
        %2942 = vmatpush.bf16.msra.mxu0 0
        %2943 = vmatpush.bf16.msra.mxu0 0
        %2944 = vmatpush.bf16.msra.mxu0 0
        %2945 = vmatpush.bf16.msra.mxu0 %v1992
        %2946 = vmatpush.bf16.msra.mxu0 %v1990
        %2947 = vmatmul.bf16.gmra.mxu0 %v2923
        %v2948 = vpop.f32.mrf.mxu0
        %v2949 = vadd.f32 0.0, %v2948
        %v2950 = vpop.f32.mrf.mxu0
        %v2951 = vadd.f32 0.0, %v2950
        %2952 = vdwg.mxu0
        %v2953 = vpack.c.bf16 %v2937, %v2935
        %v2954 = vpack.c.bf16 %v2951, %v2949
        %s2955 = scalar_lea.vmem [#allocation4], 768
        %v2956 = vld [vmem:[%s2955] sm:$0xff]
        %v2957 = vld [vmem:[%s2955 + $0x8] sm:$0xff]
        %v2958 = vld [vmem:[%s2955 + $0x10] sm:$0xff]
        %v2959 = vld [vmem:[%s2955 + $0x18] sm:$0xff]
        %v2960 = vld [vmem:[%s2955 + $0x20] sm:$0xff]
        %v2961 = vld [vmem:[%s2955 + $0x28] sm:$0xff]
        %v2962 = vld [vmem:[%s2955 + $0x30] sm:$0xff]
        %v2963 = vld [vmem:[%s2955 + $0x38] sm:$0xff]
        %v2964 = vld [vmem:[%s2955 + $0x40] sm:$0xff]
        %v2965 = vld [vmem:[%s2955 + $0x48] sm:$0xff]
        %v2966 = vld [vmem:[%s2955 + $0x50] sm:$0xff]
        %v2967 = vld [vmem:[%s2955 + $0x58] sm:$0xff]
        %v2968 = vld [vmem:[%s2955 + $0x60] sm:$0xff]
        %v2969 = vld [vmem:[%s2955 + $0x68] sm:$0xff]
        %v2970 = vld [vmem:[%s2955 + $0x70] sm:$0xff]
        %v2971 = vld [vmem:[%s2955 + $0x78] sm:$0xff]
        %v2972 = vld [vmem:[%s2955 + $0x80] sm:$0xff]
        %v2973 = vld [vmem:[%s2955 + $0x88] sm:$0xff]
        %v2974 = vld [vmem:[%s2955 + $0x90] sm:$0xff]
        %v2975 = vld [vmem:[%s2955 + $0x98] sm:$0xff]
        %v2976 = vld [vmem:[%s2955 + $0xa0] sm:$0xff]
        %v2977 = vld [vmem:[%s2955 + $0xa8] sm:$0xff]
        %v2978 = vld [vmem:[%s2955 + $0xb0] sm:$0xff]
        %v2979 = vld [vmem:[%s2955 + $0xb8] sm:$0xff]
        %v2980 = vld [vmem:[%s2955 + $0xc0] sm:$0xff]
        %v2981 = vld [vmem:[%s2955 + $0xc8] sm:$0xff]
        %v2982 = vld [vmem:[%s2955 + $0xd0] sm:$0xff]
        %v2983 = vld [vmem:[%s2955 + $0xd8] sm:$0xff]
        %v2984 = vld [vmem:[%s2955 + $0xe0] sm:$0xff]
        %v2985 = vld [vmem:[%s2955 + $0xe8] sm:$0xff]
        %v2986 = vld [vmem:[%s2955 + $0xf0] sm:$0xff]
        %v2987 = vld [vmem:[%s2955 + $0xf8] sm:$0xff]
        %v3020 = vunpack.c.l.b16 %v2956
        %v3021 = vunpack.c.h.b16 %v2956
        %v3022 = vunpack.c.l.b16 %v2957
        %v3023 = vunpack.c.h.b16 %v2957
        %v3024 = vunpack.c.l.b16 %v2958
        %v3025 = vunpack.c.h.b16 %v2958
        %v3026 = vunpack.c.l.b16 %v2959
        %v3027 = vunpack.c.h.b16 %v2959
        %v3028 = vunpack.c.l.b16 %v2960
        %v3029 = vunpack.c.h.b16 %v2960
        %v3030 = vunpack.c.l.b16 %v2961
        %v3031 = vunpack.c.h.b16 %v2961
        %v3032 = vunpack.c.l.b16 %v2962
        %v3033 = vunpack.c.h.b16 %v2962
        %v3034 = vunpack.c.l.b16 %v2963
        %v3035 = vunpack.c.h.b16 %v2963
        %v3036 = vunpack.c.l.b16 %v2964
        %v3037 = vunpack.c.h.b16 %v2964
        %v3038 = vunpack.c.l.b16 %v2965
        %v3039 = vunpack.c.h.b16 %v2965
        %v3040 = vunpack.c.l.b16 %v2966
        %v3041 = vunpack.c.h.b16 %v2966
        %v3042 = vunpack.c.l.b16 %v2967
        %v3043 = vunpack.c.h.b16 %v2967
        %v3044 = vunpack.c.l.b16 %v2968
        %v3045 = vunpack.c.h.b16 %v2968
        %v3046 = vunpack.c.l.b16 %v2969
        %v3047 = vunpack.c.h.b16 %v2969
        %v3048 = vunpack.c.l.b16 %v2970
        %v3049 = vunpack.c.h.b16 %v2970
        %v3050 = vunpack.c.l.b16 %v2971
        %v3051 = vunpack.c.h.b16 %v2971
        %v3052 = vunpack.c.l.b16 %v2972
        %v3053 = vunpack.c.h.b16 %v2972
        %v3054 = vunpack.c.l.b16 %v2973
        %v3055 = vunpack.c.h.b16 %v2973
        %v3056 = vunpack.c.l.b16 %v2974
        %v3057 = vunpack.c.h.b16 %v2974
        %v3058 = vunpack.c.l.b16 %v2975
        %v3059 = vunpack.c.h.b16 %v2975
        %v3060 = vunpack.c.l.b16 %v2976
        %v3061 = vunpack.c.h.b16 %v2976
        %v3062 = vunpack.c.l.b16 %v2977
        %v3063 = vunpack.c.h.b16 %v2977
        %v3064 = vunpack.c.l.b16 %v2978
        %v3065 = vunpack.c.h.b16 %v2978
        %v3066 = vunpack.c.l.b16 %v2979
        %v3067 = vunpack.c.h.b16 %v2979
        %v3068 = vunpack.c.l.b16 %v2980
        %v3069 = vunpack.c.h.b16 %v2980
        %v3070 = vunpack.c.l.b16 %v2981
        %v3071 = vunpack.c.h.b16 %v2981
        %v3072 = vunpack.c.l.b16 %v2982
        %v3073 = vunpack.c.h.b16 %v2982
        %v3074 = vunpack.c.l.b16 %v2983
        %v3075 = vunpack.c.h.b16 %v2983
        %v3076 = vunpack.c.l.b16 %v2984
        %v3077 = vunpack.c.h.b16 %v2984
        %v3078 = vunpack.c.l.b16 %v2985
        %v3079 = vunpack.c.h.b16 %v2985
        %v3080 = vunpack.c.l.b16 %v2986
        %v3081 = vunpack.c.h.b16 %v2986
        %v3082 = vunpack.c.l.b16 %v2987
        %v3083 = vunpack.c.h.b16 %v2987
        %v3084 = vpack.c.b16 %v3022, %v3020
        %v3085 = vpack.c.b16 %v3023, %v3021
        %v3086 = vpack.c.b16 %v3026, %v3024
        %v3087 = vpack.c.b16 %v3027, %v3025
        %v3088 = vpack.c.b16 %v3030, %v3028
        %v3089 = vpack.c.b16 %v3031, %v3029
        %v3090 = vpack.c.b16 %v3034, %v3032
        %v3091 = vpack.c.b16 %v3035, %v3033
        %v3092 = vpack.c.b16 %v3038, %v3036
        %v3093 = vpack.c.b16 %v3039, %v3037
        %v3094 = vpack.c.b16 %v3042, %v3040
        %v3095 = vpack.c.b16 %v3043, %v3041
        %v3096 = vpack.c.b16 %v3046, %v3044
        %v3097 = vpack.c.b16 %v3047, %v3045
        %v3098 = vpack.c.b16 %v3050, %v3048
        %v3099 = vpack.c.b16 %v3051, %v3049
        %v3100 = vpack.c.b16 %v3054, %v3052
        %v3101 = vpack.c.b16 %v3055, %v3053
        %v3102 = vpack.c.b16 %v3058, %v3056
        %v3103 = vpack.c.b16 %v3059, %v3057
        %v3104 = vpack.c.b16 %v3062, %v3060
        %v3105 = vpack.c.b16 %v3063, %v3061
        %v3106 = vpack.c.b16 %v3066, %v3064
        %v3107 = vpack.c.b16 %v3067, %v3065
        %v3108 = vpack.c.b16 %v3070, %v3068
        %v3109 = vpack.c.b16 %v3071, %v3069
        %v3110 = vpack.c.b16 %v3074, %v3072
        %v3111 = vpack.c.b16 %v3075, %v3073
        %v3112 = vpack.c.b16 %v3078, %v3076
        %v3113 = vpack.c.b16 %v3079, %v3077
        %v3114 = vpack.c.b16 %v3082, %v3080
        %v3115 = vpack.c.b16 %v3083, %v3081
        %3148 = vmatpush.bf16.msra.mxu0 %v3098
        %3149 = vmatpush.bf16.msra.mxu0 %v3096
        %3150 = vmatpush.bf16.msra.mxu0 %v3094
        %3151 = vmatpush.bf16.msra.mxu0 %v3092
        %3152 = vmatpush.bf16.msra.mxu0 %v3090
        %3153 = vmatpush.bf16.msra.mxu0 %v3088
        %3154 = vmatpush.bf16.msra.mxu0 %v3086
        %3155 = vmatpush.bf16.msra.mxu0 %v3084
        %3156 = vmatmul.bf16.gmra.mxu0 %v2953
        %v3157 = vpop.f32.mrf.mxu0
        %v3158 = vadd.f32 0.0, %v3157
        %v3159 = vpop.f32.mrf.mxu0
        %v3160 = vadd.f32 0.0, %v3159
        %3161 = vdwg.mxu0
        %3162 = vmatpush.bf16.msra.mxu0 %v3114
        %3163 = vmatpush.bf16.msra.mxu0 %v3112
        %3164 = vmatpush.bf16.msra.mxu0 %v3110
        %3165 = vmatpush.bf16.msra.mxu0 %v3108
        %3166 = vmatpush.bf16.msra.mxu0 %v3106
        %3167 = vmatpush.bf16.msra.mxu0 %v3104
        %3168 = vmatpush.bf16.msra.mxu0 %v3102
        %3169 = vmatpush.bf16.msra.mxu0 %v3100
        %3170 = vmatmul.bf16.gmra.mxu0 %v2954
        %v3171 = vpop.f32.mrf.mxu0
        %v3172 = vadd.f32 %v3158, %v3171
        %v3173 = vpop.f32.mrf.mxu0
        %v3174 = vadd.f32 %v3160, %v3173
        %3175 = vdwg.mxu0
        %3176 = vmatpush.bf16.msra.mxu0 %v3099
        %3177 = vmatpush.bf16.msra.mxu0 %v3097
        %3178 = vmatpush.bf16.msra.mxu0 %v3095
        %3179 = vmatpush.bf16.msra.mxu0 %v3093
        %3180 = vmatpush.bf16.msra.mxu0 %v3091
        %3181 = vmatpush.bf16.msra.mxu0 %v3089
        %3182 = vmatpush.bf16.msra.mxu0 %v3087
        %3183 = vmatpush.bf16.msra.mxu0 %v3085
        %3184 = vmatmul.bf16.gmra.mxu0 %v2953
        %v3185 = vpop.f32.mrf.mxu0
        %v3186 = vadd.f32 0.0, %v3185
        %v3187 = vpop.f32.mrf.mxu0
        %v3188 = vadd.f32 0.0, %v3187
        %3189 = vdwg.mxu0
        %3190 = vmatpush.bf16.msra.mxu0 %v3115
        %3191 = vmatpush.bf16.msra.mxu0 %v3113
        %3192 = vmatpush.bf16.msra.mxu0 %v3111
        %3193 = vmatpush.bf16.msra.mxu0 %v3109
        %3194 = vmatpush.bf16.msra.mxu0 %v3107
        %3195 = vmatpush.bf16.msra.mxu0 %v3105
        %3196 = vmatpush.bf16.msra.mxu0 %v3103
        %3197 = vmatpush.bf16.msra.mxu0 %v3101
        %3198 = vmatmul.bf16.gmra.mxu0 %v2954
        %v3199 = vpop.f32.mrf.mxu0
        %v3200 = vadd.f32 %v3186, %v3199
        %v3201 = vpop.f32.mrf.mxu0
        %v3202 = vadd.f32 %v3188, %v3201
        %3203 = vdwg.mxu0
        %v3204 = vadd.f32 %v2897, %v3172
        %v3205 = vadd.f32 %v2898, %v3200
        %v3206 = vadd.f32 %v2899, %v3174
        %v3207 = vadd.f32 %v2900, %v3202
        %v3208 = vld [vmem:[%s7] sm:$0x3]
        %v3210 = vperm.slane %v3208, 0
        %v3211 = vperm.slane %v3208, 1
        %v3214 = vadd.f32 %v3204, %v3210
        %v3215 = vadd.f32 %v3205, %v3211
        %v3216 = vadd.f32 %v3206, %v3210
        %v3217 = vadd.f32 %v3207, %v3211
        %v3218 = vmax.f32 %v3214, 0.0
        %v3219 = vmax.f32 %v3215, 0.0
        %v3220 = vmax.f32 %v3216, 0.0
        %v3221 = vmax.f32 %v3217, 0.0
        %v3222 = vpack.c.bf16 %v3220, %v3218
        %v3223 = vpack.c.bf16 %v3221, %v3219
        %vm3224 = vcmp.gt.s32.totalorder %v2001, 15
        %v3225 = vsub.s32 30, %v2001
        %v3226 = vsel %vm3224, %v3225, %v2001
        %vm3227 = vcmp.eq.s32.totalorder %v498, %v3226
        %v3228 = vsel %vm3227, 1.0, 0.0
        %v3229 = vpack.c.bf16 %v3228, %v3228
        %vm3230 = vcmask 130048
        %v3232 = vsel %vm3230, %v3229, 0
        %3234 = vmatpush.bf16.msra.mxu0 0
        %3235 = vmatpush.bf16.msra.mxu0 0
        %3236 = vmatpush.bf16.msra.mxu0 0
        %3237 = vmatpush.bf16.msra.mxu0 0
        %3238 = vmatpush.bf16.msra.mxu0 0
        %3239 = vmatpush.bf16.msra.mxu0 0
        %3240 = vmatpush.bf16.msra.mxu0 0
        %3241 = vmatpush.bf16.msra.mxu0 %v3222
        %3242 = vmatmul.bf16.gmra.mxu0 %v3232
        %v3243 = vpop.f32.mrf.mxu0
        %v3244 = vadd.f32 0.0, %v3243
        %v3245 = vpop.f32.mrf.mxu0
        %3246 = vdwg.mxu0
        %3247 = vmatpush.bf16.msra.mxu0 0
        %3248 = vmatpush.bf16.msra.mxu0 0
        %3249 = vmatpush.bf16.msra.mxu0 0
        %3250 = vmatpush.bf16.msra.mxu0 0
        %3251 = vmatpush.bf16.msra.mxu0 0
        %3252 = vmatpush.bf16.msra.mxu0 0
        %3253 = vmatpush.bf16.msra.mxu0 0
        %3254 = vmatpush.bf16.msra.mxu0 %v3223
        %3255 = vmatmul.bf16.gmra.mxu0 %v3232
        %v3256 = vpop.f32.mrf.mxu0
        %v3257 = vadd.f32 0.0, %v3256
        %v3258 = vpop.f32.mrf.mxu0
        %3259 = vdwg.mxu0
        %v3260 = vpack.c.bf16 %v3244, %v3244
        %v3261 = vpack.c.bf16 %v3257, %v3257
        %v3262 = vld [vmem:[#allocation6] sm:$0xff]
        %v3263 = vld [vmem:[#allocation6 + $0x8] sm:$0xff]
        %v3264 = vld [vmem:[#allocation6 + $0x10] sm:$0xff]
        %v3265 = vld [vmem:[#allocation6 + $0x18] sm:$0xff]
        %v3266 = vld [vmem:[#allocation6 + $0x20] sm:$0xff]
        %v3267 = vld [vmem:[#allocation6 + $0x28] sm:$0xff]
        %v3268 = vld [vmem:[#allocation6 + $0x30] sm:$0xff]
        %v3269 = vld [vmem:[#allocation6 + $0x38] sm:$0xff]
        %v3270 = vld [vmem:[#allocation6 + $0x40] sm:$0xff]
        %v3271 = vld [vmem:[#allocation6 + $0x48] sm:$0xff]
        %v3272 = vld [vmem:[#allocation6 + $0x50] sm:$0xff]
        %v3273 = vld [vmem:[#allocation6 + $0x58] sm:$0xff]
        %v3274 = vld [vmem:[#allocation6 + $0x60] sm:$0xff]
        %v3275 = vld [vmem:[#allocation6 + $0x68] sm:$0xff]
        %v3276 = vld [vmem:[#allocation6 + $0x70] sm:$0xff]
        %v3277 = vld [vmem:[#allocation6 + $0x78] sm:$0xff]
        %v3278 = vld [vmem:[#allocation6 + $0x80] sm:$0xff]
        %v3279 = vld [vmem:[#allocation6 + $0x88] sm:$0xff]
        %v3280 = vld [vmem:[#allocation6 + $0x90] sm:$0xff]
        %v3281 = vld [vmem:[#allocation6 + $0x98] sm:$0xff]
        %v3282 = vld [vmem:[#allocation6 + $0xa0] sm:$0xff]
        %v3283 = vld [vmem:[#allocation6 + $0xa8] sm:$0xff]
        %v3284 = vld [vmem:[#allocation6 + $0xb0] sm:$0xff]
        %v3285 = vld [vmem:[#allocation6 + $0xb8] sm:$0xff]
        %v3286 = vld [vmem:[#allocation6 + $0xc0] sm:$0xff]
        %v3287 = vld [vmem:[#allocation6 + $0xc8] sm:$0xff]
        %v3288 = vld [vmem:[#allocation6 + $0xd0] sm:$0xff]
        %v3289 = vld [vmem:[#allocation6 + $0xd8] sm:$0xff]
        %v3290 = vld [vmem:[#allocation6 + $0xe0] sm:$0xff]
        %v3291 = vld [vmem:[#allocation6 + $0xe8] sm:$0xff]
        %v3292 = vld [vmem:[#allocation6 + $0xf0] sm:$0xff]
        %v3293 = vld [vmem:[#allocation6 + $0xf8] sm:$0xff]
        %vm3294 = vcmp.gt.s32.totalorder %v2083, 15
        %v3295 = vsub.s32 30, %v2083
        %v3296 = vsel %vm3294, %v3295, %v2083
        %vm3297 = vcmp.eq.s32.totalorder %v498, %v3296
        %v3298 = vsel %vm3297, 1.0, 0.0
        %v3299 = vpack.c.bf16 %v3298, %v3298
        %v3301 = vsel %vm3230, %v3299, 0
        %3303 = vmatpush.bf16.msra.mxu0 0
        %3304 = vmatpush.bf16.msra.mxu0 0
        %3305 = vmatpush.bf16.msra.mxu0 0
        %3306 = vmatpush.bf16.msra.mxu0 0
        %3307 = vmatpush.bf16.msra.mxu0 0
        %3308 = vmatpush.bf16.msra.mxu0 0
        %3309 = vmatpush.bf16.msra.mxu0 0
        %3310 = vmatpush.bf16.msra.mxu0 %v3222
        %3311 = vmatmul.bf16.gmra.mxu0 %v3301
        %v3312 = vpop.f32.mrf.mxu0
        %v3313 = vadd.f32 0.0, %v3312
        %v3314 = vpop.f32.mrf.mxu0
        %3315 = vdwg.mxu0
        %3316 = vmatpush.bf16.msra.mxu0 0
        %3317 = vmatpush.bf16.msra.mxu0 0
        %3318 = vmatpush.bf16.msra.mxu0 0
        %3319 = vmatpush.bf16.msra.mxu0 0
        %3320 = vmatpush.bf16.msra.mxu0 0
        %3321 = vmatpush.bf16.msra.mxu0 0
        %3322 = vmatpush.bf16.msra.mxu0 0
        %3323 = vmatpush.bf16.msra.mxu0 %v3223
        %3324 = vmatmul.bf16.gmra.mxu0 %v3301
        %v3325 = vpop.f32.mrf.mxu0
        %v3326 = vadd.f32 0.0, %v3325
        %v3327 = vpop.f32.mrf.mxu0
        %3328 = vdwg.mxu0
        %v3329 = vpack.c.bf16 %v3313, %v3313
        %v3330 = vpack.c.bf16 %v3326, %v3326
        %s3331 = scalar_lea.vmem [#allocation6], 256
        %v3332 = vld [vmem:[%s3331] sm:$0xff]
        %v3333 = vld [vmem:[%s3331 + $0x8] sm:$0xff]
        %v3334 = vld [vmem:[%s3331 + $0x10] sm:$0xff]
        %v3335 = vld [vmem:[%s3331 + $0x18] sm:$0xff]
        %v3336 = vld [vmem:[%s3331 + $0x20] sm:$0xff]
        %v3337 = vld [vmem:[%s3331 + $0x28] sm:$0xff]
        %v3338 = vld [vmem:[%s3331 + $0x30] sm:$0xff]
        %v3339 = vld [vmem:[%s3331 + $0x38] sm:$0xff]
        %v3340 = vld [vmem:[%s3331 + $0x40] sm:$0xff]
        %v3341 = vld [vmem:[%s3331 + $0x48] sm:$0xff]
        %v3342 = vld [vmem:[%s3331 + $0x50] sm:$0xff]
        %v3343 = vld [vmem:[%s3331 + $0x58] sm:$0xff]
        %v3344 = vld [vmem:[%s3331 + $0x60] sm:$0xff]
        %v3345 = vld [vmem:[%s3331 + $0x68] sm:$0xff]
        %v3346 = vld [vmem:[%s3331 + $0x70] sm:$0xff]
        %v3347 = vld [vmem:[%s3331 + $0x78] sm:$0xff]
        %v3348 = vld [vmem:[%s3331 + $0x80] sm:$0xff]
        %v3349 = vld [vmem:[%s3331 + $0x88] sm:$0xff]
        %v3350 = vld [vmem:[%s3331 + $0x90] sm:$0xff]
        %v3351 = vld [vmem:[%s3331 + $0x98] sm:$0xff]
        %v3352 = vld [vmem:[%s3331 + $0xa0] sm:$0xff]
        %v3353 = vld [vmem:[%s3331 + $0xa8] sm:$0xff]
        %v3354 = vld [vmem:[%s3331 + $0xb0] sm:$0xff]
        %v3355 = vld [vmem:[%s3331 + $0xb8] sm:$0xff]
        %v3356 = vld [vmem:[%s3331 + $0xc0] sm:$0xff]
        %v3357 = vld [vmem:[%s3331 + $0xc8] sm:$0xff]
        %v3358 = vld [vmem:[%s3331 + $0xd0] sm:$0xff]
        %v3359 = vld [vmem:[%s3331 + $0xd8] sm:$0xff]
        %v3360 = vld [vmem:[%s3331 + $0xe0] sm:$0xff]
        %v3361 = vld [vmem:[%s3331 + $0xe8] sm:$0xff]
        %v3362 = vld [vmem:[%s3331 + $0xf0] sm:$0xff]
        %v3363 = vld [vmem:[%s3331 + $0xf8] sm:$0xff]
        %v3396 = vunpack.c.l.b16 %v3332
        %v3397 = vunpack.c.h.b16 %v3332
        %v3398 = vunpack.c.l.b16 %v3333
        %v3399 = vunpack.c.h.b16 %v3333
        %v3400 = vunpack.c.l.b16 %v3334
        %v3401 = vunpack.c.h.b16 %v3334
        %v3402 = vunpack.c.l.b16 %v3335
        %v3403 = vunpack.c.h.b16 %v3335
        %v3404 = vunpack.c.l.b16 %v3336
        %v3405 = vunpack.c.h.b16 %v3336
        %v3406 = vunpack.c.l.b16 %v3337
        %v3407 = vunpack.c.h.b16 %v3337
        %v3408 = vunpack.c.l.b16 %v3338
        %v3409 = vunpack.c.h.b16 %v3338
        %v3410 = vunpack.c.l.b16 %v3339
        %v3411 = vunpack.c.h.b16 %v3339
        %v3412 = vunpack.c.l.b16 %v3340
        %v3413 = vunpack.c.h.b16 %v3340
        %v3414 = vunpack.c.l.b16 %v3341
        %v3415 = vunpack.c.h.b16 %v3341
        %v3416 = vunpack.c.l.b16 %v3342
        %v3417 = vunpack.c.h.b16 %v3342
        %v3418 = vunpack.c.l.b16 %v3343
        %v3419 = vunpack.c.h.b16 %v3343
        %v3420 = vunpack.c.l.b16 %v3344
        %v3421 = vunpack.c.h.b16 %v3344
        %v3422 = vunpack.c.l.b16 %v3345
        %v3423 = vunpack.c.h.b16 %v3345
        %v3424 = vunpack.c.l.b16 %v3346
        %v3425 = vunpack.c.h.b16 %v3346
        %v3426 = vunpack.c.l.b16 %v3347
        %v3427 = vunpack.c.h.b16 %v3347
        %v3428 = vunpack.c.l.b16 %v3348
        %v3429 = vunpack.c.h.b16 %v3348
        %v3430 = vunpack.c.l.b16 %v3349
        %v3431 = vunpack.c.h.b16 %v3349
        %v3432 = vunpack.c.l.b16 %v3350
        %v3433 = vunpack.c.h.b16 %v3350
        %v3434 = vunpack.c.l.b16 %v3351
        %v3435 = vunpack.c.h.b16 %v3351
        %v3436 = vunpack.c.l.b16 %v3352
        %v3437 = vunpack.c.h.b16 %v3352
        %v3438 = vunpack.c.l.b16 %v3353
        %v3439 = vunpack.c.h.b16 %v3353
        %v3440 = vunpack.c.l.b16 %v3354
        %v3441 = vunpack.c.h.b16 %v3354
        %v3442 = vunpack.c.l.b16 %v3355
        %v3443 = vunpack.c.h.b16 %v3355
        %v3444 = vunpack.c.l.b16 %v3356
        %v3445 = vunpack.c.h.b16 %v3356
        %v3446 = vunpack.c.l.b16 %v3357
        %v3447 = vunpack.c.h.b16 %v3357
        %v3448 = vunpack.c.l.b16 %v3358
        %v3449 = vunpack.c.h.b16 %v3358
        %v3450 = vunpack.c.l.b16 %v3359
        %v3451 = vunpack.c.h.b16 %v3359
        %v3452 = vunpack.c.l.b16 %v3360
        %v3453 = vunpack.c.h.b16 %v3360
        %v3454 = vunpack.c.l.b16 %v3361
        %v3455 = vunpack.c.h.b16 %v3361
        %v3456 = vunpack.c.l.b16 %v3362
        %v3457 = vunpack.c.h.b16 %v3362
        %v3458 = vunpack.c.l.b16 %v3363
        %v3459 = vunpack.c.h.b16 %v3363
        %v3460 = vpack.c.b16 %v3398, %v3396
        %v3461 = vpack.c.b16 %v3399, %v3397
        %v3462 = vpack.c.b16 %v3402, %v3400
        %v3463 = vpack.c.b16 %v3403, %v3401
        %v3464 = vpack.c.b16 %v3406, %v3404
        %v3465 = vpack.c.b16 %v3407, %v3405
        %v3466 = vpack.c.b16 %v3410, %v3408
        %v3467 = vpack.c.b16 %v3411, %v3409
        %v3468 = vpack.c.b16 %v3414, %v3412
        %v3469 = vpack.c.b16 %v3415, %v3413
        %v3470 = vpack.c.b16 %v3418, %v3416
        %v3471 = vpack.c.b16 %v3419, %v3417
        %v3472 = vpack.c.b16 %v3422, %v3420
        %v3473 = vpack.c.b16 %v3423, %v3421
        %v3474 = vpack.c.b16 %v3426, %v3424
        %v3475 = vpack.c.b16 %v3427, %v3425
        %v3476 = vpack.c.b16 %v3430, %v3428
        %v3477 = vpack.c.b16 %v3431, %v3429
        %v3478 = vpack.c.b16 %v3434, %v3432
        %v3479 = vpack.c.b16 %v3435, %v3433
        %v3480 = vpack.c.b16 %v3438, %v3436
        %v3481 = vpack.c.b16 %v3439, %v3437
        %v3482 = vpack.c.b16 %v3442, %v3440
        %v3483 = vpack.c.b16 %v3443, %v3441
        %v3484 = vpack.c.b16 %v3446, %v3444
        %v3485 = vpack.c.b16 %v3447, %v3445
        %v3486 = vpack.c.b16 %v3450, %v3448
        %v3487 = vpack.c.b16 %v3451, %v3449
        %v3488 = vpack.c.b16 %v3454, %v3452
        %v3489 = vpack.c.b16 %v3455, %v3453
        %v3490 = vpack.c.b16 %v3458, %v3456
        %v3491 = vpack.c.b16 %v3459, %v3457
        %3524 = vmatpush.bf16.msra.mxu0 %v3474
        %3525 = vmatpush.bf16.msra.mxu0 %v3472
        %3526 = vmatpush.bf16.msra.mxu0 %v3470
        %3527 = vmatpush.bf16.msra.mxu0 %v3468
        %3528 = vmatpush.bf16.msra.mxu0 %v3466
        %3529 = vmatpush.bf16.msra.mxu0 %v3464
        %3530 = vmatpush.bf16.msra.mxu0 %v3462
        %3531 = vmatpush.bf16.msra.mxu0 %v3460
        %3532 = vmatmul.bf16.gmra.mxu0 %v3329
        %v3533 = vpop.f32.mrf.mxu0
        %v3534 = vadd.f32 0.0, %v3533
        %v3535 = vpop.f32.mrf.mxu0
        %3536 = vdwg.mxu0
        %3537 = vmatpush.bf16.msra.mxu0 %v3490
        %3538 = vmatpush.bf16.msra.mxu0 %v3488
        %3539 = vmatpush.bf16.msra.mxu0 %v3486
        %3540 = vmatpush.bf16.msra.mxu0 %v3484
        %3541 = vmatpush.bf16.msra.mxu0 %v3482
        %3542 = vmatpush.bf16.msra.mxu0 %v3480
        %3543 = vmatpush.bf16.msra.mxu0 %v3478
        %3544 = vmatpush.bf16.msra.mxu0 %v3476
        %3545 = vmatmul.bf16.gmra.mxu0 %v3330
        %v3546 = vpop.f32.mrf.mxu0
        %v3547 = vadd.f32 %v3534, %v3546
        %v3548 = vpop.f32.mrf.mxu0
        %3549 = vdwg.mxu0
        %3550 = vmatpush.bf16.msra.mxu0 %v3475
        %3551 = vmatpush.bf16.msra.mxu0 %v3473
        %3552 = vmatpush.bf16.msra.mxu0 %v3471
        %3553 = vmatpush.bf16.msra.mxu0 %v3469
        %3554 = vmatpush.bf16.msra.mxu0 %v3467
        %3555 = vmatpush.bf16.msra.mxu0 %v3465
        %3556 = vmatpush.bf16.msra.mxu0 %v3463
        %3557 = vmatpush.bf16.msra.mxu0 %v3461
        %3558 = vmatmul.bf16.gmra.mxu0 %v3329
        %v3559 = vpop.f32.mrf.mxu0
        %v3560 = vadd.f32 0.0, %v3559
        %v3561 = vpop.f32.mrf.mxu0
        %3562 = vdwg.mxu0
        %3563 = vmatpush.bf16.msra.mxu0 %v3491
        %3564 = vmatpush.bf16.msra.mxu0 %v3489
        %3565 = vmatpush.bf16.msra.mxu0 %v3487
        %3566 = vmatpush.bf16.msra.mxu0 %v3485
        %3567 = vmatpush.bf16.msra.mxu0 %v3483
        %3568 = vmatpush.bf16.msra.mxu0 %v3481
        %3569 = vmatpush.bf16.msra.mxu0 %v3479
        %3570 = vmatpush.bf16.msra.mxu0 %v3477
        %3571 = vmatmul.bf16.gmra.mxu0 %v3330
        %v3572 = vpop.f32.mrf.mxu0
        %v3573 = vadd.f32 %v3560, %v3572
        %v3574 = vpop.f32.mrf.mxu0
        %3575 = vdwg.mxu0
        %v3608 = vunpack.c.l.b16 %v3262
        %v3609 = vunpack.c.h.b16 %v3262
        %v3610 = vunpack.c.l.b16 %v3263
        %v3611 = vunpack.c.h.b16 %v3263
        %v3612 = vunpack.c.l.b16 %v3264
        %v3613 = vunpack.c.h.b16 %v3264
        %v3614 = vunpack.c.l.b16 %v3265
        %v3615 = vunpack.c.h.b16 %v3265
        %v3616 = vunpack.c.l.b16 %v3266
        %v3617 = vunpack.c.h.b16 %v3266
        %v3618 = vunpack.c.l.b16 %v3267
        %v3619 = vunpack.c.h.b16 %v3267
        %v3620 = vunpack.c.l.b16 %v3268
        %v3621 = vunpack.c.h.b16 %v3268
        %v3622 = vunpack.c.l.b16 %v3269
        %v3623 = vunpack.c.h.b16 %v3269
        %v3624 = vunpack.c.l.b16 %v3270
        %v3625 = vunpack.c.h.b16 %v3270
        %v3626 = vunpack.c.l.b16 %v3271
        %v3627 = vunpack.c.h.b16 %v3271
        %v3628 = vunpack.c.l.b16 %v3272
        %v3629 = vunpack.c.h.b16 %v3272
        %v3630 = vunpack.c.l.b16 %v3273
        %v3631 = vunpack.c.h.b16 %v3273
        %v3632 = vunpack.c.l.b16 %v3274
        %v3633 = vunpack.c.h.b16 %v3274
        %v3634 = vunpack.c.l.b16 %v3275
        %v3635 = vunpack.c.h.b16 %v3275
        %v3636 = vunpack.c.l.b16 %v3276
        %v3637 = vunpack.c.h.b16 %v3276
        %v3638 = vunpack.c.l.b16 %v3277
        %v3639 = vunpack.c.h.b16 %v3277
        %v3640 = vunpack.c.l.b16 %v3278
        %v3641 = vunpack.c.h.b16 %v3278
        %v3642 = vunpack.c.l.b16 %v3279
        %v3643 = vunpack.c.h.b16 %v3279
        %v3644 = vunpack.c.l.b16 %v3280
        %v3645 = vunpack.c.h.b16 %v3280
        %v3646 = vunpack.c.l.b16 %v3281
        %v3647 = vunpack.c.h.b16 %v3281
        %v3648 = vunpack.c.l.b16 %v3282
        %v3649 = vunpack.c.h.b16 %v3282
        %v3650 = vunpack.c.l.b16 %v3283
        %v3651 = vunpack.c.h.b16 %v3283
        %v3652 = vunpack.c.l.b16 %v3284
        %v3653 = vunpack.c.h.b16 %v3284
        %v3654 = vunpack.c.l.b16 %v3285
        %v3655 = vunpack.c.h.b16 %v3285
        %v3656 = vunpack.c.l.b16 %v3286
        %v3657 = vunpack.c.h.b16 %v3286
        %v3658 = vunpack.c.l.b16 %v3287
        %v3659 = vunpack.c.h.b16 %v3287
        %v3660 = vunpack.c.l.b16 %v3288
        %v3661 = vunpack.c.h.b16 %v3288
        %v3662 = vunpack.c.l.b16 %v3289
        %v3663 = vunpack.c.h.b16 %v3289
        %v3664 = vunpack.c.l.b16 %v3290
        %v3665 = vunpack.c.h.b16 %v3290
        %v3666 = vunpack.c.l.b16 %v3291
        %v3667 = vunpack.c.h.b16 %v3291
        %v3668 = vunpack.c.l.b16 %v3292
        %v3669 = vunpack.c.h.b16 %v3292
        %v3670 = vunpack.c.l.b16 %v3293
        %v3671 = vunpack.c.h.b16 %v3293
        %v3672 = vpack.c.b16 %v3610, %v3608
        %v3673 = vpack.c.b16 %v3611, %v3609
        %v3674 = vpack.c.b16 %v3614, %v3612
        %v3675 = vpack.c.b16 %v3615, %v3613
        %v3676 = vpack.c.b16 %v3618, %v3616
        %v3677 = vpack.c.b16 %v3619, %v3617
        %v3678 = vpack.c.b16 %v3622, %v3620
        %v3679 = vpack.c.b16 %v3623, %v3621
        %v3680 = vpack.c.b16 %v3626, %v3624
        %v3681 = vpack.c.b16 %v3627, %v3625
        %v3682 = vpack.c.b16 %v3630, %v3628
        %v3683 = vpack.c.b16 %v3631, %v3629
        %v3684 = vpack.c.b16 %v3634, %v3632
        %v3685 = vpack.c.b16 %v3635, %v3633
        %v3686 = vpack.c.b16 %v3638, %v3636
        %v3687 = vpack.c.b16 %v3639, %v3637
        %v3688 = vpack.c.b16 %v3642, %v3640
        %v3689 = vpack.c.b16 %v3643, %v3641
        %v3690 = vpack.c.b16 %v3646, %v3644
        %v3691 = vpack.c.b16 %v3647, %v3645
        %v3692 = vpack.c.b16 %v3650, %v3648
        %v3693 = vpack.c.b16 %v3651, %v3649
        %v3694 = vpack.c.b16 %v3654, %v3652
        %v3695 = vpack.c.b16 %v3655, %v3653
        %v3696 = vpack.c.b16 %v3658, %v3656
        %v3697 = vpack.c.b16 %v3659, %v3657
        %v3698 = vpack.c.b16 %v3662, %v3660
        %v3699 = vpack.c.b16 %v3663, %v3661
        %v3700 = vpack.c.b16 %v3666, %v3664
        %v3701 = vpack.c.b16 %v3667, %v3665
        %v3702 = vpack.c.b16 %v3670, %v3668
        %v3703 = vpack.c.b16 %v3671, %v3669
        %3736 = vmatpush.bf16.msra.mxu0 %v3686
        %3737 = vmatpush.bf16.msra.mxu0 %v3684
        %3738 = vmatpush.bf16.msra.mxu0 %v3682
        %3739 = vmatpush.bf16.msra.mxu0 %v3680
        %3740 = vmatpush.bf16.msra.mxu0 %v3678
        %3741 = vmatpush.bf16.msra.mxu0 %v3676
        %3742 = vmatpush.bf16.msra.mxu0 %v3674
        %3743 = vmatpush.bf16.msra.mxu0 %v3672
        %3744 = vmatmul.bf16.gmra.mxu0 %v3260
        %v3745 = vpop.f32.mrf.mxu0
        %v3746 = vadd.f32 %v3547, %v3745
        %v3747 = vpop.f32.mrf.mxu0
        %3748 = vdwg.mxu0
        %3749 = vmatpush.bf16.msra.mxu0 %v3702
        %3750 = vmatpush.bf16.msra.mxu0 %v3700
        %3751 = vmatpush.bf16.msra.mxu0 %v3698
        %3752 = vmatpush.bf16.msra.mxu0 %v3696
        %3753 = vmatpush.bf16.msra.mxu0 %v3694
        %3754 = vmatpush.bf16.msra.mxu0 %v3692
        %3755 = vmatpush.bf16.msra.mxu0 %v3690
        %3756 = vmatpush.bf16.msra.mxu0 %v3688
        %3757 = vmatmul.bf16.gmra.mxu0 %v3261
        %v3758 = vpop.f32.mrf.mxu0
        %v3759 = vadd.f32 %v3746, %v3758
        %v3760 = vpop.f32.mrf.mxu0
        %3761 = vdwg.mxu0
        %3762 = vmatpush.bf16.msra.mxu0 %v3687
        %3763 = vmatpush.bf16.msra.mxu0 %v3685
        %3764 = vmatpush.bf16.msra.mxu0 %v3683
        %3765 = vmatpush.bf16.msra.mxu0 %v3681
        %3766 = vmatpush.bf16.msra.mxu0 %v3679
        %3767 = vmatpush.bf16.msra.mxu0 %v3677
        %3768 = vmatpush.bf16.msra.mxu0 %v3675
        %3769 = vmatpush.bf16.msra.mxu0 %v3673
        %3770 = vmatmul.bf16.gmra.mxu0 %v3260
        %v3771 = vpop.f32.mrf.mxu0
        %v3772 = vadd.f32 %v3573, %v3771
        %v3773 = vpop.f32.mrf.mxu0
        %3774 = vdwg.mxu0
        %3775 = vmatpush.bf16.msra.mxu0 %v3703
        %3776 = vmatpush.bf16.msra.mxu0 %v3701
        %3777 = vmatpush.bf16.msra.mxu0 %v3699
        %3778 = vmatpush.bf16.msra.mxu0 %v3697
        %3779 = vmatpush.bf16.msra.mxu0 %v3695
        %3780 = vmatpush.bf16.msra.mxu0 %v3693
        %3781 = vmatpush.bf16.msra.mxu0 %v3691
        %3782 = vmatpush.bf16.msra.mxu0 %v3689
        %3783 = vmatmul.bf16.gmra.mxu0 %v3261
        %v3784 = vpop.f32.mrf.mxu0
        %v3785 = vadd.f32 %v3772, %v3784
        %v3786 = vpop.f32.mrf.mxu0
        %3787 = vdwg.mxu0
        %vm3788 = vcmp.gt.s32.totalorder %v2602, 15
        %v3789 = vsub.s32 30, %v2602
        %v3790 = vsel %vm3788, %v3789, %v2602
        %vm3791 = vcmp.eq.s32.totalorder %v498, %v3790
        %v3792 = vsel %vm3791, 1.0, 0.0
        %v3793 = vpack.c.bf16 %v3792, %v3792
        %v3795 = vsel %vm3230, %v3793, 0
        %3797 = vmatpush.bf16.msra.mxu0 0
        %3798 = vmatpush.bf16.msra.mxu0 0
        %3799 = vmatpush.bf16.msra.mxu0 0
        %3800 = vmatpush.bf16.msra.mxu0 0
        %3801 = vmatpush.bf16.msra.mxu0 0
        %3802 = vmatpush.bf16.msra.mxu0 0
        %3803 = vmatpush.bf16.msra.mxu0 0
        %3804 = vmatpush.bf16.msra.mxu0 %v3222
        %3805 = vmatmul.bf16.gmra.mxu0 %v3795
        %v3806 = vpop.f32.mrf.mxu0
        %v3807 = vadd.f32 0.0, %v3806
        %v3808 = vpop.f32.mrf.mxu0
        %3809 = vdwg.mxu0
        %3810 = vmatpush.bf16.msra.mxu0 0
        %3811 = vmatpush.bf16.msra.mxu0 0
        %3812 = vmatpush.bf16.msra.mxu0 0
        %3813 = vmatpush.bf16.msra.mxu0 0
        %3814 = vmatpush.bf16.msra.mxu0 0
        %3815 = vmatpush.bf16.msra.mxu0 0
        %3816 = vmatpush.bf16.msra.mxu0 0
        %3817 = vmatpush.bf16.msra.mxu0 %v3223
        %3818 = vmatmul.bf16.gmra.mxu0 %v3795
        %v3819 = vpop.f32.mrf.mxu0
        %v3820 = vadd.f32 0.0, %v3819
        %v3821 = vpop.f32.mrf.mxu0
        %3822 = vdwg.mxu0
        %v3823 = vpack.c.bf16 %v3807, %v3807
        %v3824 = vpack.c.bf16 %v3820, %v3820
        %s3825 = scalar_lea.vmem [#allocation6], 512
        %v3826 = vld [vmem:[%s3825] sm:$0xff]
        %v3827 = vld [vmem:[%s3825 + $0x8] sm:$0xff]
        %v3828 = vld [vmem:[%s3825 + $0x10] sm:$0xff]
        %v3829 = vld [vmem:[%s3825 + $0x18] sm:$0xff]
        %v3830 = vld [vmem:[%s3825 + $0x20] sm:$0xff]
        %v3831 = vld [vmem:[%s3825 + $0x28] sm:$0xff]
        %v3832 = vld [vmem:[%s3825 + $0x30] sm:$0xff]
        %v3833 = vld [vmem:[%s3825 + $0x38] sm:$0xff]
        %v3834 = vld [vmem:[%s3825 + $0x40] sm:$0xff]
        %v3835 = vld [vmem:[%s3825 + $0x48] sm:$0xff]
        %v3836 = vld [vmem:[%s3825 + $0x50] sm:$0xff]
        %v3837 = vld [vmem:[%s3825 + $0x58] sm:$0xff]
        %v3838 = vld [vmem:[%s3825 + $0x60] sm:$0xff]
        %v3839 = vld [vmem:[%s3825 + $0x68] sm:$0xff]
        %v3840 = vld [vmem:[%s3825 + $0x70] sm:$0xff]
        %v3841 = vld [vmem:[%s3825 + $0x78] sm:$0xff]
        %v3842 = vld [vmem:[%s3825 + $0x80] sm:$0xff]
        %v3843 = vld [vmem:[%s3825 + $0x88] sm:$0xff]
        %v3844 = vld [vmem:[%s3825 + $0x90] sm:$0xff]
        %v3845 = vld [vmem:[%s3825 + $0x98] sm:$0xff]
        %v3846 = vld [vmem:[%s3825 + $0xa0] sm:$0xff]
        %v3847 = vld [vmem:[%s3825 + $0xa8] sm:$0xff]
        %v3848 = vld [vmem:[%s3825 + $0xb0] sm:$0xff]
        %v3849 = vld [vmem:[%s3825 + $0xb8] sm:$0xff]
        %v3850 = vld [vmem:[%s3825 + $0xc0] sm:$0xff]
        %v3851 = vld [vmem:[%s3825 + $0xc8] sm:$0xff]
        %v3852 = vld [vmem:[%s3825 + $0xd0] sm:$0xff]
        %v3853 = vld [vmem:[%s3825 + $0xd8] sm:$0xff]
        %v3854 = vld [vmem:[%s3825 + $0xe0] sm:$0xff]
        %v3855 = vld [vmem:[%s3825 + $0xe8] sm:$0xff]
        %v3856 = vld [vmem:[%s3825 + $0xf0] sm:$0xff]
        %v3857 = vld [vmem:[%s3825 + $0xf8] sm:$0xff]
        %v3890 = vunpack.c.l.b16 %v3826
        %v3891 = vunpack.c.h.b16 %v3826
        %v3892 = vunpack.c.l.b16 %v3827
        %v3893 = vunpack.c.h.b16 %v3827
        %v3894 = vunpack.c.l.b16 %v3828
        %v3895 = vunpack.c.h.b16 %v3828
        %v3896 = vunpack.c.l.b16 %v3829
        %v3897 = vunpack.c.h.b16 %v3829
        %v3898 = vunpack.c.l.b16 %v3830
        %v3899 = vunpack.c.h.b16 %v3830
        %v3900 = vunpack.c.l.b16 %v3831
        %v3901 = vunpack.c.h.b16 %v3831
        %v3902 = vunpack.c.l.b16 %v3832
        %v3903 = vunpack.c.h.b16 %v3832
        %v3904 = vunpack.c.l.b16 %v3833
        %v3905 = vunpack.c.h.b16 %v3833
        %v3906 = vunpack.c.l.b16 %v3834
        %v3907 = vunpack.c.h.b16 %v3834
        %v3908 = vunpack.c.l.b16 %v3835
        %v3909 = vunpack.c.h.b16 %v3835
        %v3910 = vunpack.c.l.b16 %v3836
        %v3911 = vunpack.c.h.b16 %v3836
        %v3912 = vunpack.c.l.b16 %v3837
        %v3913 = vunpack.c.h.b16 %v3837
        %v3914 = vunpack.c.l.b16 %v3838
        %v3915 = vunpack.c.h.b16 %v3838
        %v3916 = vunpack.c.l.b16 %v3839
        %v3917 = vunpack.c.h.b16 %v3839
        %v3918 = vunpack.c.l.b16 %v3840
        %v3919 = vunpack.c.h.b16 %v3840
        %v3920 = vunpack.c.l.b16 %v3841
        %v3921 = vunpack.c.h.b16 %v3841
        %v3922 = vunpack.c.l.b16 %v3842
        %v3923 = vunpack.c.h.b16 %v3842
        %v3924 = vunpack.c.l.b16 %v3843
        %v3925 = vunpack.c.h.b16 %v3843
        %v3926 = vunpack.c.l.b16 %v3844
        %v3927 = vunpack.c.h.b16 %v3844
        %v3928 = vunpack.c.l.b16 %v3845
        %v3929 = vunpack.c.h.b16 %v3845
        %v3930 = vunpack.c.l.b16 %v3846
        %v3931 = vunpack.c.h.b16 %v3846
        %v3932 = vunpack.c.l.b16 %v3847
        %v3933 = vunpack.c.h.b16 %v3847
        %v3934 = vunpack.c.l.b16 %v3848
        %v3935 = vunpack.c.h.b16 %v3848
        %v3936 = vunpack.c.l.b16 %v3849
        %v3937 = vunpack.c.h.b16 %v3849
        %v3938 = vunpack.c.l.b16 %v3850
        %v3939 = vunpack.c.h.b16 %v3850
        %v3940 = vunpack.c.l.b16 %v3851
        %v3941 = vunpack.c.h.b16 %v3851
        %v3942 = vunpack.c.l.b16 %v3852
        %v3943 = vunpack.c.h.b16 %v3852
        %v3944 = vunpack.c.l.b16 %v3853
        %v3945 = vunpack.c.h.b16 %v3853
        %v3946 = vunpack.c.l.b16 %v3854
        %v3947 = vunpack.c.h.b16 %v3854
        %v3948 = vunpack.c.l.b16 %v3855
        %v3949 = vunpack.c.h.b16 %v3855
        %v3950 = vunpack.c.l.b16 %v3856
        %v3951 = vunpack.c.h.b16 %v3856
        %v3952 = vunpack.c.l.b16 %v3857
        %v3953 = vunpack.c.h.b16 %v3857
        %v3954 = vpack.c.b16 %v3892, %v3890
        %v3955 = vpack.c.b16 %v3893, %v3891
        %v3956 = vpack.c.b16 %v3896, %v3894
        %v3957 = vpack.c.b16 %v3897, %v3895
        %v3958 = vpack.c.b16 %v3900, %v3898
        %v3959 = vpack.c.b16 %v3901, %v3899
        %v3960 = vpack.c.b16 %v3904, %v3902
        %v3961 = vpack.c.b16 %v3905, %v3903
        %v3962 = vpack.c.b16 %v3908, %v3906
        %v3963 = vpack.c.b16 %v3909, %v3907
        %v3964 = vpack.c.b16 %v3912, %v3910
        %v3965 = vpack.c.b16 %v3913, %v3911
        %v3966 = vpack.c.b16 %v3916, %v3914
        %v3967 = vpack.c.b16 %v3917, %v3915
        %v3968 = vpack.c.b16 %v3920, %v3918
        %v3969 = vpack.c.b16 %v3921, %v3919
        %v3970 = vpack.c.b16 %v3924, %v3922
        %v3971 = vpack.c.b16 %v3925, %v3923
        %v3972 = vpack.c.b16 %v3928, %v3926
        %v3973 = vpack.c.b16 %v3929, %v3927
        %v3974 = vpack.c.b16 %v3932, %v3930
        %v3975 = vpack.c.b16 %v3933, %v3931
        %v3976 = vpack.c.b16 %v3936, %v3934
        %v3977 = vpack.c.b16 %v3937, %v3935
        %v3978 = vpack.c.b16 %v3940, %v3938
        %v3979 = vpack.c.b16 %v3941, %v3939
        %v3980 = vpack.c.b16 %v3944, %v3942
        %v3981 = vpack.c.b16 %v3945, %v3943
        %v3982 = vpack.c.b16 %v3948, %v3946
        %v3983 = vpack.c.b16 %v3949, %v3947
        %v3984 = vpack.c.b16 %v3952, %v3950
        %v3985 = vpack.c.b16 %v3953, %v3951
        %4018 = vmatpush.bf16.msra.mxu0 %v3968
        %4019 = vmatpush.bf16.msra.mxu0 %v3966
        %4020 = vmatpush.bf16.msra.mxu0 %v3964
        %4021 = vmatpush.bf16.msra.mxu0 %v3962
        %4022 = vmatpush.bf16.msra.mxu0 %v3960
        %4023 = vmatpush.bf16.msra.mxu0 %v3958
        %4024 = vmatpush.bf16.msra.mxu0 %v3956
        %4025 = vmatpush.bf16.msra.mxu0 %v3954
        %4026 = vmatmul.bf16.gmra.mxu0 %v3823
        %v4027 = vpop.f32.mrf.mxu0
        %v4028 = vadd.f32 0.0, %v4027
        %v4029 = vpop.f32.mrf.mxu0
        %4030 = vdwg.mxu0
        %4031 = vmatpush.bf16.msra.mxu0 %v3984
        %4032 = vmatpush.bf16.msra.mxu0 %v3982
        %4033 = vmatpush.bf16.msra.mxu0 %v3980
        %4034 = vmatpush.bf16.msra.mxu0 %v3978
        %4035 = vmatpush.bf16.msra.mxu0 %v3976
        %4036 = vmatpush.bf16.msra.mxu0 %v3974
        %4037 = vmatpush.bf16.msra.mxu0 %v3972
        %4038 = vmatpush.bf16.msra.mxu0 %v3970
        %4039 = vmatmul.bf16.gmra.mxu0 %v3824
        %v4040 = vpop.f32.mrf.mxu0
        %v4041 = vadd.f32 %v4028, %v4040
        %v4042 = vpop.f32.mrf.mxu0
        %4043 = vdwg.mxu0
        %4044 = vmatpush.bf16.msra.mxu0 %v3969
        %4045 = vmatpush.bf16.msra.mxu0 %v3967
        %4046 = vmatpush.bf16.msra.mxu0 %v3965
        %4047 = vmatpush.bf16.msra.mxu0 %v3963
        %4048 = vmatpush.bf16.msra.mxu0 %v3961
        %4049 = vmatpush.bf16.msra.mxu0 %v3959
        %4050 = vmatpush.bf16.msra.mxu0 %v3957
        %4051 = vmatpush.bf16.msra.mxu0 %v3955
        %4052 = vmatmul.bf16.gmra.mxu0 %v3823
        %v4053 = vpop.f32.mrf.mxu0
        %v4054 = vadd.f32 0.0, %v4053
        %v4055 = vpop.f32.mrf.mxu0
        %4056 = vdwg.mxu0
        %4057 = vmatpush.bf16.msra.mxu0 %v3985
        %4058 = vmatpush.bf16.msra.mxu0 %v3983
        %4059 = vmatpush.bf16.msra.mxu0 %v3981
        %4060 = vmatpush.bf16.msra.mxu0 %v3979
        %4061 = vmatpush.bf16.msra.mxu0 %v3977
        %4062 = vmatpush.bf16.msra.mxu0 %v3975
        %4063 = vmatpush.bf16.msra.mxu0 %v3973
        %4064 = vmatpush.bf16.msra.mxu0 %v3971
        %4065 = vmatmul.bf16.gmra.mxu0 %v3824
        %v4066 = vpop.f32.mrf.mxu0
        %v4067 = vadd.f32 %v4054, %v4066
        %v4068 = vpop.f32.mrf.mxu0
        %4069 = vdwg.mxu0
        %v4070 = vadd.f32 %v3759, %v4041
        %v4071 = vadd.f32 %v3785, %v4067
        %vm4072 = vcmp.gt.s32.totalorder %v2909, 15
        %v4073 = vsub.s32 30, %v2909
        %v4074 = vsel %vm4072, %v4073, %v2909
        %vm4075 = vcmp.eq.s32.totalorder %v498, %v4074
        %v4076 = vsel %vm4075, 1.0, 0.0
        %v4077 = vpack.c.bf16 %v4076, %v4076
        %v4079 = vsel %vm3230, %v4077, 0
        %4081 = vmatpush.bf16.msra.mxu0 0
        %4082 = vmatpush.bf16.msra.mxu0 0
        %4083 = vmatpush.bf16.msra.mxu0 0
        %4084 = vmatpush.bf16.msra.mxu0 0
        %4085 = vmatpush.bf16.msra.mxu0 0
        %4086 = vmatpush.bf16.msra.mxu0 0
        %4087 = vmatpush.bf16.msra.mxu0 0
        %4088 = vmatpush.bf16.msra.mxu0 %v3222
        %4089 = vmatmul.bf16.gmra.mxu0 %v4079
        %v4090 = vpop.f32.mrf.mxu0
        %v4091 = vadd.f32 0.0, %v4090
        %v4092 = vpop.f32.mrf.mxu0
        %4093 = vdwg.mxu0
        %4094 = vmatpush.bf16.msra.mxu0 0
        %4095 = vmatpush.bf16.msra.mxu0 0
        %4096 = vmatpush.bf16.msra.mxu0 0
        %4097 = vmatpush.bf16.msra.mxu0 0
        %4098 = vmatpush.bf16.msra.mxu0 0
        %4099 = vmatpush.bf16.msra.mxu0 0
        %4100 = vmatpush.bf16.msra.mxu0 0
        %4101 = vmatpush.bf16.msra.mxu0 %v3223
        %4102 = vmatmul.bf16.gmra.mxu0 %v4079
        %v4103 = vpop.f32.mrf.mxu0
        %v4104 = vadd.f32 0.0, %v4103
        %v4105 = vpop.f32.mrf.mxu0
        %4106 = vdwg.mxu0
        %v4107 = vpack.c.bf16 %v4091, %v4091
        %v4108 = vpack.c.bf16 %v4104, %v4104
        %s4109 = scalar_lea.vmem [#allocation6], 768
        %v4110 = vld [vmem:[%s4109] sm:$0xff]
        %v4111 = vld [vmem:[%s4109 + $0x8] sm:$0xff]
        %v4112 = vld [vmem:[%s4109 + $0x10] sm:$0xff]
        %v4113 = vld [vmem:[%s4109 + $0x18] sm:$0xff]
        %v4114 = vld [vmem:[%s4109 + $0x20] sm:$0xff]
        %v4115 = vld [vmem:[%s4109 + $0x28] sm:$0xff]
        %v4116 = vld [vmem:[%s4109 + $0x30] sm:$0xff]
        %v4117 = vld [vmem:[%s4109 + $0x38] sm:$0xff]
        %v4118 = vld [vmem:[%s4109 + $0x40] sm:$0xff]
        %v4119 = vld [vmem:[%s4109 + $0x48] sm:$0xff]
        %v4120 = vld [vmem:[%s4109 + $0x50] sm:$0xff]
        %v4121 = vld [vmem:[%s4109 + $0x58] sm:$0xff]
        %v4122 = vld [vmem:[%s4109 + $0x60] sm:$0xff]
        %v4123 = vld [vmem:[%s4109 + $0x68] sm:$0xff]
        %v4124 = vld [vmem:[%s4109 + $0x70] sm:$0xff]
        %v4125 = vld [vmem:[%s4109 + $0x78] sm:$0xff]
        %v4126 = vld [vmem:[%s4109 + $0x80] sm:$0xff]
        %v4127 = vld [vmem:[%s4109 + $0x88] sm:$0xff]
        %v4128 = vld [vmem:[%s4109 + $0x90] sm:$0xff]
        %v4129 = vld [vmem:[%s4109 + $0x98] sm:$0xff]
        %v4130 = vld [vmem:[%s4109 + $0xa0] sm:$0xff]
        %v4131 = vld [vmem:[%s4109 + $0xa8] sm:$0xff]
        %v4132 = vld [vmem:[%s4109 + $0xb0] sm:$0xff]
        %v4133 = vld [vmem:[%s4109 + $0xb8] sm:$0xff]
        %v4134 = vld [vmem:[%s4109 + $0xc0] sm:$0xff]
        %v4135 = vld [vmem:[%s4109 + $0xc8] sm:$0xff]
        %v4136 = vld [vmem:[%s4109 + $0xd0] sm:$0xff]
        %v4137 = vld [vmem:[%s4109 + $0xd8] sm:$0xff]
        %v4138 = vld [vmem:[%s4109 + $0xe0] sm:$0xff]
        %v4139 = vld [vmem:[%s4109 + $0xe8] sm:$0xff]
        %v4140 = vld [vmem:[%s4109 + $0xf0] sm:$0xff]
        %v4141 = vld [vmem:[%s4109 + $0xf8] sm:$0xff]
        %v4174 = vunpack.c.l.b16 %v4110
        %v4175 = vunpack.c.h.b16 %v4110
        %v4176 = vunpack.c.l.b16 %v4111
        %v4177 = vunpack.c.h.b16 %v4111
        %v4178 = vunpack.c.l.b16 %v4112
        %v4179 = vunpack.c.h.b16 %v4112
        %v4180 = vunpack.c.l.b16 %v4113
        %v4181 = vunpack.c.h.b16 %v4113
        %v4182 = vunpack.c.l.b16 %v4114
        %v4183 = vunpack.c.h.b16 %v4114
        %v4184 = vunpack.c.l.b16 %v4115
        %v4185 = vunpack.c.h.b16 %v4115
        %v4186 = vunpack.c.l.b16 %v4116
        %v4187 = vunpack.c.h.b16 %v4116
        %v4188 = vunpack.c.l.b16 %v4117
        %v4189 = vunpack.c.h.b16 %v4117
        %v4190 = vunpack.c.l.b16 %v4118
        %v4191 = vunpack.c.h.b16 %v4118
        %v4192 = vunpack.c.l.b16 %v4119
        %v4193 = vunpack.c.h.b16 %v4119
        %v4194 = vunpack.c.l.b16 %v4120
        %v4195 = vunpack.c.h.b16 %v4120
        %v4196 = vunpack.c.l.b16 %v4121
        %v4197 = vunpack.c.h.b16 %v4121
        %v4198 = vunpack.c.l.b16 %v4122
        %v4199 = vunpack.c.h.b16 %v4122
        %v4200 = vunpack.c.l.b16 %v4123
        %v4201 = vunpack.c.h.b16 %v4123
        %v4202 = vunpack.c.l.b16 %v4124
        %v4203 = vunpack.c.h.b16 %v4124
        %v4204 = vunpack.c.l.b16 %v4125
        %v4205 = vunpack.c.h.b16 %v4125
        %v4206 = vunpack.c.l.b16 %v4126
        %v4207 = vunpack.c.h.b16 %v4126
        %v4208 = vunpack.c.l.b16 %v4127
        %v4209 = vunpack.c.h.b16 %v4127
        %v4210 = vunpack.c.l.b16 %v4128
        %v4211 = vunpack.c.h.b16 %v4128
        %v4212 = vunpack.c.l.b16 %v4129
        %v4213 = vunpack.c.h.b16 %v4129
        %v4214 = vunpack.c.l.b16 %v4130
        %v4215 = vunpack.c.h.b16 %v4130
        %v4216 = vunpack.c.l.b16 %v4131
        %v4217 = vunpack.c.h.b16 %v4131
        %v4218 = vunpack.c.l.b16 %v4132
        %v4219 = vunpack.c.h.b16 %v4132
        %v4220 = vunpack.c.l.b16 %v4133
        %v4221 = vunpack.c.h.b16 %v4133
        %v4222 = vunpack.c.l.b16 %v4134
        %v4223 = vunpack.c.h.b16 %v4134
        %v4224 = vunpack.c.l.b16 %v4135
        %v4225 = vunpack.c.h.b16 %v4135
        %v4226 = vunpack.c.l.b16 %v4136
        %v4227 = vunpack.c.h.b16 %v4136
        %v4228 = vunpack.c.l.b16 %v4137
        %v4229 = vunpack.c.h.b16 %v4137
        %v4230 = vunpack.c.l.b16 %v4138
        %v4231 = vunpack.c.h.b16 %v4138
        %v4232 = vunpack.c.l.b16 %v4139
        %v4233 = vunpack.c.h.b16 %v4139
        %v4234 = vunpack.c.l.b16 %v4140
        %v4235 = vunpack.c.h.b16 %v4140
        %v4236 = vunpack.c.l.b16 %v4141
        %v4237 = vunpack.c.h.b16 %v4141
        %v4238 = vpack.c.b16 %v4176, %v4174
        %v4239 = vpack.c.b16 %v4177, %v4175
        %v4240 = vpack.c.b16 %v4180, %v4178
        %v4241 = vpack.c.b16 %v4181, %v4179
        %v4242 = vpack.c.b16 %v4184, %v4182
        %v4243 = vpack.c.b16 %v4185, %v4183
        %v4244 = vpack.c.b16 %v4188, %v4186
        %v4245 = vpack.c.b16 %v4189, %v4187
        %v4246 = vpack.c.b16 %v4192, %v4190
        %v4247 = vpack.c.b16 %v4193, %v4191
        %v4248 = vpack.c.b16 %v4196, %v4194
        %v4249 = vpack.c.b16 %v4197, %v4195
        %v4250 = vpack.c.b16 %v4200, %v4198
        %v4251 = vpack.c.b16 %v4201, %v4199
        %v4252 = vpack.c.b16 %v4204, %v4202
        %v4253 = vpack.c.b16 %v4205, %v4203
        %v4254 = vpack.c.b16 %v4208, %v4206
        %v4255 = vpack.c.b16 %v4209, %v4207
        %v4256 = vpack.c.b16 %v4212, %v4210
        %v4257 = vpack.c.b16 %v4213, %v4211
        %v4258 = vpack.c.b16 %v4216, %v4214
        %v4259 = vpack.c.b16 %v4217, %v4215
        %v4260 = vpack.c.b16 %v4220, %v4218
        %v4261 = vpack.c.b16 %v4221, %v4219
        %v4262 = vpack.c.b16 %v4224, %v4222
        %v4263 = vpack.c.b16 %v4225, %v4223
        %v4264 = vpack.c.b16 %v4228, %v4226
        %v4265 = vpack.c.b16 %v4229, %v4227
        %v4266 = vpack.c.b16 %v4232, %v4230
        %v4267 = vpack.c.b16 %v4233, %v4231
        %v4268 = vpack.c.b16 %v4236, %v4234
        %v4269 = vpack.c.b16 %v4237, %v4235
        %4302 = vmatpush.bf16.msra.mxu0 %v4252
        %4303 = vmatpush.bf16.msra.mxu0 %v4250
        %4304 = vmatpush.bf16.msra.mxu0 %v4248
        %4305 = vmatpush.bf16.msra.mxu0 %v4246
        %4306 = vmatpush.bf16.msra.mxu0 %v4244
        %4307 = vmatpush.bf16.msra.mxu0 %v4242
        %4308 = vmatpush.bf16.msra.mxu0 %v4240
        %4309 = vmatpush.bf16.msra.mxu0 %v4238
        %4310 = vmatmul.bf16.gmra.mxu0 %v4107
        %v4311 = vpop.f32.mrf.mxu0
        %v4312 = vadd.f32 0.0, %v4311
        %v4313 = vpop.f32.mrf.mxu0
        %4314 = vdwg.mxu0
        %4315 = vmatpush.bf16.msra.mxu0 %v4268
        %4316 = vmatpush.bf16.msra.mxu0 %v4266
        %4317 = vmatpush.bf16.msra.mxu0 %v4264
        %4318 = vmatpush.bf16.msra.mxu0 %v4262
        %4319 = vmatpush.bf16.msra.mxu0 %v4260
        %4320 = vmatpush.bf16.msra.mxu0 %v4258
        %4321 = vmatpush.bf16.msra.mxu0 %v4256
        %4322 = vmatpush.bf16.msra.mxu0 %v4254
        %4323 = vmatmul.bf16.gmra.mxu0 %v4108
        %v4324 = vpop.f32.mrf.mxu0
        %v4325 = vadd.f32 %v4312, %v4324
        %v4326 = vpop.f32.mrf.mxu0
        %4327 = vdwg.mxu0
        %4328 = vmatpush.bf16.msra.mxu0 %v4253
        %4329 = vmatpush.bf16.msra.mxu0 %v4251
        %4330 = vmatpush.bf16.msra.mxu0 %v4249
        %4331 = vmatpush.bf16.msra.mxu0 %v4247
        %4332 = vmatpush.bf16.msra.mxu0 %v4245
        %4333 = vmatpush.bf16.msra.mxu0 %v4243
        %4334 = vmatpush.bf16.msra.mxu0 %v4241
        %4335 = vmatpush.bf16.msra.mxu0 %v4239
        %4336 = vmatmul.bf16.gmra.mxu0 %v4107
        %v4337 = vpop.f32.mrf.mxu0
        %v4338 = vadd.f32 0.0, %v4337
        %v4339 = vpop.f32.mrf.mxu0
        %4340 = vdwg.mxu0
        %4341 = vmatpush.bf16.msra.mxu0 %v4269
        %4342 = vmatpush.bf16.msra.mxu0 %v4267
        %4343 = vmatpush.bf16.msra.mxu0 %v4265
        %4344 = vmatpush.bf16.msra.mxu0 %v4263
        %4345 = vmatpush.bf16.msra.mxu0 %v4261
        %4346 = vmatpush.bf16.msra.mxu0 %v4259
        %4347 = vmatpush.bf16.msra.mxu0 %v4257
        %4348 = vmatpush.bf16.msra.mxu0 %v4255
        %4349 = vmatmul.bf16.gmra.mxu0 %v4108
        %v4350 = vpop.f32.mrf.mxu0
        %v4351 = vadd.f32 %v4338, %v4350
        %v4352 = vpop.f32.mrf.mxu0
        %4353 = vdwg.mxu0
        %v4354 = vadd.f32 %v4070, %v4325
        %v4355 = vadd.f32 %v4071, %v4351
        %v4356 = vld [vmem:[%s8] sm:$0x3]
        %v4358 = vperm.slane %v4356, 0
        %v4359 = vperm.slane %v4356, 1
        %v4362 = vadd.f32 %v4354, %v4358
        %v4363 = vadd.f32 %v4355, %v4359
        %v4364 = vmax.f32 %v4362, 0.0
        %v4365 = vmax.f32 %v4363, 0.0
        %v4366 = vpack.c.bf16 %v4364, %v4364
        %v4367 = vpack.c.bf16 %v4365, %v4365
        %vm4368 = vcmp.gt.s32.totalorder %v2001, 7
        %v4369 = vsub.s32 14, %v2001
        %v4370 = vsel %vm4368, %v4369, %v2001
        %vm4371 = vcmp.eq.s32.totalorder %v498, %v4370
        %v4372 = vsel %vm4371, 1.0, 0.0
        %v4373 = vpack.c.bf16 %v4372, %v4372
        %vm4374 = vcmask 64512
        %v4376 = vsel %vm4374, %v4373, 0
        %vm4378 = vcmask 1043456
        %v4380 = vsel %vm4378, %v4366, 0
        %v4383 = vsel %vm4378, %v4367, 0
        %4385 = vmatpush.bf16.msra.mxu0 0
        %4386 = vmatpush.bf16.msra.mxu0 0
        %4387 = vmatpush.bf16.msra.mxu0 0
        %4388 = vmatpush.bf16.msra.mxu0 0
        %4389 = vmatpush.bf16.msra.mxu0 0
        %4390 = vmatpush.bf16.msra.mxu0 0
        %4391 = vmatpush.bf16.msra.mxu0 0
        %4392 = vmatpush.bf16.msra.mxu0 %v4380
        %4393 = vmatmul.bf16.gmra.mxu0 %v4376
        %v4394 = vpop.f32.mrf.mxu0
        %v4395 = vadd.f32 0.0, %v4394
        %v4396 = vpop.f32.mrf.mxu0
        %4397 = vdwg.mxu0
        %4398 = vmatpush.bf16.msra.mxu0 0
        %4399 = vmatpush.bf16.msra.mxu0 0
        %4400 = vmatpush.bf16.msra.mxu0 0
        %4401 = vmatpush.bf16.msra.mxu0 0
        %4402 = vmatpush.bf16.msra.mxu0 0
        %4403 = vmatpush.bf16.msra.mxu0 0
        %4404 = vmatpush.bf16.msra.mxu0 0
        %4405 = vmatpush.bf16.msra.mxu0 %v4383
        %4406 = vmatmul.bf16.gmra.mxu0 %v4376
        %v4407 = vpop.f32.mrf.mxu0
        %v4408 = vadd.f32 0.0, %v4407
        %v4409 = vpop.f32.mrf.mxu0
        %4410 = vdwg.mxu0
        %v4411 = vpack.c.bf16 %v4395, %v4395
        %v4412 = vpack.c.bf16 %v4408, %v4408
        %v4413 = vld [vmem:[%s4] sm:$0xf]
        %v4414 = vld [vmem:[%s4 + $0x4] sm:$0xf]
        %v4415 = vld [vmem:[%s4 + $0x8] sm:$0xf]
        %v4416 = vld [vmem:[%s4 + $0xc] sm:$0xf]
        %v4417 = vld [vmem:[%s4 + $0x10] sm:$0xf]
        %v4418 = vld [vmem:[%s4 + $0x14] sm:$0xf]
        %v4419 = vld [vmem:[%s4 + $0x18] sm:$0xf]
        %v4420 = vld [vmem:[%s4 + $0x1c] sm:$0xf]
        %v4421 = vld [vmem:[%s4 + $0x20] sm:$0xf]
        %v4422 = vld [vmem:[%s4 + $0x24] sm:$0xf]
        %v4423 = vld [vmem:[%s4 + $0x28] sm:$0xf]
        %v4424 = vld [vmem:[%s4 + $0x2c] sm:$0xf]
        %v4425 = vld [vmem:[%s4 + $0x30] sm:$0xf]
        %v4426 = vld [vmem:[%s4 + $0x34] sm:$0xf]
        %v4427 = vld [vmem:[%s4 + $0x38] sm:$0xf]
        %v4428 = vld [vmem:[%s4 + $0x3c] sm:$0xf]
        %v4429 = vld [vmem:[%s4 + $0x40] sm:$0xf]
        %v4430 = vld [vmem:[%s4 + $0x44] sm:$0xf]
        %v4431 = vld [vmem:[%s4 + $0x48] sm:$0xf]
        %v4432 = vld [vmem:[%s4 + $0x4c] sm:$0xf]
        %v4433 = vld [vmem:[%s4 + $0x50] sm:$0xf]
        %v4434 = vld [vmem:[%s4 + $0x54] sm:$0xf]
        %v4435 = vld [vmem:[%s4 + $0x58] sm:$0xf]
        %v4436 = vld [vmem:[%s4 + $0x5c] sm:$0xf]
        %v4437 = vld [vmem:[%s4 + $0x60] sm:$0xf]
        %v4438 = vld [vmem:[%s4 + $0x64] sm:$0xf]
        %v4439 = vld [vmem:[%s4 + $0x68] sm:$0xf]
        %v4440 = vld [vmem:[%s4 + $0x6c] sm:$0xf]
        %v4441 = vld [vmem:[%s4 + $0x70] sm:$0xf]
        %v4442 = vld [vmem:[%s4 + $0x74] sm:$0xf]
        %v4443 = vld [vmem:[%s4 + $0x78] sm:$0xf]
        %v4444 = vld [vmem:[%s4 + $0x7c] sm:$0xf]
        %vm4445 = vcmp.gt.s32.totalorder %v2083, 7
        %v4446 = vsub.s32 14, %v2083
        %v4447 = vsel %vm4445, %v4446, %v2083
        %vm4448 = vcmp.eq.s32.totalorder %v498, %v4447
        %v4449 = vsel %vm4448, 1.0, 0.0
        %v4450 = vpack.c.bf16 %v4449, %v4449
        %v4452 = vsel %vm4374, %v4450, 0
        %4454 = vmatpush.bf16.msra.mxu0 0
        %4455 = vmatpush.bf16.msra.mxu0 0
        %4456 = vmatpush.bf16.msra.mxu0 0
        %4457 = vmatpush.bf16.msra.mxu0 0
        %4458 = vmatpush.bf16.msra.mxu0 0
        %4459 = vmatpush.bf16.msra.mxu0 0
        %4460 = vmatpush.bf16.msra.mxu0 0
        %4461 = vmatpush.bf16.msra.mxu0 %v4380
        %4462 = vmatmul.bf16.gmra.mxu0 %v4452
        %v4463 = vpop.f32.mrf.mxu0
        %v4464 = vadd.f32 0.0, %v4463
        %v4465 = vpop.f32.mrf.mxu0
        %4466 = vdwg.mxu0
        %4467 = vmatpush.bf16.msra.mxu0 0
        %4468 = vmatpush.bf16.msra.mxu0 0
        %4469 = vmatpush.bf16.msra.mxu0 0
        %4470 = vmatpush.bf16.msra.mxu0 0
        %4471 = vmatpush.bf16.msra.mxu0 0
        %4472 = vmatpush.bf16.msra.mxu0 0
        %4473 = vmatpush.bf16.msra.mxu0 0
        %4474 = vmatpush.bf16.msra.mxu0 %v4383
        %4475 = vmatmul.bf16.gmra.mxu0 %v4452
        %v4476 = vpop.f32.mrf.mxu0
        %v4477 = vadd.f32 0.0, %v4476
        %v4478 = vpop.f32.mrf.mxu0
        %4479 = vdwg.mxu0
        %v4480 = vpack.c.bf16 %v4464, %v4464
        %v4481 = vpack.c.bf16 %v4477, %v4477
        %s4482 = scalar_lea.vmem %s4, 128
        %v4483 = vld [vmem:[%s4482] sm:$0xf]
        %v4484 = vld [vmem:[%s4482 + $0x4] sm:$0xf]
        %v4485 = vld [vmem:[%s4482 + $0x8] sm:$0xf]
        %v4486 = vld [vmem:[%s4482 + $0xc] sm:$0xf]
        %v4487 = vld [vmem:[%s4482 + $0x10] sm:$0xf]
        %v4488 = vld [vmem:[%s4482 + $0x14] sm:$0xf]
        %v4489 = vld [vmem:[%s4482 + $0x18] sm:$0xf]
        %v4490 = vld [vmem:[%s4482 + $0x1c] sm:$0xf]
        %v4491 = vld [vmem:[%s4482 + $0x20] sm:$0xf]
        %v4492 = vld [vmem:[%s4482 + $0x24] sm:$0xf]
        %v4493 = vld [vmem:[%s4482 + $0x28] sm:$0xf]
        %v4494 = vld [vmem:[%s4482 + $0x2c] sm:$0xf]
        %v4495 = vld [vmem:[%s4482 + $0x30] sm:$0xf]
        %v4496 = vld [vmem:[%s4482 + $0x34] sm:$0xf]
        %v4497 = vld [vmem:[%s4482 + $0x38] sm:$0xf]
        %v4498 = vld [vmem:[%s4482 + $0x3c] sm:$0xf]
        %v4499 = vld [vmem:[%s4482 + $0x40] sm:$0xf]
        %v4500 = vld [vmem:[%s4482 + $0x44] sm:$0xf]
        %v4501 = vld [vmem:[%s4482 + $0x48] sm:$0xf]
        %v4502 = vld [vmem:[%s4482 + $0x4c] sm:$0xf]
        %v4503 = vld [vmem:[%s4482 + $0x50] sm:$0xf]
        %v4504 = vld [vmem:[%s4482 + $0x54] sm:$0xf]
        %v4505 = vld [vmem:[%s4482 + $0x58] sm:$0xf]
        %v4506 = vld [vmem:[%s4482 + $0x5c] sm:$0xf]
        %v4507 = vld [vmem:[%s4482 + $0x60] sm:$0xf]
        %v4508 = vld [vmem:[%s4482 + $0x64] sm:$0xf]
        %v4509 = vld [vmem:[%s4482 + $0x68] sm:$0xf]
        %v4510 = vld [vmem:[%s4482 + $0x6c] sm:$0xf]
        %v4511 = vld [vmem:[%s4482 + $0x70] sm:$0xf]
        %v4512 = vld [vmem:[%s4482 + $0x74] sm:$0xf]
        %v4513 = vld [vmem:[%s4482 + $0x78] sm:$0xf]
        %v4514 = vld [vmem:[%s4482 + $0x7c] sm:$0xf]
        %v4547 = vunpack.c.l.b16 %v4483
        %v4548 = vunpack.c.l.b16 %v4484
        %v4549 = vunpack.c.l.b16 %v4485
        %v4550 = vunpack.c.l.b16 %v4486
        %v4551 = vunpack.c.l.b16 %v4487
        %v4552 = vunpack.c.l.b16 %v4488
        %v4553 = vunpack.c.l.b16 %v4489
        %v4554 = vunpack.c.l.b16 %v4490
        %v4555 = vunpack.c.l.b16 %v4491
        %v4556 = vunpack.c.l.b16 %v4492
        %v4557 = vunpack.c.l.b16 %v4493
        %v4558 = vunpack.c.l.b16 %v4494
        %v4559 = vunpack.c.l.b16 %v4495
        %v4560 = vunpack.c.l.b16 %v4496
        %v4561 = vunpack.c.l.b16 %v4497
        %v4562 = vunpack.c.l.b16 %v4498
        %v4563 = vunpack.c.l.b16 %v4499
        %v4564 = vunpack.c.l.b16 %v4500
        %v4565 = vunpack.c.l.b16 %v4501
        %v4566 = vunpack.c.l.b16 %v4502
        %v4567 = vunpack.c.l.b16 %v4503
        %v4568 = vunpack.c.l.b16 %v4504
        %v4569 = vunpack.c.l.b16 %v4505
        %v4570 = vunpack.c.l.b16 %v4506
        %v4571 = vunpack.c.l.b16 %v4507
        %v4572 = vunpack.c.l.b16 %v4508
        %v4573 = vunpack.c.l.b16 %v4509
        %v4574 = vunpack.c.l.b16 %v4510
        %v4575 = vunpack.c.l.b16 %v4511
        %v4576 = vunpack.c.l.b16 %v4512
        %v4577 = vunpack.c.l.b16 %v4513
        %v4578 = vunpack.c.l.b16 %v4514
        %v4579 = vpack.c.b16 %v4548, %v4547
        %v4580 = vpack.c.b16 %v4550, %v4549
        %v4581 = vpack.c.b16 %v4552, %v4551
        %v4582 = vpack.c.b16 %v4554, %v4553
        %v4583 = vpack.c.b16 %v4556, %v4555
        %v4584 = vpack.c.b16 %v4558, %v4557
        %v4585 = vpack.c.b16 %v4560, %v4559
        %v4586 = vpack.c.b16 %v4562, %v4561
        %v4587 = vpack.c.b16 %v4564, %v4563
        %v4588 = vpack.c.b16 %v4566, %v4565
        %v4589 = vpack.c.b16 %v4568, %v4567
        %v4590 = vpack.c.b16 %v4570, %v4569
        %v4591 = vpack.c.b16 %v4572, %v4571
        %v4592 = vpack.c.b16 %v4574, %v4573
        %v4593 = vpack.c.b16 %v4576, %v4575
        %v4594 = vpack.c.b16 %v4578, %v4577
        %4611 = vmatpush.bf16.msra.mxu0 %v4586
        %4612 = vmatpush.bf16.msra.mxu0 %v4585
        %4613 = vmatpush.bf16.msra.mxu0 %v4584
        %4614 = vmatpush.bf16.msra.mxu0 %v4583
        %4615 = vmatpush.bf16.msra.mxu0 %v4582
        %4616 = vmatpush.bf16.msra.mxu0 %v4581
        %4617 = vmatpush.bf16.msra.mxu0 %v4580
        %4618 = vmatpush.bf16.msra.mxu0 %v4579
        %4619 = vmatmul.bf16.gmra.mxu0 %v4480
        %v4620 = vpop.f32.mrf.mxu0
        %v4621 = vadd.f32 0.0, %v4620
        %v4622 = vpop.f32.mrf.mxu0
        %4623 = vdwg.mxu0
        %4624 = vmatpush.bf16.msra.mxu0 %v4594
        %4625 = vmatpush.bf16.msra.mxu0 %v4593
        %4626 = vmatpush.bf16.msra.mxu0 %v4592
        %4627 = vmatpush.bf16.msra.mxu0 %v4591
        %4628 = vmatpush.bf16.msra.mxu0 %v4590
        %4629 = vmatpush.bf16.msra.mxu0 %v4589
        %4630 = vmatpush.bf16.msra.mxu0 %v4588
        %4631 = vmatpush.bf16.msra.mxu0 %v4587
        %4632 = vmatmul.bf16.gmra.mxu0 %v4481
        %v4633 = vpop.f32.mrf.mxu0
        %v4634 = vadd.f32 %v4621, %v4633
        %v4635 = vpop.f32.mrf.mxu0
        %4636 = vdwg.mxu0
        %v4669 = vunpack.c.l.b16 %v4413
        %v4670 = vunpack.c.l.b16 %v4414
        %v4671 = vunpack.c.l.b16 %v4415
        %v4672 = vunpack.c.l.b16 %v4416
        %v4673 = vunpack.c.l.b16 %v4417
        %v4674 = vunpack.c.l.b16 %v4418
        %v4675 = vunpack.c.l.b16 %v4419
        %v4676 = vunpack.c.l.b16 %v4420
        %v4677 = vunpack.c.l.b16 %v4421
        %v4678 = vunpack.c.l.b16 %v4422
        %v4679 = vunpack.c.l.b16 %v4423
        %v4680 = vunpack.c.l.b16 %v4424
        %v4681 = vunpack.c.l.b16 %v4425
        %v4682 = vunpack.c.l.b16 %v4426
        %v4683 = vunpack.c.l.b16 %v4427
        %v4684 = vunpack.c.l.b16 %v4428
        %v4685 = vunpack.c.l.b16 %v4429
        %v4686 = vunpack.c.l.b16 %v4430
        %v4687 = vunpack.c.l.b16 %v4431
        %v4688 = vunpack.c.l.b16 %v4432
        %v4689 = vunpack.c.l.b16 %v4433
        %v4690 = vunpack.c.l.b16 %v4434
        %v4691 = vunpack.c.l.b16 %v4435
        %v4692 = vunpack.c.l.b16 %v4436
        %v4693 = vunpack.c.l.b16 %v4437
        %v4694 = vunpack.c.l.b16 %v4438
        %v4695 = vunpack.c.l.b16 %v4439
        %v4696 = vunpack.c.l.b16 %v4440
        %v4697 = vunpack.c.l.b16 %v4441
        %v4698 = vunpack.c.l.b16 %v4442
        %v4699 = vunpack.c.l.b16 %v4443
        %v4700 = vunpack.c.l.b16 %v4444
        %v4701 = vpack.c.b16 %v4670, %v4669
        %v4702 = vpack.c.b16 %v4672, %v4671
        %v4703 = vpack.c.b16 %v4674, %v4673
        %v4704 = vpack.c.b16 %v4676, %v4675
        %v4705 = vpack.c.b16 %v4678, %v4677
        %v4706 = vpack.c.b16 %v4680, %v4679
        %v4707 = vpack.c.b16 %v4682, %v4681
        %v4708 = vpack.c.b16 %v4684, %v4683
        %v4709 = vpack.c.b16 %v4686, %v4685
        %v4710 = vpack.c.b16 %v4688, %v4687
        %v4711 = vpack.c.b16 %v4690, %v4689
        %v4712 = vpack.c.b16 %v4692, %v4691
        %v4713 = vpack.c.b16 %v4694, %v4693
        %v4714 = vpack.c.b16 %v4696, %v4695
        %v4715 = vpack.c.b16 %v4698, %v4697
        %v4716 = vpack.c.b16 %v4700, %v4699
        %4733 = vmatpush.bf16.msra.mxu0 %v4708
        %4734 = vmatpush.bf16.msra.mxu0 %v4707
        %4735 = vmatpush.bf16.msra.mxu0 %v4706
        %4736 = vmatpush.bf16.msra.mxu0 %v4705
        %4737 = vmatpush.bf16.msra.mxu0 %v4704
        %4738 = vmatpush.bf16.msra.mxu0 %v4703
        %4739 = vmatpush.bf16.msra.mxu0 %v4702
        %4740 = vmatpush.bf16.msra.mxu0 %v4701
        %4741 = vmatmul.bf16.gmra.mxu0 %v4411
        %v4742 = vpop.f32.mrf.mxu0
        %v4743 = vadd.f32 %v4634, %v4742
        %v4744 = vpop.f32.mrf.mxu0
        %4745 = vdwg.mxu0
        %4746 = vmatpush.bf16.msra.mxu0 %v4716
        %4747 = vmatpush.bf16.msra.mxu0 %v4715
        %4748 = vmatpush.bf16.msra.mxu0 %v4714
        %4749 = vmatpush.bf16.msra.mxu0 %v4713
        %4750 = vmatpush.bf16.msra.mxu0 %v4712
        %4751 = vmatpush.bf16.msra.mxu0 %v4711
        %4752 = vmatpush.bf16.msra.mxu0 %v4710
        %4753 = vmatpush.bf16.msra.mxu0 %v4709
        %4754 = vmatmul.bf16.gmra.mxu0 %v4412
        %v4755 = vpop.f32.mrf.mxu0
        %v4756 = vadd.f32 %v4743, %v4755
        %v4757 = vpop.f32.mrf.mxu0
        %4758 = vdwg.mxu0
        %vm4759 = vcmp.gt.s32.totalorder %v2602, 7
        %v4760 = vsub.s32 14, %v2602
        %v4761 = vsel %vm4759, %v4760, %v2602
        %vm4762 = vcmp.eq.s32.totalorder %v498, %v4761
        %v4763 = vsel %vm4762, 1.0, 0.0
        %v4764 = vpack.c.bf16 %v4763, %v4763
        %v4766 = vsel %vm4374, %v4764, 0
        %4768 = vmatpush.bf16.msra.mxu0 0
        %4769 = vmatpush.bf16.msra.mxu0 0
        %4770 = vmatpush.bf16.msra.mxu0 0
        %4771 = vmatpush.bf16.msra.mxu0 0
        %4772 = vmatpush.bf16.msra.mxu0 0
        %4773 = vmatpush.bf16.msra.mxu0 0
        %4774 = vmatpush.bf16.msra.mxu0 0
        %4775 = vmatpush.bf16.msra.mxu0 %v4380
        %4776 = vmatmul.bf16.gmra.mxu0 %v4766
        %v4777 = vpop.f32.mrf.mxu0
        %v4778 = vadd.f32 0.0, %v4777
        %v4779 = vpop.f32.mrf.mxu0
        %4780 = vdwg.mxu0
        %4781 = vmatpush.bf16.msra.mxu0 0
        %4782 = vmatpush.bf16.msra.mxu0 0
        %4783 = vmatpush.bf16.msra.mxu0 0
        %4784 = vmatpush.bf16.msra.mxu0 0
        %4785 = vmatpush.bf16.msra.mxu0 0
        %4786 = vmatpush.bf16.msra.mxu0 0
        %4787 = vmatpush.bf16.msra.mxu0 0
        %4788 = vmatpush.bf16.msra.mxu0 %v4383
        %4789 = vmatmul.bf16.gmra.mxu0 %v4766
        %v4790 = vpop.f32.mrf.mxu0
        %v4791 = vadd.f32 0.0, %v4790
        %v4792 = vpop.f32.mrf.mxu0
        %4793 = vdwg.mxu0
        %v4794 = vpack.c.bf16 %v4778, %v4778
        %v4795 = vpack.c.bf16 %v4791, %v4791
        %s4796 = scalar_lea.vmem %s4, 256
        %v4797 = vld [vmem:[%s4796] sm:$0xf]
        %v4798 = vld [vmem:[%s4796 + $0x4] sm:$0xf]
        %v4799 = vld [vmem:[%s4796 + $0x8] sm:$0xf]
        %v4800 = vld [vmem:[%s4796 + $0xc] sm:$0xf]
        %v4801 = vld [vmem:[%s4796 + $0x10] sm:$0xf]
        %v4802 = vld [vmem:[%s4796 + $0x14] sm:$0xf]
        %v4803 = vld [vmem:[%s4796 + $0x18] sm:$0xf]
        %v4804 = vld [vmem:[%s4796 + $0x1c] sm:$0xf]
        %v4805 = vld [vmem:[%s4796 + $0x20] sm:$0xf]
        %v4806 = vld [vmem:[%s4796 + $0x24] sm:$0xf]
        %v4807 = vld [vmem:[%s4796 + $0x28] sm:$0xf]
        %v4808 = vld [vmem:[%s4796 + $0x2c] sm:$0xf]
        %v4809 = vld [vmem:[%s4796 + $0x30] sm:$0xf]
        %v4810 = vld [vmem:[%s4796 + $0x34] sm:$0xf]
        %v4811 = vld [vmem:[%s4796 + $0x38] sm:$0xf]
        %v4812 = vld [vmem:[%s4796 + $0x3c] sm:$0xf]
        %v4813 = vld [vmem:[%s4796 + $0x40] sm:$0xf]
        %v4814 = vld [vmem:[%s4796 + $0x44] sm:$0xf]
        %v4815 = vld [vmem:[%s4796 + $0x48] sm:$0xf]
        %v4816 = vld [vmem:[%s4796 + $0x4c] sm:$0xf]
        %v4817 = vld [vmem:[%s4796 + $0x50] sm:$0xf]
        %v4818 = vld [vmem:[%s4796 + $0x54] sm:$0xf]
        %v4819 = vld [vmem:[%s4796 + $0x58] sm:$0xf]
        %v4820 = vld [vmem:[%s4796 + $0x5c] sm:$0xf]
        %v4821 = vld [vmem:[%s4796 + $0x60] sm:$0xf]
        %v4822 = vld [vmem:[%s4796 + $0x64] sm:$0xf]
        %v4823 = vld [vmem:[%s4796 + $0x68] sm:$0xf]
        %v4824 = vld [vmem:[%s4796 + $0x6c] sm:$0xf]
        %v4825 = vld [vmem:[%s4796 + $0x70] sm:$0xf]
        %v4826 = vld [vmem:[%s4796 + $0x74] sm:$0xf]
        %v4827 = vld [vmem:[%s4796 + $0x78] sm:$0xf]
        %v4828 = vld [vmem:[%s4796 + $0x7c] sm:$0xf]
        %v4861 = vunpack.c.l.b16 %v4797
        %v4862 = vunpack.c.l.b16 %v4798
        %v4863 = vunpack.c.l.b16 %v4799
        %v4864 = vunpack.c.l.b16 %v4800
        %v4865 = vunpack.c.l.b16 %v4801
        %v4866 = vunpack.c.l.b16 %v4802
        %v4867 = vunpack.c.l.b16 %v4803
        %v4868 = vunpack.c.l.b16 %v4804
        %v4869 = vunpack.c.l.b16 %v4805
        %v4870 = vunpack.c.l.b16 %v4806
        %v4871 = vunpack.c.l.b16 %v4807
        %v4872 = vunpack.c.l.b16 %v4808
        %v4873 = vunpack.c.l.b16 %v4809
        %v4874 = vunpack.c.l.b16 %v4810
        %v4875 = vunpack.c.l.b16 %v4811
        %v4876 = vunpack.c.l.b16 %v4812
        %v4877 = vunpack.c.l.b16 %v4813
        %v4878 = vunpack.c.l.b16 %v4814
        %v4879 = vunpack.c.l.b16 %v4815
        %v4880 = vunpack.c.l.b16 %v4816
        %v4881 = vunpack.c.l.b16 %v4817
        %v4882 = vunpack.c.l.b16 %v4818
        %v4883 = vunpack.c.l.b16 %v4819
        %v4884 = vunpack.c.l.b16 %v4820
        %v4885 = vunpack.c.l.b16 %v4821
        %v4886 = vunpack.c.l.b16 %v4822
        %v4887 = vunpack.c.l.b16 %v4823
        %v4888 = vunpack.c.l.b16 %v4824
        %v4889 = vunpack.c.l.b16 %v4825
        %v4890 = vunpack.c.l.b16 %v4826
        %v4891 = vunpack.c.l.b16 %v4827
        %v4892 = vunpack.c.l.b16 %v4828
        %v4893 = vpack.c.b16 %v4862, %v4861
        %v4894 = vpack.c.b16 %v4864, %v4863
        %v4895 = vpack.c.b16 %v4866, %v4865
        %v4896 = vpack.c.b16 %v4868, %v4867
        %v4897 = vpack.c.b16 %v4870, %v4869
        %v4898 = vpack.c.b16 %v4872, %v4871
        %v4899 = vpack.c.b16 %v4874, %v4873
        %v4900 = vpack.c.b16 %v4876, %v4875
        %v4901 = vpack.c.b16 %v4878, %v4877
        %v4902 = vpack.c.b16 %v4880, %v4879
        %v4903 = vpack.c.b16 %v4882, %v4881
        %v4904 = vpack.c.b16 %v4884, %v4883
        %v4905 = vpack.c.b16 %v4886, %v4885
        %v4906 = vpack.c.b16 %v4888, %v4887
        %v4907 = vpack.c.b16 %v4890, %v4889
        %v4908 = vpack.c.b16 %v4892, %v4891
        %4925 = vmatpush.bf16.msra.mxu0 %v4900
        %4926 = vmatpush.bf16.msra.mxu0 %v4899
        %4927 = vmatpush.bf16.msra.mxu0 %v4898
        %4928 = vmatpush.bf16.msra.mxu0 %v4897
        %4929 = vmatpush.bf16.msra.mxu0 %v4896
        %4930 = vmatpush.bf16.msra.mxu0 %v4895
        %4931 = vmatpush.bf16.msra.mxu0 %v4894
        %4932 = vmatpush.bf16.msra.mxu0 %v4893
        %4933 = vmatmul.bf16.gmra.mxu0 %v4794
        %v4934 = vpop.f32.mrf.mxu0
        %v4935 = vadd.f32 0.0, %v4934
        %v4936 = vpop.f32.mrf.mxu0
        %4937 = vdwg.mxu0
        %4938 = vmatpush.bf16.msra.mxu0 %v4908
        %4939 = vmatpush.bf16.msra.mxu0 %v4907
        %4940 = vmatpush.bf16.msra.mxu0 %v4906
        %4941 = vmatpush.bf16.msra.mxu0 %v4905
        %4942 = vmatpush.bf16.msra.mxu0 %v4904
        %4943 = vmatpush.bf16.msra.mxu0 %v4903
        %4944 = vmatpush.bf16.msra.mxu0 %v4902
        %4945 = vmatpush.bf16.msra.mxu0 %v4901
        %4946 = vmatmul.bf16.gmra.mxu0 %v4795
        %v4947 = vpop.f32.mrf.mxu0
        %v4948 = vadd.f32 %v4935, %v4947
        %v4949 = vpop.f32.mrf.mxu0
        %4950 = vdwg.mxu0
        %v4951 = vadd.f32 %v4756, %v4948
        %vm4952 = vcmp.gt.s32.totalorder %v2909, 7
        %v4953 = vsub.s32 14, %v2909
        %v4954 = vsel %vm4952, %v4953, %v2909
        %vm4955 = vcmp.eq.s32.totalorder %v498, %v4954
        %v4956 = vsel %vm4955, 1.0, 0.0
        %v4957 = vpack.c.bf16 %v4956, %v4956
        %v4959 = vsel %vm4374, %v4957, 0
        %4961 = vmatpush.bf16.msra.mxu0 0
        %4962 = vmatpush.bf16.msra.mxu0 0
        %4963 = vmatpush.bf16.msra.mxu0 0
        %4964 = vmatpush.bf16.msra.mxu0 0
        %4965 = vmatpush.bf16.msra.mxu0 0
        %4966 = vmatpush.bf16.msra.mxu0 0
        %4967 = vmatpush.bf16.msra.mxu0 0
        %4968 = vmatpush.bf16.msra.mxu0 %v4380
        %4969 = vmatmul.bf16.gmra.mxu0 %v4959
        %v4970 = vpop.f32.mrf.mxu0
        %v4971 = vadd.f32 0.0, %v4970
        %v4972 = vpop.f32.mrf.mxu0
        %4973 = vdwg.mxu0
        %4974 = vmatpush.bf16.msra.mxu0 0
        %4975 = vmatpush.bf16.msra.mxu0 0
        %4976 = vmatpush.bf16.msra.mxu0 0
        %4977 = vmatpush.bf16.msra.mxu0 0
        %4978 = vmatpush.bf16.msra.mxu0 0
        %4979 = vmatpush.bf16.msra.mxu0 0
        %4980 = vmatpush.bf16.msra.mxu0 0
        %4981 = vmatpush.bf16.msra.mxu0 %v4383
        %4982 = vmatmul.bf16.gmra.mxu0 %v4959
        %v4983 = vpop.f32.mrf.mxu0
        %v4984 = vadd.f32 0.0, %v4983
        %v4985 = vpop.f32.mrf.mxu0
        %4986 = vdwg.mxu0
        %v4987 = vpack.c.bf16 %v4971, %v4971
        %v4988 = vpack.c.bf16 %v4984, %v4984
        %s4989 = scalar_lea.vmem %s4, 384
        %v4990 = vld [vmem:[%s4989] sm:$0xf]
        %v4991 = vld [vmem:[%s4989 + $0x4] sm:$0xf]
        %v4992 = vld [vmem:[%s4989 + $0x8] sm:$0xf]
        %v4993 = vld [vmem:[%s4989 + $0xc] sm:$0xf]
        %v4994 = vld [vmem:[%s4989 + $0x10] sm:$0xf]
        %v4995 = vld [vmem:[%s4989 + $0x14] sm:$0xf]
        %v4996 = vld [vmem:[%s4989 + $0x18] sm:$0xf]
        %v4997 = vld [vmem:[%s4989 + $0x1c] sm:$0xf]
        %v4998 = vld [vmem:[%s4989 + $0x20] sm:$0xf]
        %v4999 = vld [vmem:[%s4989 + $0x24] sm:$0xf]
        %v5000 = vld [vmem:[%s4989 + $0x28] sm:$0xf]
        %v5001 = vld [vmem:[%s4989 + $0x2c] sm:$0xf]
        %v5002 = vld [vmem:[%s4989 + $0x30] sm:$0xf]
        %v5003 = vld [vmem:[%s4989 + $0x34] sm:$0xf]
        %v5004 = vld [vmem:[%s4989 + $0x38] sm:$0xf]
        %v5005 = vld [vmem:[%s4989 + $0x3c] sm:$0xf]
        %v5006 = vld [vmem:[%s4989 + $0x40] sm:$0xf]
        %v5007 = vld [vmem:[%s4989 + $0x44] sm:$0xf]
        %v5008 = vld [vmem:[%s4989 + $0x48] sm:$0xf]
        %v5009 = vld [vmem:[%s4989 + $0x4c] sm:$0xf]
        %v5010 = vld [vmem:[%s4989 + $0x50] sm:$0xf]
        %v5011 = vld [vmem:[%s4989 + $0x54] sm:$0xf]
        %v5012 = vld [vmem:[%s4989 + $0x58] sm:$0xf]
        %v5013 = vld [vmem:[%s4989 + $0x5c] sm:$0xf]
        %v5014 = vld [vmem:[%s4989 + $0x60] sm:$0xf]
        %v5015 = vld [vmem:[%s4989 + $0x64] sm:$0xf]
        %v5016 = vld [vmem:[%s4989 + $0x68] sm:$0xf]
        %v5017 = vld [vmem:[%s4989 + $0x6c] sm:$0xf]
        %v5018 = vld [vmem:[%s4989 + $0x70] sm:$0xf]
        %v5019 = vld [vmem:[%s4989 + $0x74] sm:$0xf]
        %v5020 = vld [vmem:[%s4989 + $0x78] sm:$0xf]
        %v5021 = vld [vmem:[%s4989 + $0x7c] sm:$0xf]
        %v5054 = vunpack.c.l.b16 %v4990
        %v5055 = vunpack.c.l.b16 %v4991
        %v5056 = vunpack.c.l.b16 %v4992
        %v5057 = vunpack.c.l.b16 %v4993
        %v5058 = vunpack.c.l.b16 %v4994
        %v5059 = vunpack.c.l.b16 %v4995
        %v5060 = vunpack.c.l.b16 %v4996
        %v5061 = vunpack.c.l.b16 %v4997
        %v5062 = vunpack.c.l.b16 %v4998
        %v5063 = vunpack.c.l.b16 %v4999
        %v5064 = vunpack.c.l.b16 %v5000
        %v5065 = vunpack.c.l.b16 %v5001
        %v5066 = vunpack.c.l.b16 %v5002
        %v5067 = vunpack.c.l.b16 %v5003
        %v5068 = vunpack.c.l.b16 %v5004
        %v5069 = vunpack.c.l.b16 %v5005
        %v5070 = vunpack.c.l.b16 %v5006
        %v5071 = vunpack.c.l.b16 %v5007
        %v5072 = vunpack.c.l.b16 %v5008
        %v5073 = vunpack.c.l.b16 %v5009
        %v5074 = vunpack.c.l.b16 %v5010
        %v5075 = vunpack.c.l.b16 %v5011
        %v5076 = vunpack.c.l.b16 %v5012
        %v5077 = vunpack.c.l.b16 %v5013
        %v5078 = vunpack.c.l.b16 %v5014
        %v5079 = vunpack.c.l.b16 %v5015
        %v5080 = vunpack.c.l.b16 %v5016
        %v5081 = vunpack.c.l.b16 %v5017
        %v5082 = vunpack.c.l.b16 %v5018
        %v5083 = vunpack.c.l.b16 %v5019
        %v5084 = vunpack.c.l.b16 %v5020
        %v5085 = vunpack.c.l.b16 %v5021
        %v5086 = vpack.c.b16 %v5055, %v5054
        %v5087 = vpack.c.b16 %v5057, %v5056
        %v5088 = vpack.c.b16 %v5059, %v5058
        %v5089 = vpack.c.b16 %v5061, %v5060
        %v5090 = vpack.c.b16 %v5063, %v5062
        %v5091 = vpack.c.b16 %v5065, %v5064
        %v5092 = vpack.c.b16 %v5067, %v5066
        %v5093 = vpack.c.b16 %v5069, %v5068
        %v5094 = vpack.c.b16 %v5071, %v5070
        %v5095 = vpack.c.b16 %v5073, %v5072
        %v5096 = vpack.c.b16 %v5075, %v5074
        %v5097 = vpack.c.b16 %v5077, %v5076
        %v5098 = vpack.c.b16 %v5079, %v5078
        %v5099 = vpack.c.b16 %v5081, %v5080
        %v5100 = vpack.c.b16 %v5083, %v5082
        %v5101 = vpack.c.b16 %v5085, %v5084
        %5118 = vmatpush.bf16.msra.mxu0 %v5093
        %5119 = vmatpush.bf16.msra.mxu0 %v5092
        %5120 = vmatpush.bf16.msra.mxu0 %v5091
        %5121 = vmatpush.bf16.msra.mxu0 %v5090
        %5122 = vmatpush.bf16.msra.mxu0 %v5089
        %5123 = vmatpush.bf16.msra.mxu0 %v5088
        %5124 = vmatpush.bf16.msra.mxu0 %v5087
        %5125 = vmatpush.bf16.msra.mxu0 %v5086
        %5126 = vmatmul.bf16.gmra.mxu0 %v4987
        %v5127 = vpop.f32.mrf.mxu0
        %v5128 = vadd.f32 0.0, %v5127
        %v5129 = vpop.f32.mrf.mxu0
        %5130 = vdwg.mxu0
        %5131 = vmatpush.bf16.msra.mxu0 %v5101
        %5132 = vmatpush.bf16.msra.mxu0 %v5100
        %5133 = vmatpush.bf16.msra.mxu0 %v5099
        %5134 = vmatpush.bf16.msra.mxu0 %v5098
        %5135 = vmatpush.bf16.msra.mxu0 %v5097
        %5136 = vmatpush.bf16.msra.mxu0 %v5096
        %5137 = vmatpush.bf16.msra.mxu0 %v5095
        %5138 = vmatpush.bf16.msra.mxu0 %v5094
        %5139 = vmatmul.bf16.gmra.mxu0 %v4988
        %v5140 = vpop.f32.mrf.mxu0
        %v5141 = vadd.f32 %v5128, %v5140
        %v5142 = vpop.f32.mrf.mxu0
        %5143 = vdwg.mxu0
        %v5144 = vadd.f32 %v4951, %v5141
        %v5145 = vld [vmem:[%s9] sm:$0x1]
        %v5147 = vperm.slane %v5145, 0
        %v5149 = vadd.f32 %v5144, %v5147
        %v5150 = vmax.f32 %v5149, 0.0
        %v5151 = vpack.c.bf16 %v5150, %v5150
        %vm5152 = vcmp.gt.s32.totalorder %v2001, 3
        %v5153 = vsub.s32 6, %v2001
        %v5154 = vsel %vm5152, %v5153, %v2001
        %vm5155 = vcmp.eq.s32.totalorder %v498, %v5154
        %v5156 = vsel %vm5155, 1.0, 0.0
        %v5157 = vpack.c.bf16 %v5156, %v5156
        %vm5158 = vcmask 31744
        %v5160 = vsel %vm5158, %v5157, 0
        %vm5162 = vcmask 1041408
        %v5164 = vsel %vm5162, %v5151, 0
        %5166 = vmatpush.bf16.msra.mxu0 0
        %5167 = vmatpush.bf16.msra.mxu0 0
        %5168 = vmatpush.bf16.msra.mxu0 0
        %5169 = vmatpush.bf16.msra.mxu0 0
        %5170 = vmatpush.bf16.msra.mxu0 0
        %5171 = vmatpush.bf16.msra.mxu0 0
        %5172 = vmatpush.bf16.msra.mxu0 0
        %5173 = vmatpush.bf16.msra.mxu0 %v5164
        %5174 = vmatmul.bf16.gmra.mxu0 %v5160
        %v5175 = vpop.f32.mrf.mxu0
        %v5176 = vadd.f32 0.0, %v5175
        %v5177 = vpop.f32.mrf.mxu0
        %5178 = vdwg.mxu0
        %v5179 = vpack.c.bf16 %v5176, %v5176
        %v5180 = vld [vmem:[%s5] sm:$0xf]
        %v5181 = vld [vmem:[%s5 + $0x4] sm:$0xf]
        %v5182 = vld [vmem:[%s5 + $0x8] sm:$0xf]
        %v5183 = vld [vmem:[%s5 + $0xc] sm:$0xf]
        %v5184 = vld [vmem:[%s5 + $0x10] sm:$0xf]
        %v5185 = vld [vmem:[%s5 + $0x14] sm:$0xf]
        %v5186 = vld [vmem:[%s5 + $0x18] sm:$0xf]
        %v5187 = vld [vmem:[%s5 + $0x1c] sm:$0xf]
        %v5188 = vld [vmem:[%s5 + $0x20] sm:$0xf]
        %v5189 = vld [vmem:[%s5 + $0x24] sm:$0xf]
        %v5190 = vld [vmem:[%s5 + $0x28] sm:$0xf]
        %v5191 = vld [vmem:[%s5 + $0x2c] sm:$0xf]
        %v5192 = vld [vmem:[%s5 + $0x30] sm:$0xf]
        %v5193 = vld [vmem:[%s5 + $0x34] sm:$0xf]
        %v5194 = vld [vmem:[%s5 + $0x38] sm:$0xf]
        %v5195 = vld [vmem:[%s5 + $0x3c] sm:$0xf]
        %vm5196 = vcmp.gt.s32.totalorder %v2083, 3
        %v5197 = vsub.s32 6, %v2083
        %v5198 = vsel %vm5196, %v5197, %v2083
        %vm5199 = vcmp.eq.s32.totalorder %v498, %v5198
        %v5200 = vsel %vm5199, 1.0, 0.0
        %v5201 = vpack.c.bf16 %v5200, %v5200
        %v5203 = vsel %vm5158, %v5201, 0
        %5205 = vmatpush.bf16.msra.mxu0 0
        %5206 = vmatpush.bf16.msra.mxu0 0
        %5207 = vmatpush.bf16.msra.mxu0 0
        %5208 = vmatpush.bf16.msra.mxu0 0
        %5209 = vmatpush.bf16.msra.mxu0 0
        %5210 = vmatpush.bf16.msra.mxu0 0
        %5211 = vmatpush.bf16.msra.mxu0 0
        %5212 = vmatpush.bf16.msra.mxu0 %v5164
        %5213 = vmatmul.bf16.gmra.mxu0 %v5203
        %v5214 = vpop.f32.mrf.mxu0
        %v5215 = vadd.f32 0.0, %v5214
        %v5216 = vpop.f32.mrf.mxu0
        %5217 = vdwg.mxu0
        %v5218 = vpack.c.bf16 %v5215, %v5215
        %s5219 = scalar_lea.vmem %s5, 64
        %v5220 = vld [vmem:[%s5219] sm:$0xf]
        %v5221 = vld [vmem:[%s5219 + $0x4] sm:$0xf]
        %v5222 = vld [vmem:[%s5219 + $0x8] sm:$0xf]
        %v5223 = vld [vmem:[%s5219 + $0xc] sm:$0xf]
        %v5224 = vld [vmem:[%s5219 + $0x10] sm:$0xf]
        %v5225 = vld [vmem:[%s5219 + $0x14] sm:$0xf]
        %v5226 = vld [vmem:[%s5219 + $0x18] sm:$0xf]
        %v5227 = vld [vmem:[%s5219 + $0x1c] sm:$0xf]
        %v5228 = vld [vmem:[%s5219 + $0x20] sm:$0xf]
        %v5229 = vld [vmem:[%s5219 + $0x24] sm:$0xf]
        %v5230 = vld [vmem:[%s5219 + $0x28] sm:$0xf]
        %v5231 = vld [vmem:[%s5219 + $0x2c] sm:$0xf]
        %v5232 = vld [vmem:[%s5219 + $0x30] sm:$0xf]
        %v5233 = vld [vmem:[%s5219 + $0x34] sm:$0xf]
        %v5234 = vld [vmem:[%s5219 + $0x38] sm:$0xf]
        %v5235 = vld [vmem:[%s5219 + $0x3c] sm:$0xf]
        %v5252 = vunpack.c.l.b16 %v5220
        %v5253 = vunpack.c.l.b16 %v5221
        %v5254 = vunpack.c.l.b16 %v5222
        %v5255 = vunpack.c.l.b16 %v5223
        %v5256 = vunpack.c.l.b16 %v5224
        %v5257 = vunpack.c.l.b16 %v5225
        %v5258 = vunpack.c.l.b16 %v5226
        %v5259 = vunpack.c.l.b16 %v5227
        %v5260 = vunpack.c.l.b16 %v5228
        %v5261 = vunpack.c.l.b16 %v5229
        %v5262 = vunpack.c.l.b16 %v5230
        %v5263 = vunpack.c.l.b16 %v5231
        %v5264 = vunpack.c.l.b16 %v5232
        %v5265 = vunpack.c.l.b16 %v5233
        %v5266 = vunpack.c.l.b16 %v5234
        %v5267 = vunpack.c.l.b16 %v5235
        %v5268 = vpack.c.b16 %v5253, %v5252
        %v5269 = vpack.c.b16 %v5255, %v5254
        %v5270 = vpack.c.b16 %v5257, %v5256
        %v5271 = vpack.c.b16 %v5259, %v5258
        %v5272 = vpack.c.b16 %v5261, %v5260
        %v5273 = vpack.c.b16 %v5263, %v5262
        %v5274 = vpack.c.b16 %v5265, %v5264
        %v5275 = vpack.c.b16 %v5267, %v5266
        %5284 = vmatpush.bf16.msra.mxu0 %v5275
        %5285 = vmatpush.bf16.msra.mxu0 %v5274
        %5286 = vmatpush.bf16.msra.mxu0 %v5273
        %5287 = vmatpush.bf16.msra.mxu0 %v5272
        %5288 = vmatpush.bf16.msra.mxu0 %v5271
        %5289 = vmatpush.bf16.msra.mxu0 %v5270
        %5290 = vmatpush.bf16.msra.mxu0 %v5269
        %5291 = vmatpush.bf16.msra.mxu0 %v5268
        %5292 = vmatmul.bf16.gmra.mxu0 %v5218
        %v5293 = vpop.f32.mrf.mxu0
        %v5294 = vadd.f32 0.0, %v5293
        %v5295 = vpop.f32.mrf.mxu0
        %5296 = vdwg.mxu0
        %v5313 = vunpack.c.l.b16 %v5180
        %v5314 = vunpack.c.l.b16 %v5181
        %v5315 = vunpack.c.l.b16 %v5182
        %v5316 = vunpack.c.l.b16 %v5183
        %v5317 = vunpack.c.l.b16 %v5184
        %v5318 = vunpack.c.l.b16 %v5185
        %v5319 = vunpack.c.l.b16 %v5186
        %v5320 = vunpack.c.l.b16 %v5187
        %v5321 = vunpack.c.l.b16 %v5188
        %v5322 = vunpack.c.l.b16 %v5189
        %v5323 = vunpack.c.l.b16 %v5190
        %v5324 = vunpack.c.l.b16 %v5191
        %v5325 = vunpack.c.l.b16 %v5192
        %v5326 = vunpack.c.l.b16 %v5193
        %v5327 = vunpack.c.l.b16 %v5194
        %v5328 = vunpack.c.l.b16 %v5195
        %v5329 = vpack.c.b16 %v5314, %v5313
        %v5330 = vpack.c.b16 %v5316, %v5315
        %v5331 = vpack.c.b16 %v5318, %v5317
        %v5332 = vpack.c.b16 %v5320, %v5319
        %v5333 = vpack.c.b16 %v5322, %v5321
        %v5334 = vpack.c.b16 %v5324, %v5323
        %v5335 = vpack.c.b16 %v5326, %v5325
        %v5336 = vpack.c.b16 %v5328, %v5327
        %5345 = vmatpush.bf16.msra.mxu0 %v5336
        %5346 = vmatpush.bf16.msra.mxu0 %v5335
        %5347 = vmatpush.bf16.msra.mxu0 %v5334
        %5348 = vmatpush.bf16.msra.mxu0 %v5333
        %5349 = vmatpush.bf16.msra.mxu0 %v5332
        %5350 = vmatpush.bf16.msra.mxu0 %v5331
        %5351 = vmatpush.bf16.msra.mxu0 %v5330
        %5352 = vmatpush.bf16.msra.mxu0 %v5329
        %5353 = vmatmul.bf16.gmra.mxu0 %v5179
        %v5354 = vpop.f32.mrf.mxu0
        %v5355 = vadd.f32 %v5294, %v5354
        %v5356 = vpop.f32.mrf.mxu0
        %5357 = vdwg.mxu0
        %vm5358 = vcmp.gt.s32.totalorder %v2602, 3
        %v5359 = vsub.s32 6, %v2602
        %v5360 = vsel %vm5358, %v5359, %v2602
        %vm5361 = vcmp.eq.s32.totalorder %v498, %v5360
        %v5362 = vsel %vm5361, 1.0, 0.0
        %v5363 = vpack.c.bf16 %v5362, %v5362
        %v5365 = vsel %vm5158, %v5363, 0
        %5367 = vmatpush.bf16.msra.mxu0 0
        %5368 = vmatpush.bf16.msra.mxu0 0
        %5369 = vmatpush.bf16.msra.mxu0 0
        %5370 = vmatpush.bf16.msra.mxu0 0
        %5371 = vmatpush.bf16.msra.mxu0 0
        %5372 = vmatpush.bf16.msra.mxu0 0
        %5373 = vmatpush.bf16.msra.mxu0 0
        %5374 = vmatpush.bf16.msra.mxu0 %v5164
        %5375 = vmatmul.bf16.gmra.mxu0 %v5365
        %v5376 = vpop.f32.mrf.mxu0
        %v5377 = vadd.f32 0.0, %v5376
        %v5378 = vpop.f32.mrf.mxu0
        %5379 = vdwg.mxu0
        %v5380 = vpack.c.bf16 %v5377, %v5377
        %s5381 = scalar_lea.vmem %s5, 128
        %v5382 = vld [vmem:[%s5381] sm:$0xf]
        %v5383 = vld [vmem:[%s5381 + $0x4] sm:$0xf]
        %v5384 = vld [vmem:[%s5381 + $0x8] sm:$0xf]
        %v5385 = vld [vmem:[%s5381 + $0xc] sm:$0xf]
        %v5386 = vld [vmem:[%s5381 + $0x10] sm:$0xf]
        %v5387 = vld [vmem:[%s5381 + $0x14] sm:$0xf]
        %v5388 = vld [vmem:[%s5381 + $0x18] sm:$0xf]
        %v5389 = vld [vmem:[%s5381 + $0x1c] sm:$0xf]
        %v5390 = vld [vmem:[%s5381 + $0x20] sm:$0xf]
        %v5391 = vld [vmem:[%s5381 + $0x24] sm:$0xf]
        %v5392 = vld [vmem:[%s5381 + $0x28] sm:$0xf]
        %v5393 = vld [vmem:[%s5381 + $0x2c] sm:$0xf]
        %v5394 = vld [vmem:[%s5381 + $0x30] sm:$0xf]
        %v5395 = vld [vmem:[%s5381 + $0x34] sm:$0xf]
        %v5396 = vld [vmem:[%s5381 + $0x38] sm:$0xf]
        %v5397 = vld [vmem:[%s5381 + $0x3c] sm:$0xf]
        %v5414 = vunpack.c.l.b16 %v5382
        %v5415 = vunpack.c.l.b16 %v5383
        %v5416 = vunpack.c.l.b16 %v5384
        %v5417 = vunpack.c.l.b16 %v5385
        %v5418 = vunpack.c.l.b16 %v5386
        %v5419 = vunpack.c.l.b16 %v5387
        %v5420 = vunpack.c.l.b16 %v5388
        %v5421 = vunpack.c.l.b16 %v5389
        %v5422 = vunpack.c.l.b16 %v5390
        %v5423 = vunpack.c.l.b16 %v5391
        %v5424 = vunpack.c.l.b16 %v5392
        %v5425 = vunpack.c.l.b16 %v5393
        %v5426 = vunpack.c.l.b16 %v5394
        %v5427 = vunpack.c.l.b16 %v5395
        %v5428 = vunpack.c.l.b16 %v5396
        %v5429 = vunpack.c.l.b16 %v5397
        %v5430 = vpack.c.b16 %v5415, %v5414
        %v5431 = vpack.c.b16 %v5417, %v5416
        %v5432 = vpack.c.b16 %v5419, %v5418
        %v5433 = vpack.c.b16 %v5421, %v5420
        %v5434 = vpack.c.b16 %v5423, %v5422
        %v5435 = vpack.c.b16 %v5425, %v5424
        %v5436 = vpack.c.b16 %v5427, %v5426
        %v5437 = vpack.c.b16 %v5429, %v5428
        %5446 = vmatpush.bf16.msra.mxu0 %v5437
        %5447 = vmatpush.bf16.msra.mxu0 %v5436
        %5448 = vmatpush.bf16.msra.mxu0 %v5435
        %5449 = vmatpush.bf16.msra.mxu0 %v5434
        %5450 = vmatpush.bf16.msra.mxu0 %v5433
        %5451 = vmatpush.bf16.msra.mxu0 %v5432
        %5452 = vmatpush.bf16.msra.mxu0 %v5431
        %5453 = vmatpush.bf16.msra.mxu0 %v5430
        %5454 = vmatmul.bf16.gmra.mxu0 %v5380
        %v5455 = vpop.f32.mrf.mxu0
        %v5456 = vadd.f32 0.0, %v5455
        %v5457 = vpop.f32.mrf.mxu0
        %5458 = vdwg.mxu0
        %v5459 = vadd.f32 %v5355, %v5456
        %vm5460 = vcmp.gt.s32.totalorder %v2909, 3
        %v5461 = vsub.s32 6, %v2909
        %v5462 = vsel %vm5460, %v5461, %v2909
        %vm5463 = vcmp.eq.s32.totalorder %v498, %v5462
        %v5464 = vsel %vm5463, 1.0, 0.0
        %v5465 = vpack.c.bf16 %v5464, %v5464
        %v5467 = vsel %vm5158, %v5465, 0
        %5469 = vmatpush.bf16.msra.mxu0 0
        %5470 = vmatpush.bf16.msra.mxu0 0
        %5471 = vmatpush.bf16.msra.mxu0 0
        %5472 = vmatpush.bf16.msra.mxu0 0
        %5473 = vmatpush.bf16.msra.mxu0 0
        %5474 = vmatpush.bf16.msra.mxu0 0
        %5475 = vmatpush.bf16.msra.mxu0 0
        %5476 = vmatpush.bf16.msra.mxu0 %v5164
        %5477 = vmatmul.bf16.gmra.mxu0 %v5467
        %v5478 = vpop.f32.mrf.mxu0
        %v5479 = vadd.f32 0.0, %v5478
        %v5480 = vpop.f32.mrf.mxu0
        %5481 = vdwg.mxu0
        %v5482 = vpack.c.bf16 %v5479, %v5479
        %s5483 = scalar_lea.vmem %s5, 192
        %v5484 = vld [vmem:[%s5483] sm:$0xf]
        %v5485 = vld [vmem:[%s5483 + $0x4] sm:$0xf]
        %v5486 = vld [vmem:[%s5483 + $0x8] sm:$0xf]
        %v5487 = vld [vmem:[%s5483 + $0xc] sm:$0xf]
        %v5488 = vld [vmem:[%s5483 + $0x10] sm:$0xf]
        %v5489 = vld [vmem:[%s5483 + $0x14] sm:$0xf]
        %v5490 = vld [vmem:[%s5483 + $0x18] sm:$0xf]
        %v5491 = vld [vmem:[%s5483 + $0x1c] sm:$0xf]
        %v5492 = vld [vmem:[%s5483 + $0x20] sm:$0xf]
        %v5493 = vld [vmem:[%s5483 + $0x24] sm:$0xf]
        %v5494 = vld [vmem:[%s5483 + $0x28] sm:$0xf]
        %v5495 = vld [vmem:[%s5483 + $0x2c] sm:$0xf]
        %v5496 = vld [vmem:[%s5483 + $0x30] sm:$0xf]
        %v5497 = vld [vmem:[%s5483 + $0x34] sm:$0xf]
        %v5498 = vld [vmem:[%s5483 + $0x38] sm:$0xf]
        %v5499 = vld [vmem:[%s5483 + $0x3c] sm:$0xf]
        %v5516 = vunpack.c.l.b16 %v5484
        %v5517 = vunpack.c.l.b16 %v5485
        %v5518 = vunpack.c.l.b16 %v5486
        %v5519 = vunpack.c.l.b16 %v5487
        %v5520 = vunpack.c.l.b16 %v5488
        %v5521 = vunpack.c.l.b16 %v5489
        %v5522 = vunpack.c.l.b16 %v5490
        %v5523 = vunpack.c.l.b16 %v5491
        %v5524 = vunpack.c.l.b16 %v5492
        %v5525 = vunpack.c.l.b16 %v5493
        %v5526 = vunpack.c.l.b16 %v5494
        %v5527 = vunpack.c.l.b16 %v5495
        %v5528 = vunpack.c.l.b16 %v5496
        %v5529 = vunpack.c.l.b16 %v5497
        %v5530 = vunpack.c.l.b16 %v5498
        %v5531 = vunpack.c.l.b16 %v5499
        %v5532 = vpack.c.b16 %v5517, %v5516
        %v5533 = vpack.c.b16 %v5519, %v5518
        %v5534 = vpack.c.b16 %v5521, %v5520
        %v5535 = vpack.c.b16 %v5523, %v5522
        %v5536 = vpack.c.b16 %v5525, %v5524
        %v5537 = vpack.c.b16 %v5527, %v5526
        %v5538 = vpack.c.b16 %v5529, %v5528
        %v5539 = vpack.c.b16 %v5531, %v5530
        %5548 = vmatpush.bf16.msra.mxu0 %v5539
        %5549 = vmatpush.bf16.msra.mxu0 %v5538
        %5550 = vmatpush.bf16.msra.mxu0 %v5537
        %5551 = vmatpush.bf16.msra.mxu0 %v5536
        %5552 = vmatpush.bf16.msra.mxu0 %v5535
        %5553 = vmatpush.bf16.msra.mxu0 %v5534
        %5554 = vmatpush.bf16.msra.mxu0 %v5533
        %5555 = vmatpush.bf16.msra.mxu0 %v5532
        %5556 = vmatmul.bf16.gmra.mxu0 %v5482
        %v5557 = vpop.f32.mrf.mxu0
        %v5558 = vadd.f32 0.0, %v5557
        %v5559 = vpop.f32.mrf.mxu0
        %5560 = vdwg.mxu0
        %v5561 = vadd.f32 %v5459, %v5558
        %v5562 = vld [vmem:[%s10] sm:$0x1]
        %v5564 = vperm.slane %v5562, 0
        %v5566 = vadd.f32 %v5561, %v5564
        %v5567 = vmax.f32 %v5566, 0.0
        %vm5568 = vcmask 517120
        %v5569 = vsel %vm5568, %v5567, 0.0
        %v5570 = vrot.slane %v5569, 4
        %v5571 = vadd.f32 %v5569, %v5570
        %v5572 = vrot.slane %v5571, 2
        %v5573 = vadd.f32 %v5571, %v5572
        %v5574 = vrot.slane %v5573, 1
        %v5575 = vadd.f32 %v5573, %v5574
        %v5576 = vld [vmem:[%s11] sm:$0xff]
        %v5577 = vld [vmem:[%s11 + $0x8] sm:$0xff]
        %v5578 = vld [vmem:[%s11 + $0x10] sm:$0xff]
        %v5579 = vld [vmem:[%s11 + $0x18] sm:$0xff]
        %v5580 = vld [vmem:[%s11 + $0x20] sm:$0xff]
        %v5581 = vld [vmem:[%s11 + $0x28] sm:$0xff]
        %v5582 = vld [vmem:[%s11 + $0x30] sm:$0xff]
        %v5583 = vld [vmem:[%s11 + $0x38] sm:$0xff]
        %v5584 = vld [vmem:[%s12] sm:$0x1]
        %vm5585 = vcmask 523264
        %v5587 = vsel %vm5585, %v5575, 0
        %5589 = vmatpush.msra.mxu0 0.0
        %5590 = vmatpush.msra.mxu0 0.0
        %5591 = vmatpush.msra.mxu0 0.0
        %5592 = vmatpush.msra.mxu0 0.0
        %5593 = vmatpush.msra.mxu0 0.0
        %5594 = vmatpush.msra.mxu0 0.0
        %5595 = vmatpush.msra.mxu0 0.0
        %5596 = vmatpush.msra.mxu0 0.0
        %5597 = vmatpush.msra.mxu0 %v5583
        %5598 = vmatpush.msra.mxu0 %v5582
        %5599 = vmatpush.msra.mxu0 %v5581
        %5600 = vmatpush.msra.mxu0 %v5580
        %5601 = vmatpush.msra.mxu0 %v5579
        %5602 = vmatpush.msra.mxu0 %v5578
        %5603 = vmatpush.msra.mxu0 %v5577
        %5604 = vmatpush.msra.mxu0 %v5576
        %5605 = vmatmul.f32.gmra.mxu0 %v5587
        %v5606 = vpop.f32.mrf.mxu0
        %v5607 = vadd.f32 %v5584, %v5606
        %5608 = vdwg.mxu0
        %5609 = vst [vmem:[%s486] sm:$0x1] %v5607
        %p5610 = scmp.lt.s32.totalorder %s26, 1
        %s5611 = scalar_select %p5610, %s26, 1
        %s5612 = scalar_lea.vmem %s13, %s5611
        // Predicated region
        $region85: #{style_encoder_forward.1} parent=71 // pred_check
          %p5613 = pneg %p322
        $region86: #{style_encoder_forward.1} parent=71 // pred_check_branch
          %5615 = sbr.rel (%p5613) target = $region88
        $region87: #{style_encoder_forward.1} parent=71 // pred_region
          _
        $region88: #{style_encoder_forward.1} parent=71 // pred_fallthru
          _
      $region72: #{style_encoder_forward.1} parent=5 // pred_fallthru
        _
      %p5616 = scmp.le.s32.totalorder 2, %s21
      // Predicated region
      $region89: #{style_encoder_forward.1} parent=5 // pred_check
        %p5617 = pneg %p5616
      $region90: #{style_encoder_forward.1} parent=5 // pred_check_branch
        %5619 = sbr.rel (%p5617) target = $region92
      $region91: #{style_encoder_forward.1} parent=5 // pred_region
        %s5620 = ssub.s32 %s21, 2
        // Predicated region
        $region93: #{style_encoder_forward.1} parent=91 // pred_check
          %p5621 = pneg %p328
        $region94: #{style_encoder_forward.1} parent=91 // pred_check_branch
          %5623 = sbr.rel (%p5621) target = $region96
        $region95: #{style_encoder_forward.1} parent=91 // pred_region
          %p5624 = scmp.lt.s32.totalorder %s27, 1
          %s5625 = scalar_select %p5624, %s27, 1
          %s5626 = scalar_lea.vmem %s13, %s5625
        $region96: #{style_encoder_forward.1} parent=91 // pred_fallthru
          _
      $region92: #{style_encoder_forward.1} parent=5 // pred_fallthru
        _
    $region6: #{style_encoder_forward.1} parent=1 // loop_footer
      %s25 = sadd.s32 1, %s21
    $region7: #{style_encoder_forward.1} parent=1 // loop_footer_branch
      %20 = sbr.rel target = $region3
    $region8: #{style_encoder_forward.1} parent=1 // loop_exit
      _
    %5627 = vsyncpa [#allocation3], 1
    %s5628 = scalar_lea.sflag [#allocation3], 1
    %5629 = vsyncpa %s5628, 1
    %5630 = vsyncpa [#allocation5], 1

</llo_original>
